<compile_context>
chip_gen: v7x
topology: tpu7x:2x2x1
jax: 0.10.0
libtpu: 0.0.40
codegen_flags: <defaults>
</compile_context>

<pallas_src>
import functools

import numpy as np
import jax
import jax.numpy as jnp
from jax.experimental import pallas as pl
from jax.experimental.pallas import tpu as pltpu


# ----------------------------------------------------------------------------
# Trace-time constant builders (pure shape functions, baked as literals)
# ----------------------------------------------------------------------------
def _dft_kron(h, w):
    """kron(F_H, F_W): flattened-spatial 2-D DFT matrix (symmetric). Returns real/imag f32."""
    fh = np.exp(-2j * np.pi * np.outer(np.arange(h), np.arange(h)) / h)
    fw = np.exp(-2j * np.pi * np.outer(np.arange(w), np.arange(w)) / w)
    k = np.kron(fh, fw)                       # row p=u*W+v, col q=h*W+w
    return jnp.asarray(k.real, jnp.float32), jnp.asarray(k.imag, jnp.float32)


def _quadrant_select(h, w):
    """(4, H*W, (H/2)*(W/2)) selection matrices in torch split/cat order: TL, BL, TR, BR."""
    hs, ws = h // 2, w // 2
    sel = np.zeros((4, h * w, hs * ws), np.float32)
    for k, (dh, dw) in enumerate([(0, 0), (1, 0), (0, 1), (1, 1)]):
        for hh in range(hs):
            for ww in range(ws):
                sel[k, (hh + dh * hs) * w + (ww + dw * ws), hh * ws + ww] = 1.0
    return jnp.asarray(sel)


def _tile2x2(h, w):
    """((H/2)*(W/2), H*W) matrix implementing repeat(1, 1, 2, 2) on flattened spatial."""
    hs, ws = h // 2, w // 2
    t = np.zeros((hs * ws, h * w), np.float32)
    for hh in range(h):
        for ww in range(w):
            t[(hh % hs) * ws + (ww % ws), hh * w + ww] = 1.0
    return jnp.asarray(t)


def _const_spec(a):
    zeros = (0,) * a.ndim
    return pl.BlockSpec(a.shape, lambda n, _z=zeros: _z)


# ----------------------------------------------------------------------------
# The single fused Pallas kernel (one grid step == one batch element)
# ----------------------------------------------------------------------------
def _efcm_kernel(x_ref, w_local_ref, w_l2g_ref, w1_ref, b1_ref,
                 dft_r_ref, dft_i_ref, wfu_r_ref, wfu_i_ref, bfu_ref,
                 sel_ref, dfts_r_ref, dfts_i_ref, wlfu_r_ref, wlfu_i_ref,
                 blfu_ref, tile_ref, w2_ref, band_ref, eca_b_ref,
                 o_ref, *, in_cl, c):
    dot = functools.partial(jnp.dot, preferred_element_type=jnp.float32)
    x = x_ref[0]                                              # (Cin, HW) channels-first

    # ---- local branch: relu(convl2l(x_l) + convg2l(x_g)) as one fused 1x1 conv
    out_xl = jnp.maximum(dot(w_local_ref[...], x), 0.0)       # (out_cl, HW)

    # ---- SpectralTransform(x_g) -------------------------------------------
    x_g = x[in_cl:]                                           # (in_cg, HW)
    # conv1 + folded BN + ReLU
    y = jnp.maximum(dot(w1_ref[...], x_g) + b1_ref[...], 0.0)  # (c, HW)

    # FourierUnit (global): fft2 expressed as matmuls with kron(F_H, F_W)
    dft_r = dft_r_ref[...]
    dft_i = dft_i_ref[...]
    fr = dot(y, dft_r)                                        # real(fft2(y))
    fi = dot(y, dft_i)                                        # imag(fft2(y))
    # conv + folded BN (x 1/HW prefolded) + ReLU; [real|imag] concat removed by
    # splitting the conv weight column-wise into two dots.
    conv = jnp.maximum(dot(wfu_r_ref[...], fr) + dot(wfu_i_ref[...], fi)
                       + bfu_ref[...], 0.0)                   # (2c, HW)
    fu = dot(conv[:c], dft_r) + dot(conv[c:], dft_i)          # real(ifft2), 1/HW prefolded

    # LFU: fold 2x2 spatial quadrants into channels -> FourierUnit -> tile 2x2
    cq = c // 4
    ys = y[:cq]                                               # (cq, HW)
    xs_in = jnp.concatenate(
        [dot(ys, sel_ref[k]) for k in range(4)], axis=0)      # (4*cq = c, hs*ws)
    dfts_r = dfts_r_ref[...]
    dfts_i = dfts_i_ref[...]
    frs = dot(xs_in, dfts_r)
    fis = dot(xs_in, dfts_i)
    convs = jnp.maximum(dot(wlfu_r_ref[...], frs) + dot(wlfu_i_ref[...], fis)
                        + blfu_ref[...], 0.0)                 # (2c, hs*ws)
    xs_small = dot(convs[:c], dfts_r) + dot(convs[c:], dfts_i)  # 1/(hs*ws) prefolded
    xs_full = dot(xs_small, tile_ref[...])                    # (c, HW)  repeat(1,1,2,2)

    # conv2(y + fu + lfu) fused with convl2g(x_l); ReLU
    st_in = y + fu + xs_full
    out_xg = jnp.maximum(dot(w2_ref[...], st_in)
                         + dot(w_l2g_ref[...], x[:in_cl]), 0.0)  # (out_cg, HW)

    out_all = jnp.concatenate([out_xl, out_xg], axis=0)       # (Cout, HW)

    # ---- ECA gate fused: attn = sigmoid(conv1d_k3(GAP_spatial(out)) + b)
    # mean_p((band @ out)[i, p]) == (band @ GAP(out))[i]   (linearity)
    t = dot(band_ref[...], out_all)
    attn = jax.nn.sigmoid(jnp.mean(t, axis=1, keepdims=True) + eca_b_ref[...])
    o_ref[0] = out_all * attn


# ----------------------------------------------------------------------------
# Wrapper: fold BN + ifft normalisation, build DFT/selection constants,
# one pallas_call over the batch.
# ----------------------------------------------------------------------------
def efcm_forward(x_nchw, params, *, in_cl, out_cl, out_cg):
    N, Cin, H, W = x_nchw.shape
    HW = H * W
    cout = out_cl + out_cg
    c = out_cg // 2
    hs, ws = H // 2, W // 2
    inv_hw = 1.0 / HW
    inv_hw_s = 1.0 / (hs * ws)

    # Channels-first layout kept throughout: only a (free) reshape, no transpose.
    x3 = x_nchw.reshape(N, Cin, HW).astype(jnp.float32)

    st = params["st"]
    # TODO(synk): BatchNorm folded to inference form (running stats); training-mode
    # batch statistics of the PyTorch module are not reproduced.
    w_local = jnp.concatenate([params["w_l2l"], params["w_g2l"]], axis=1)   # (out_cl, Cin)
    w_l2g = params["w_l2g"]                                                 # (out_cg, in_cl)
    w1f = st["w1"] * st["bn1_scale"][:, None]                               # BN scale folded
    b1 = st["bn1_bias"][:, None]
    # BN scale and the ifft 1/(H*W) normalisation folded into weights + bias:
    # relu(z)/s == relu(z/s) for s > 0 and everything downstream is linear.
    wfu = st["w_fu"] * (st["bn_fu_scale"][:, None] * inv_hw)
    wfu_r, wfu_i = wfu[:, :c], wfu[:, c:]                                   # split real/imag cols
    bfu = (st["bn_fu_bias"] * inv_hw)[:, None]
    wlfu = st["w_lfu"] * (st["bn_lfu_scale"][:, None] * inv_hw_s)
    wlfu_r, wlfu_i = wlfu[:, :c], wlfu[:, c:]
    blfu = (st["bn_lfu_bias"] * inv_hw_s)[:, None]
    w2 = st["w2"]

    dft_r, dft_i = _dft_kron(H, W)            # (HW, HW)
    dfts_r, dfts_i = _dft_kron(hs, ws)        # (hs*ws, hs*ws)
    sel = _quadrant_select(H, W)              # (4, HW, hs*ws)
    tile = _tile2x2(H, W)                     # (hs*ws, HW)

    # ECA Conv1d(1,1,3,padding=1) as a banded (Cout, Cout) matrix.
    w3 = params["w_eca"]
    ii = jnp.arange(cout)[:, None]
    jj = jnp.arange(cout)[None, :]
    d = jj - ii
    band = (jnp.where(d == -1, w3[0], 0.0) + jnp.where(d == 0, w3[1], 0.0)
            + jnp.where(d == 1, w3[2], 0.0))
    eca_b = params["b_eca"].reshape(1, 1)

    consts = [w_local, w_l2g, w1f, b1, dft_r, dft_i, wfu_r, wfu_i, bfu,
              sel, dfts_r, dfts_i, wlfu_r, wlfu_i, blfu, tile, w2, band, eca_b]
    consts = [jnp.asarray(a, jnp.float32) for a in consts]

    kern = functools.partial(_efcm_kernel, in_cl=in_cl, c=c)

    in_specs = [pl.BlockSpec((1, Cin, HW), lambda n: (n, 0, 0))]
    in_specs += [_const_spec(a) for a in consts]

    out = pl.pallas_call(
        kern,
        out_shape=jax.ShapeDtypeStruct((N, cout, HW), jnp.float32),
        grid=(N,),
        in_specs=in_specs,
        out_specs=pl.BlockSpec((1, cout, HW), lambda n: (n, 0, 0)),
        compiler_params=pltpu.CompilerParams(dimension_semantics=("parallel",)),
    )(x3, *consts)
    return out.reshape(N, cout, H, W)         # already NCHW


# ----------------------------------------------------------------------------
# Pure-JAX reference (jnp.fft), inference-mode BN — used only for verification.
# ----------------------------------------------------------------------------
def efcm_reference(x, params, *, in_cl, out_cl, out_cg):
    hp = jax.lax.Precision.HIGHEST
    st = params["st"]
    c = out_cg // 2

    def conv1x1(z, w):                              # z: (N,Ci,H,W), w: (Co,Ci)
        return jnp.einsum("oc,nchw->nohw", w, z, precision=hp)

    def fourier_unit(z, w, scale, bias):
        f = jnp.fft.fft2(z, axes=(-2, -1))
        ff = jnp.concatenate([f.real, f.imag], axis=1)
        g = conv1x1(ff, w) * scale[None, :, None, None] + bias[None, :, None, None]
        g = jax.nn.relu(g)
        cc = g.shape[1] // 2
        z2 = jax.lax.complex(g[:, :cc], g[:, cc:])
        return jnp.real(jnp.fft.ifft2(z2, axes=(-2, -1)))

    x_l, x_g = x[:, :in_cl], x[:, in_cl:]
    out_xl = jax.nn.relu(conv1x1(x_l, params["w_l2l"]) + conv1x1(x_g, params["w_g2l"]))

    y = jax.nn.relu(conv1x1(x_g, st["w1"]) * st["bn1_scale"][None, :, None, None]
                    + st["bn1_bias"][None, :, None, None])
    fu = fourier_unit(y, st["w_fu"], st["bn_fu_scale"], st["bn_fu_bias"])

    cq = c // 4
    xs = y[:, :cq]
    xs = jnp.concatenate(jnp.split(xs, 2, axis=2), axis=1)
    xs = jnp.concatenate(jnp.split(xs, 2, axis=3), axis=1)
    xs = fourier_unit(xs, st["w_lfu"], st["bn_lfu_scale"], st["bn_lfu_bias"])
    xs = jnp.tile(xs, (1, 1, 2, 2))

    out_xg = jax.nn.relu(conv1x1(y + fu + xs, st["w2"]) + conv1x1(x_l, params["w_l2g"]))
    out = jnp.concatenate([out_xl, out_xg], axis=1)

    gap = out.mean(axis=(2, 3))                     # (N, Cout)
    w3, b3 = params["w_eca"], params["b_eca"]
    gpad = jnp.pad(gap, ((0, 0), (1, 1)))
    attn = jax.nn.sigmoid(w3[0] * gpad[:, :-2] + w3[1] * gpad[:, 1:-1]
                          + w3[2] * gpad[:, 2:] + b3)
    return out * attn[:, :, None, None]


# ----------------------------------------------------------------------------
# Deterministic parameter construction (weights stored as (Cout, Cin))
# ----------------------------------------------------------------------------
def _folded_bn(key, ch, eps=1e-5):
    k1, k2, k3, k4 = jax.random.split(key, 4)
    gamma = 1.0 + 0.1 * jax.random.normal(k1, (ch,))
    beta = 0.1 * jax.random.normal(k2, (ch,))
    mean = 0.1 * jax.random.normal(k3, (ch,))
    var = 1.0 + 0.1 * jax.random.uniform(k4, (ch,))
    scale = gamma / jnp.sqrt(var + eps)
    bias = beta - mean * scale
    return scale.astype(jnp.float32), bias.astype(jnp.float32)


def make_params(key, in_cl, in_cg, out_cl, out_cg):
    ks = iter(jax.random.split(key, 16))

    def w(shape, s=0.2):
        return (s * jax.random.normal(next(ks), shape)).astype(jnp.float32)

    c = out_cg // 2
    bn1_s, bn1_b = _folded_bn(next(ks), c)
    bnf_s, bnf_b = _folded_bn(next(ks), 2 * c)
    bnl_s, bnl_b = _folded_bn(next(ks), 2 * c)
    return {
        "w_l2l": w((out_cl, in_cl)),          # 1x1 conv weights as (Cout, Cin)
        "w_g2l": w((out_cl, in_cg)),
        "w_l2g": w((out_cg, in_cl)),
        "st": {
            "w1": w((c, in_cg)), "bn1_scale": bn1_s, "bn1_bias": bn1_b,
            "w_fu": w((2 * c, 2 * c)), "bn_fu_scale": bnf_s, "bn_fu_bias": bnf_b,
            "w_lfu": w((2 * c, 2 * c)), "bn_lfu_scale": bnl_s, "bn_lfu_bias": bnl_b,
            "w2": w((out_cg, c)),
        },
        "w_eca": w((3,), 0.5),                # Conv1d(1,1,3) weight
        "b_eca": w((1,), 0.1),                # Conv1d bias
    }


# ----------------------------------------------------------------------------
if __name__ == "__main__":
    key = jax.random.PRNGKey(0)
    kx, kp = jax.random.split(key)

    # EFCm(16, 16, kernel_size=1, ratio_gin=0.5, ratio_gout=0.5, enable_lfu=True)
    # Spatial 16x16 -> HW = 256 (lane-dense: multiple of 128).
    N, Cin, Cout, H, W = 2, 16, 16, 16, 16
    cfg = dict(in_cl=8, in_cg=8, out_cl=8, out_cg=8)

    x = jax.random.normal(kx, (N, Cin, H, W), dtype=jnp.float32)
    params = make_params(kp, **cfg)

    fwd = jax.jit(functools.partial(efcm_forward, in_cl=cfg["in_cl"],
                                    out_cl=cfg["out_cl"], out_cg=cfg["out_cg"]))
    out = jax.block_until_ready(fwd(x, params))

    assert out.shape == (N, Cout, H, W), out.shape
    assert out.dtype == jnp.float32
    assert bool(jnp.all(jnp.isfinite(out)))

    # Correctness vs. a pure-JAX (jnp.fft) reference of the same forward.
    ref = jax.block_until_ready(efcm_reference(
        x, params, in_cl=cfg["in_cl"], out_cl=cfg["out_cl"], out_cg=cfg["out_cg"]))
    err = float(jnp.max(jnp.abs(out - ref)))
    scale = float(jnp.max(jnp.abs(ref))) + 1e-6
    assert err <= 5e-2 * scale, f"max|err|={err:.3e} vs scale={scale:.3e}"

    print("KERNEL_OK")
</pallas_src>

<mosaic_0001>
module attributes {stable_mosaic.version = 11 : i64} {
  func.func @_efcm_kernel(%arg0: i32, %arg1: memref<1x16x256xf32, #tpu.memory_space<vmem>>, %arg2: memref<8x16xf32, #tpu.memory_space<vmem>>, %arg3: memref<8x8xf32, #tpu.memory_space<vmem>>, %arg4: memref<4x8xf32, #tpu.memory_space<vmem>>, %arg5: memref<4x1xf32, #tpu.memory_space<vmem>>, %arg6: memref<256x256xf32, #tpu.memory_space<vmem>>, %arg7: memref<256x256xf32, #tpu.memory_space<vmem>>, %arg8: memref<8x4xf32, #tpu.memory_space<vmem>>, %arg9: memref<8x4xf32, #tpu.memory_space<vmem>>, %arg10: memref<8x1xf32, #tpu.memory_space<vmem>>, %arg11: memref<4x256x64xf32, #tpu.memory_space<vmem>>, %arg12: memref<64x64xf32, #tpu.memory_space<vmem>>, %arg13: memref<64x64xf32, #tpu.memory_space<vmem>>, %arg14: memref<8x4xf32, #tpu.memory_space<vmem>>, %arg15: memref<8x4xf32, #tpu.memory_space<vmem>>, %arg16: memref<8x1xf32, #tpu.memory_space<vmem>>, %arg17: memref<64x256xf32, #tpu.memory_space<vmem>>, %arg18: memref<8x4xf32, #tpu.memory_space<vmem>>, %arg19: memref<16x16xf32, #tpu.memory_space<vmem>>, %arg20: memref<1x1xf32, #tpu.memory_space<vmem>>, %arg21: memref<1x16x256xf32, #tpu.memory_space<vmem>>) attributes {dimension_semantics = [#tpu.dimension_semantics<parallel>], iteration_bounds = array<i64: 2>, scalar_prefetch = 0 : i64, scratch_operands = 0 : i64, tpu.core_type = #tpu.core_type<tc>, window_params = [{transform_indices = @transform_0, window_bounds = array<i64: 1, 16, 256>}, {pipeline_mode = #tpu.pipeline_mode<synchronous>, transform_indices = @transform_1, window_bounds = array<i64: 8, 16>}, {pipeline_mode = #tpu.pipeline_mode<synchronous>, transform_indices = @transform_2, window_bounds = array<i64: 8, 8>}, {pipeline_mode = #tpu.pipeline_mode<synchronous>, transform_indices = @transform_3, window_bounds = array<i64: 4, 8>}, {pipeline_mode = #tpu.pipeline_mode<synchronous>, transform_indices = @transform_4, window_bounds = array<i64: 4, 1>}, {pipeline_mode = #tpu.pipeline_mode<synchronous>, transform_indices = @transform_5, window_bounds = array<i64: 256, 256>}, {pipeline_mode = #tpu.pipeline_mode<synchronous>, transform_indices = @transform_6, window_bounds = array<i64: 256, 256>}, {pipeline_mode = #tpu.pipeline_mode<synchronous>, transform_indices = @transform_7, window_bounds = array<i64: 8, 4>}, {pipeline_mode = #tpu.pipeline_mode<synchronous>, transform_indices = @transform_8, window_bounds = array<i64: 8, 4>}, {pipeline_mode = #tpu.pipeline_mode<synchronous>, transform_indices = @transform_9, window_bounds = array<i64: 8, 1>}, {pipeline_mode = #tpu.pipeline_mode<synchronous>, transform_indices = @transform_10, window_bounds = array<i64: 4, 256, 64>}, {pipeline_mode = #tpu.pipeline_mode<synchronous>, transform_indices = @transform_11, window_bounds = array<i64: 64, 64>}, {pipeline_mode = #tpu.pipeline_mode<synchronous>, transform_indices = @transform_12, window_bounds = array<i64: 64, 64>}, {pipeline_mode = #tpu.pipeline_mode<synchronous>, transform_indices = @transform_13, window_bounds = array<i64: 8, 4>}, {pipeline_mode = #tpu.pipeline_mode<synchronous>, transform_indices = @transform_14, window_bounds = array<i64: 8, 4>}, {pipeline_mode = #tpu.pipeline_mode<synchronous>, transform_indices = @transform_15, window_bounds = array<i64: 8, 1>}, {pipeline_mode = #tpu.pipeline_mode<synchronous>, transform_indices = @transform_16, window_bounds = array<i64: 64, 256>}, {pipeline_mode = #tpu.pipeline_mode<synchronous>, transform_indices = @transform_17, window_bounds = array<i64: 8, 4>}, {pipeline_mode = #tpu.pipeline_mode<synchronous>, transform_indices = @transform_18, window_bounds = array<i64: 16, 16>}, {pipeline_mode = #tpu.pipeline_mode<synchronous>, transform_indices = @transform_19, window_bounds = array<i64: 1, 1>}, {transform_indices = @transform_20, window_bounds = array<i64: 1, 16, 256>}]} {
    %c0 = arith.constant 0 : index
    %c0_0 = arith.constant 0 : index
    %c0_1 = arith.constant 0 : index
    %0 = vector.load %arg1[%c0, %c0_0, %c0_1] : memref<1x16x256xf32, #tpu.memory_space<vmem>>, vector<1x16x256xf32>
    %1 = vector.shape_cast %0 : vector<1x16x256xf32> to vector<16x256xf32>
    %c0_2 = arith.constant 0 : index
    %c0_3 = arith.constant 0 : index
    %2 = vector.load %arg2[%c0_2, %c0_3] : memref<8x16xf32, #tpu.memory_space<vmem>>, vector<8x16xf32>
    %cst = arith.constant dense<0.000000e+00> : vector<8x256xf32>
    %3 = tpu.matmul %2, %1, %cst {dimension_numbers = #tpu.dot_dimension_numbers<[1], [0], [0], [1], [0, 0, 1, 1], [], []>} : vector<8x16xf32>, vector<16x256xf32>, vector<8x256xf32> -> vector<8x256xf32>
    %cst_4 = arith.constant 0.000000e+00 : f32
    %4 = vector.broadcast %cst_4 : f32 to vector<8x256xf32>
    %5 = arith.maximumf %3, %4 : vector<8x256xf32>
    %6 = vector.extract_strided_slice %1 {offsets = [8, 0], sizes = [8, 256], strides = [1, 1]} : vector<16x256xf32> to vector<8x256xf32>
    %c0_5 = arith.constant 0 : index
    %c0_6 = arith.constant 0 : index
    %7 = vector.load %arg4[%c0_5, %c0_6] : memref<4x8xf32, #tpu.memory_space<vmem>>, vector<4x8xf32>
    %cst_7 = arith.constant dense<0.000000e+00> : vector<4x256xf32>
    %8 = tpu.matmul %7, %6, %cst_7 {dimension_numbers = #tpu.dot_dimension_numbers<[1], [0], [0], [1], [0, 0, 1, 1], [], []>} : vector<4x8xf32>, vector<8x256xf32>, vector<4x256xf32> -> vector<4x256xf32>
    %c0_8 = arith.constant 0 : index
    %c0_9 = arith.constant 0 : index
    %9 = vector.load %arg5[%c0_8, %c0_9] : memref<4x1xf32, #tpu.memory_space<vmem>>, vector<4x1xf32>
    %10 = vector.broadcast %9 : vector<4x1xf32> to vector<4x256xf32>
    %11 = arith.addf %8, %10 : vector<4x256xf32>
    %cst_10 = arith.constant 0.000000e+00 : f32
    %12 = vector.broadcast %cst_10 : f32 to vector<4x256xf32>
    %13 = arith.maximumf %11, %12 : vector<4x256xf32>
    %c0_11 = arith.constant 0 : index
    %c0_12 = arith.constant 0 : index
    %14 = vector.load %arg6[%c0_11, %c0_12] : memref<256x256xf32, #tpu.memory_space<vmem>>, vector<256x256xf32>
    %c0_13 = arith.constant 0 : index
    %c0_14 = arith.constant 0 : index
    %15 = vector.load %arg7[%c0_13, %c0_14] : memref<256x256xf32, #tpu.memory_space<vmem>>, vector<256x256xf32>
    %cst_15 = arith.constant dense<0.000000e+00> : vector<4x256xf32>
    %16 = tpu.matmul %13, %14, %cst_15 {dimension_numbers = #tpu.dot_dimension_numbers<[1], [0], [0], [1], [0, 0, 1, 1], [], []>} : vector<4x256xf32>, vector<256x256xf32>, vector<4x256xf32> -> vector<4x256xf32>
    %cst_16 = arith.constant dense<0.000000e+00> : vector<4x256xf32>
    %17 = tpu.matmul %13, %15, %cst_16 {dimension_numbers = #tpu.dot_dimension_numbers<[1], [0], [0], [1], [0, 0, 1, 1], [], []>} : vector<4x256xf32>, vector<256x256xf32>, vector<4x256xf32> -> vector<4x256xf32>
    %c0_17 = arith.constant 0 : index
    %c0_18 = arith.constant 0 : index
    %18 = vector.load %arg8[%c0_17, %c0_18] : memref<8x4xf32, #tpu.memory_space<vmem>>, vector<8x4xf32>
    %cst_19 = arith.constant dense<0.000000e+00> : vector<8x256xf32>
    %19 = tpu.matmul %18, %16, %cst_19 {dimension_numbers = #tpu.dot_dimension_numbers<[1], [0], [0], [1], [0, 0, 1, 1], [], []>} : vector<8x4xf32>, vector<4x256xf32>, vector<8x256xf32> -> vector<8x256xf32>
    %c0_20 = arith.constant 0 : index
    %c0_21 = arith.constant 0 : index
    %20 = vector.load %arg9[%c0_20, %c0_21] : memref<8x4xf32, #tpu.memory_space<vmem>>, vector<8x4xf32>
    %cst_22 = arith.constant dense<0.000000e+00> : vector<8x256xf32>
    %21 = tpu.matmul %20, %17, %cst_22 {dimension_numbers = #tpu.dot_dimension_numbers<[1], [0], [0], [1], [0, 0, 1, 1], [], []>} : vector<8x4xf32>, vector<4x256xf32>, vector<8x256xf32> -> vector<8x256xf32>
    %22 = arith.addf %19, %21 : vector<8x256xf32>
    %c0_23 = arith.constant 0 : index
    %c0_24 = arith.constant 0 : index
    %23 = vector.load %arg10[%c0_23, %c0_24] : memref<8x1xf32, #tpu.memory_space<vmem>>, vector<8x1xf32>
    %24 = vector.broadcast %23 : vector<8x1xf32> to vector<8x256xf32>
    %25 = arith.addf %22, %24 : vector<8x256xf32>
    %cst_25 = arith.constant 0.000000e+00 : f32
    %26 = vector.broadcast %cst_25 : f32 to vector<8x256xf32>
    %27 = arith.maximumf %25, %26 : vector<8x256xf32>
    %28 = vector.extract_strided_slice %27 {offsets = [0, 0], sizes = [4, 256], strides = [1, 1]} : vector<8x256xf32> to vector<4x256xf32>
    %cst_26 = arith.constant dense<0.000000e+00> : vector<4x256xf32>
    %29 = tpu.matmul %28, %14, %cst_26 {dimension_numbers = #tpu.dot_dimension_numbers<[1], [0], [0], [1], [0, 0, 1, 1], [], []>} : vector<4x256xf32>, vector<256x256xf32>, vector<4x256xf32> -> vector<4x256xf32>
    %30 = vector.extract_strided_slice %27 {offsets = [4, 0], sizes = [4, 256], strides = [1, 1]} : vector<8x256xf32> to vector<4x256xf32>
    %cst_27 = arith.constant dense<0.000000e+00> : vector<4x256xf32>
    %31 = tpu.matmul %30, %15, %cst_27 {dimension_numbers = #tpu.dot_dimension_numbers<[1], [0], [0], [1], [0, 0, 1, 1], [], []>} : vector<4x256xf32>, vector<256x256xf32>, vector<4x256xf32> -> vector<4x256xf32>
    %32 = arith.addf %29, %31 : vector<4x256xf32>
    %33 = vector.extract_strided_slice %13 {offsets = [0, 0], sizes = [1, 256], strides = [1, 1]} : vector<4x256xf32> to vector<1x256xf32>
    %c0_28 = arith.constant 0 : index
    %c0_29 = arith.constant 0 : index
    %c0_30 = arith.constant 0 : index
    %34 = vector.load %arg11[%c0_28, %c0_29, %c0_30] : memref<4x256x64xf32, #tpu.memory_space<vmem>>, vector<1x256x64xf32>
    %35 = vector.shape_cast %34 : vector<1x256x64xf32> to vector<256x64xf32>
    %cst_31 = arith.constant dense<0.000000e+00> : vector<1x64xf32>
    %36 = tpu.matmul %33, %35, %cst_31 {dimension_numbers = #tpu.dot_dimension_numbers<[1], [0], [0], [1], [0, 0, 1, 1], [], []>} : vector<1x256xf32>, vector<256x64xf32>, vector<1x64xf32> -> vector<1x64xf32>
    %c1 = arith.constant 1 : index
    %c0_32 = arith.constant 0 : index
    %c0_33 = arith.constant 0 : index
    %37 = vector.load %arg11[%c1, %c0_32, %c0_33] : memref<4x256x64xf32, #tpu.memory_space<vmem>>, vector<1x256x64xf32>
    %38 = vector.shape_cast %37 : vector<1x256x64xf32> to vector<256x64xf32>
    %cst_34 = arith.constant dense<0.000000e+00> : vector<1x64xf32>
    %39 = tpu.matmul %33, %38, %cst_34 {dimension_numbers = #tpu.dot_dimension_numbers<[1], [0], [0], [1], [0, 0, 1, 1], [], []>} : vector<1x256xf32>, vector<256x64xf32>, vector<1x64xf32> -> vector<1x64xf32>
    %c2 = arith.constant 2 : index
    %c0_35 = arith.constant 0 : index
    %c0_36 = arith.constant 0 : index
    %40 = vector.load %arg11[%c2, %c0_35, %c0_36] : memref<4x256x64xf32, #tpu.memory_space<vmem>>, vector<1x256x64xf32>
    %41 = vector.shape_cast %40 : vector<1x256x64xf32> to vector<256x64xf32>
    %cst_37 = arith.constant dense<0.000000e+00> : vector<1x64xf32>
    %42 = tpu.matmul %33, %41, %cst_37 {dimension_numbers = #tpu.dot_dimension_numbers<[1], [0], [0], [1], [0, 0, 1, 1], [], []>} : vector<1x256xf32>, vector<256x64xf32>, vector<1x64xf32> -> vector<1x64xf32>
    %c3 = arith.constant 3 : index
    %c0_38 = arith.constant 0 : index
    %c0_39 = arith.constant 0 : index
    %43 = vector.load %arg11[%c3, %c0_38, %c0_39] : memref<4x256x64xf32, #tpu.memory_space<vmem>>, vector<1x256x64xf32>
    %44 = vector.shape_cast %43 : vector<1x256x64xf32> to vector<256x64xf32>
    %cst_40 = arith.constant dense<0.000000e+00> : vector<1x64xf32>
    %45 = tpu.matmul %33, %44, %cst_40 {dimension_numbers = #tpu.dot_dimension_numbers<[1], [0], [0], [1], [0, 0, 1, 1], [], []>} : vector<1x256xf32>, vector<256x64xf32>, vector<1x64xf32> -> vector<1x64xf32>
    %46 = tpu.concatenate %36, %39, %42, %45 in 0 : vector<1x64xf32>, vector<1x64xf32>, vector<1x64xf32>, vector<1x64xf32> -> vector<4x64xf32>
    %c0_41 = arith.constant 0 : index
    %c0_42 = arith.constant 0 : index
    %47 = vector.load %arg12[%c0_41, %c0_42] : memref<64x64xf32, #tpu.memory_space<vmem>>, vector<64x64xf32>
    %c0_43 = arith.constant 0 : index
    %c0_44 = arith.constant 0 : index
    %48 = vector.load %arg13[%c0_43, %c0_44] : memref<64x64xf32, #tpu.memory_space<vmem>>, vector<64x64xf32>
    %cst_45 = arith.constant dense<0.000000e+00> : vector<4x64xf32>
    %49 = tpu.matmul %46, %47, %cst_45 {dimension_numbers = #tpu.dot_dimension_numbers<[1], [0], [0], [1], [0, 0, 1, 1], [], []>} : vector<4x64xf32>, vector<64x64xf32>, vector<4x64xf32> -> vector<4x64xf32>
    %cst_46 = arith.constant dense<0.000000e+00> : vector<4x64xf32>
    %50 = tpu.matmul %46, %48, %cst_46 {dimension_numbers = #tpu.dot_dimension_numbers<[1], [0], [0], [1], [0, 0, 1, 1], [], []>} : vector<4x64xf32>, vector<64x64xf32>, vector<4x64xf32> -> vector<4x64xf32>
    %c0_47 = arith.constant 0 : index
    %c0_48 = arith.constant 0 : index
    %51 = vector.load %arg14[%c0_47, %c0_48] : memref<8x4xf32, #tpu.memory_space<vmem>>, vector<8x4xf32>
    %cst_49 = arith.constant dense<0.000000e+00> : vector<8x64xf32>
    %52 = tpu.matmul %51, %49, %cst_49 {dimension_numbers = #tpu.dot_dimension_numbers<[1], [0], [0], [1], [0, 0, 1, 1], [], []>} : vector<8x4xf32>, vector<4x64xf32>, vector<8x64xf32> -> vector<8x64xf32>
    %c0_50 = arith.constant 0 : index
    %c0_51 = arith.constant 0 : index
    %53 = vector.load %arg15[%c0_50, %c0_51] : memref<8x4xf32, #tpu.memory_space<vmem>>, vector<8x4xf32>
    %cst_52 = arith.constant dense<0.000000e+00> : vector<8x64xf32>
    %54 = tpu.matmul %53, %50, %cst_52 {dimension_numbers = #tpu.dot_dimension_numbers<[1], [0], [0], [1], [0, 0, 1, 1], [], []>} : vector<8x4xf32>, vector<4x64xf32>, vector<8x64xf32> -> vector<8x64xf32>
    %55 = arith.addf %52, %54 : vector<8x64xf32>
    %c0_53 = arith.constant 0 : index
    %c0_54 = arith.constant 0 : index
    %56 = vector.load %arg16[%c0_53, %c0_54] : memref<8x1xf32, #tpu.memory_space<vmem>>, vector<8x1xf32>
    %57 = vector.broadcast %56 : vector<8x1xf32> to vector<8x64xf32>
    %58 = arith.addf %55, %57 : vector<8x64xf32>
    %cst_55 = arith.constant 0.000000e+00 : f32
    %59 = vector.broadcast %cst_55 : f32 to vector<8x64xf32>
    %60 = arith.maximumf %58, %59 : vector<8x64xf32>
    %61 = vector.extract_strided_slice %60 {offsets = [0, 0], sizes = [4, 64], strides = [1, 1]} : vector<8x64xf32> to vector<4x64xf32>
    %cst_56 = arith.constant dense<0.000000e+00> : vector<4x64xf32>
    %62 = tpu.matmul %61, %47, %cst_56 {dimension_numbers = #tpu.dot_dimension_numbers<[1], [0], [0], [1], [0, 0, 1, 1], [], []>} : vector<4x64xf32>, vector<64x64xf32>, vector<4x64xf32> -> vector<4x64xf32>
    %63 = vector.extract_strided_slice %60 {offsets = [4, 0], sizes = [4, 64], strides = [1, 1]} : vector<8x64xf32> to vector<4x64xf32>
    %cst_57 = arith.constant dense<0.000000e+00> : vector<4x64xf32>
    %64 = tpu.matmul %63, %48, %cst_57 {dimension_numbers = #tpu.dot_dimension_numbers<[1], [0], [0], [1], [0, 0, 1, 1], [], []>} : vector<4x64xf32>, vector<64x64xf32>, vector<4x64xf32> -> vector<4x64xf32>
    %65 = arith.addf %62, %64 : vector<4x64xf32>
    %c0_58 = arith.constant 0 : index
    %c0_59 = arith.constant 0 : index
    %66 = vector.load %arg17[%c0_58, %c0_59] : memref<64x256xf32, #tpu.memory_space<vmem>>, vector<64x256xf32>
    %cst_60 = arith.constant dense<0.000000e+00> : vector<4x256xf32>
    %67 = tpu.matmul %65, %66, %cst_60 {dimension_numbers = #tpu.dot_dimension_numbers<[1], [0], [0], [1], [0, 0, 1, 1], [], []>} : vector<4x64xf32>, vector<64x256xf32>, vector<4x256xf32> -> vector<4x256xf32>
    %68 = arith.addf %13, %32 : vector<4x256xf32>
    %69 = arith.addf %68, %67 : vector<4x256xf32>
    %c0_61 = arith.constant 0 : index
    %c0_62 = arith.constant 0 : index
    %70 = vector.load %arg18[%c0_61, %c0_62] : memref<8x4xf32, #tpu.memory_space<vmem>>, vector<8x4xf32>
    %cst_63 = arith.constant dense<0.000000e+00> : vector<8x256xf32>
    %71 = tpu.matmul %70, %69, %cst_63 {dimension_numbers = #tpu.dot_dimension_numbers<[1], [0], [0], [1], [0, 0, 1, 1], [], []>} : vector<8x4xf32>, vector<4x256xf32>, vector<8x256xf32> -> vector<8x256xf32>
    %c0_64 = arith.constant 0 : index
    %c0_65 = arith.constant 0 : index
    %72 = vector.load %arg3[%c0_64, %c0_65] : memref<8x8xf32, #tpu.memory_space<vmem>>, vector<8x8xf32>
    %73 = vector.extract_strided_slice %1 {offsets = [0, 0], sizes = [8, 256], strides = [1, 1]} : vector<16x256xf32> to vector<8x256xf32>
    %cst_66 = arith.constant dense<0.000000e+00> : vector<8x256xf32>
    %74 = tpu.matmul %72, %73, %cst_66 {dimension_numbers = #tpu.dot_dimension_numbers<[1], [0], [0], [1], [0, 0, 1, 1], [], []>} : vector<8x8xf32>, vector<8x256xf32>, vector<8x256xf32> -> vector<8x256xf32>
    %75 = arith.addf %71, %74 : vector<8x256xf32>
    %cst_67 = arith.constant 0.000000e+00 : f32
    %76 = vector.broadcast %cst_67 : f32 to vector<8x256xf32>
    %77 = arith.maximumf %75, %76 : vector<8x256xf32>
    %78 = tpu.concatenate %5, %77 in 0 : vector<8x256xf32>, vector<8x256xf32> -> vector<16x256xf32>
    %c0_68 = arith.constant 0 : index
    %c0_69 = arith.constant 0 : index
    %79 = vector.load %arg19[%c0_68, %c0_69] : memref<16x16xf32, #tpu.memory_space<vmem>>, vector<16x16xf32>
    %cst_70 = arith.constant dense<0.000000e+00> : vector<16x256xf32>
    %80 = tpu.matmul %79, %78, %cst_70 {dimension_numbers = #tpu.dot_dimension_numbers<[1], [0], [0], [1], [0, 0, 1, 1], [], []>} : vector<16x16xf32>, vector<16x256xf32>, vector<16x256xf32> -> vector<16x256xf32>
    %cst_71 = arith.constant dense<0.000000e+00> : vector<16xf32>
    %81 = vector.multi_reduction <add>, %80, %cst_71 [1] : vector<16x256xf32> to vector<16xf32>
    %82 = vector.shape_cast %81 : vector<16xf32> to vector<16x1xf32>
    %cst_72 = arith.constant 2.560000e+02 : f32
    %83 = vector.broadcast %cst_72 : f32 to vector<16x1xf32>
    %84 = arith.divf %82, %83 : vector<16x1xf32>
    %c0_73 = arith.constant 0 : index
    %c0_74 = arith.constant 0 : index
    %85 = vector.load %arg20[%c0_73, %c0_74] : memref<1x1xf32, #tpu.memory_space<vmem>>, vector<1x1xf32>
    %86 = vector.broadcast %85 : vector<1x1xf32> to vector<16x1xf32>
    %87 = arith.addf %84, %86 : vector<16x1xf32>
    %88 = arith.negf %87 : vector<16x1xf32>
    %89 = math.exp %88 : vector<16x1xf32>
    %cst_75 = arith.constant 1.000000e+00 : f32
    %90 = vector.broadcast %cst_75 : f32 to vector<16x1xf32>
    %91 = arith.addf %90, %89 : vector<16x1xf32>
    %92 = arith.divf %90, %91 : vector<16x1xf32>
    %93 = vector.broadcast %92 : vector<16x1xf32> to vector<16x256xf32>
    %94 = arith.mulf %78, %93 : vector<16x256xf32>
    %c0_76 = arith.constant 0 : index
    %c0_77 = arith.constant 0 : index
    %c0_78 = arith.constant 0 : index
    %95 = vector.load %arg21[%c0_76, %c0_77, %c0_78] : memref<1x16x256xf32, #tpu.memory_space<vmem>>, vector<1x16x256xf32>
    %96 = vector.shape_cast %95 : vector<1x16x256xf32> to vector<16x256xf32>
    %97 = vector.shape_cast %94 : vector<16x256xf32> to vector<1x16x256xf32>
    tpu.vector_store %arg21[%c0_76, %c0_77, %c0_78], %97 {strides = array<i32>} : memref<1x16x256xf32, #tpu.memory_space<vmem>>, vector<1x16x256xf32>,
    return
  }
  func.func @transform_0(%arg0: i32) -> (i32, i32, i32) {
    %c0_i32 = arith.constant 0 : i32
    %c0_i32_0 = arith.constant 0 : i32
    %c0_i32_1 = arith.constant 0 : i32
    return %arg0, %c0_i32, %c0_i32_0 : i32, i32, i32
  }
  func.func @transform_1(%arg0: i32) -> (i32, i32) {
    %c0_i32 = arith.constant 0 : i32
    %c0_i32_0 = arith.constant 0 : i32
    %c0_i32_1 = arith.constant 0 : i32
    return %c0_i32, %c0_i32_0 : i32, i32
  }
  func.func @transform_2(%arg0: i32) -> (i32, i32) {
    %c0_i32 = arith.constant 0 : i32
    %c0_i32_0 = arith.constant 0 : i32
    %c0_i32_1 = arith.constant 0 : i32
    return %c0_i32, %c0_i32_0 : i32, i32
  }
  func.func @transform_3(%arg0: i32) -> (i32, i32) {
    %c0_i32 = arith.constant 0 : i32
    %c0_i32_0 = arith.constant 0 : i32
    %c0_i32_1 = arith.constant 0 : i32
    return %c0_i32, %c0_i32_0 : i32, i32
  }
  func.func @transform_4(%arg0: i32) -> (i32, i32) {
    %c0_i32 = arith.constant 0 : i32
    %c0_i32_0 = arith.constant 0 : i32
    %c0_i32_1 = arith.constant 0 : i32
    return %c0_i32, %c0_i32_0 : i32, i32
  }
  func.func @transform_5(%arg0: i32) -> (i32, i32) {
    %c0_i32 = arith.constant 0 : i32
    %c0_i32_0 = arith.constant 0 : i32
    %c0_i32_1 = arith.constant 0 : i32
    return %c0_i32, %c0_i32_0 : i32, i32
  }
  func.func @transform_6(%arg0: i32) -> (i32, i32) {
    %c0_i32 = arith.constant 0 : i32
    %c0_i32_0 = arith.constant 0 : i32
    %c0_i32_1 = arith.constant 0 : i32
    return %c0_i32, %c0_i32_0 : i32, i32
  }
  func.func @transform_7(%arg0: i32) -> (i32, i32) {
    %c0_i32 = arith.constant 0 : i32
    %c0_i32_0 = arith.constant 0 : i32
    %c0_i32_1 = arith.constant 0 : i32
    return %c0_i32, %c0_i32_0 : i32, i32
  }
  func.func @transform_8(%arg0: i32) -> (i32, i32) {
    %c0_i32 = arith.constant 0 : i32
    %c0_i32_0 = arith.constant 0 : i32
    %c0_i32_1 = arith.constant 0 : i32
    return %c0_i32, %c0_i32_0 : i32, i32
  }
  func.func @transform_9(%arg0: i32) -> (i32, i32) {
    %c0_i32 = arith.constant 0 : i32
    %c0_i32_0 = arith.constant 0 : i32
    %c0_i32_1 = arith.constant 0 : i32
    return %c0_i32, %c0_i32_0 : i32, i32
  }
  func.func @transform_10(%arg0: i32) -> (i32, i32, i32) {
    %c0_i32 = arith.constant 0 : i32
    %c0_i32_0 = arith.constant 0 : i32
    %c0_i32_1 = arith.constant 0 : i32
    %c0_i32_2 = arith.constant 0 : i32
    return %c0_i32, %c0_i32_0, %c0_i32_1 : i32, i32, i32
  }
  func.func @transform_11(%arg0: i32) -> (i32, i32) {
    %c0_i32 = arith.constant 0 : i32
    %c0_i32_0 = arith.constant 0 : i32
    %c0_i32_1 = arith.constant 0 : i32
    return %c0_i32, %c0_i32_0 : i32, i32
  }
  func.func @transform_12(%arg0: i32) -> (i32, i32) {
    %c0_i32 = arith.constant 0 : i32
    %c0_i32_0 = arith.constant 0 : i32
    %c0_i32_1 = arith.constant 0 : i32
    return %c0_i32, %c0_i32_0 : i32, i32
  }
  func.func @transform_13(%arg0: i32) -> (i32, i32) {
    %c0_i32 = arith.constant 0 : i32
    %c0_i32_0 = arith.constant 0 : i32
    %c0_i32_1 = arith.constant 0 : i32
    return %c0_i32, %c0_i32_0 : i32, i32
  }
  func.func @transform_14(%arg0: i32) -> (i32, i32) {
    %c0_i32 = arith.constant 0 : i32
    %c0_i32_0 = arith.constant 0 : i32
    %c0_i32_1 = arith.constant 0 : i32
    return %c0_i32, %c0_i32_0 : i32, i32
  }
  func.func @transform_15(%arg0: i32) -> (i32, i32) {
    %c0_i32 = arith.constant 0 : i32
    %c0_i32_0 = arith.constant 0 : i32
    %c0_i32_1 = arith.constant 0 : i32
    return %c0_i32, %c0_i32_0 : i32, i32
  }
  func.func @transform_16(%arg0: i32) -> (i32, i32) {
    %c0_i32 = arith.constant 0 : i32
    %c0_i32_0 = arith.constant 0 : i32
    %c0_i32_1 = arith.constant 0 : i32
    return %c0_i32, %c0_i32_0 : i32, i32
  }
  func.func @transform_17(%arg0: i32) -> (i32, i32) {
    %c0_i32 = arith.constant 0 : i32
    %c0_i32_0 = arith.constant 0 : i32
    %c0_i32_1 = arith.constant 0 : i32
    return %c0_i32, %c0_i32_0 : i32, i32
  }
  func.func @transform_18(%arg0: i32) -> (i32, i32) {
    %c0_i32 = arith.constant 0 : i32
    %c0_i32_0 = arith.constant 0 : i32
    %c0_i32_1 = arith.constant 0 : i32
    return %c0_i32, %c0_i32_0 : i32, i32
  }
  func.func @transform_19(%arg0: i32) -> (i32, i32) {
    %c0_i32 = arith.constant 0 : i32
    %c0_i32_0 = arith.constant 0 : i32
    %c0_i32_1 = arith.constant 0 : i32
    return %c0_i32, %c0_i32_0 : i32, i32
  }
  func.func @transform_20(%arg0: i32) -> (i32, i32, i32) {
    %c0_i32 = arith.constant 0 : i32
    %c0_i32_0 = arith.constant 0 : i32
    %c0_i32_1 = arith.constant 0 : i32
    return %arg0, %c0_i32, %c0_i32_0 : i32, i32, i32
  }
}

</mosaic_0001>

<llo_original>
// kernel: efcm_forward.1
$region0: #{efcm_forward.1}
  #allocation0 [shape = 'u32[]', space=smem, size = 0x4, offset = 0x4, fixed_abs, tag = 'smem constant byte address 0x4 - core index']
  #allocation1 [shape = 'u32[144,128]{1,0:T(1,128)}', space=vmem, size = 0x12000, scoped, tag = 'internal scratch']
  #allocation2 [shape = 'f32[1,1]{1,0:T(1,128)S(1)}', space=vmem, size = 0x200, scoped, tag = 'scoped memory for efcm_forward.1']
  %s0 = inlined_call_operand.vmem [shape: f32[2,16,256], index: 0, kind: input, shape index: {}]
  %s1 = inlined_call_operand.vmem [shape: f32[8,16], index: 1, kind: input, shape index: {}]
  %s2 = inlined_call_operand.vmem [shape: f32[8,8], index: 2, kind: input, shape index: {}]
  %s3 = inlined_call_operand.vmem [shape: f32[4,8], index: 3, kind: input, shape index: {}]
  %s4 = inlined_call_operand.vmem [shape: f32[4,1], index: 4, kind: input, shape index: {}]
  %s5 = inlined_call_operand.hbm [shape: f32[256,256], index: 5, kind: input, shape index: {}]
  %s6 = inlined_call_operand.vmem [shape: f32[256,256], index: 6, kind: input, shape index: {}]
  %s7 = inlined_call_operand.vmem [shape: f32[8,4], index: 7, kind: input, shape index: {}]
  %s8 = inlined_call_operand.vmem [shape: f32[8,4], index: 8, kind: input, shape index: {}]
  %s9 = inlined_call_operand.vmem [shape: f32[8,1], index: 9, kind: input, shape index: {}]
  %s10 = inlined_call_operand.hbm [shape: f32[4,256,64], index: 10, kind: input, shape index: {}]
  %s11 = inlined_call_operand.vmem [shape: f32[64,64], index: 11, kind: input, shape index: {}]
  %s12 = inlined_call_operand.vmem [shape: f32[64,64], index: 12, kind: input, shape index: {}]
  %s13 = inlined_call_operand.vmem [shape: f32[8,4], index: 13, kind: input, shape index: {}]
  %s14 = inlined_call_operand.vmem [shape: f32[8,4], index: 14, kind: input, shape index: {}]
  %s15 = inlined_call_operand.vmem [shape: f32[8,1], index: 15, kind: input, shape index: {}]
  %s16 = inlined_call_operand.vmem [shape: f32[64,256], index: 16, kind: input, shape index: {}]
  %s17 = inlined_call_operand.vmem [shape: f32[8,4], index: 17, kind: input, shape index: {}]
  %s18 = inlined_call_operand.vmem [shape: f32[16,16], index: 18, kind: input, shape index: {}]
  %s19 = inlined_call_operand.<no memory space> [shape: f32[1,1], index: 19, kind: input, shape index: {}]
  %s20 = inlined_call_operand.vmem [shape: f32[2,16,256], index: 20, kind: output, shape index: {}]
  %s21 = sld [smem:[#allocation0]]
  $region121: #{efcm_forward.1} parent=0
    _
  %s23 = ssub.s32 1, %s21
  %s24 = scalar_select 0, %s23, %s21
  %v25 = vstv %s19
  %26 = vst [vmem:[#allocation2] sm:$0x1] %v25
  $region1: #{efcm_forward.1} parent=0
    #allocation3 [shape = 'u8[262144]{0}', space=vmem, size = 0x40000, scoped, tag = 'input window, operand 5, single buffered']
    #allocation4 [shape = 's32[2]{0}', space=sflag, size = 0x8, scoped, tag = 'scoped memory for efcm_forward.1']
    #allocation5 [shape = 'u8[524288]{0}', space=vmem, size = 0x80000, scoped, tag = 'input window, operand 10, single buffered']
    #allocation6 [shape = 's32[1]{0}', space=sflag, size = 0x4, scoped, tag = 'scoped memory for efcm_forward.1']
    %27 = vsyncpa [#allocation4], 0
    %28 = vsyncpa [#allocation6], 0
    loop: start=0, step=1, limit=4
    $region2: #{efcm_forward.1} parent=1 // loop_pre_header
      _
    $region3: #{efcm_forward.1} parent=1 // loop_header
      %s30 = sphi 0, %s34
      %p31 = scmp.ge.s32.totalorder %s30, 4
      %s40 = sphi 0, %s42
      %s43 = sphi 0, %s40
      %s44 = sphi 0, %s43
      %s60 = sphi 0, %s44
      %s64 = sphi 0, %s64
      %s66 = sphi 0, %s64
      %s67 = sphi 0, %s66
      %s81 = sphi 0, %s67
      %s85 = sphi 0, %s85
      %s87 = sphi 0, %s85
      %s88 = sphi 0, %s87
      %s102 = sphi 0, %s88
      %s106 = sphi 0, %s106
      %s108 = sphi 0, %s106
      %s109 = sphi 0, %s108
      %s123 = sphi 0, %s109
      %s127 = sphi 0, %s127
      %s129 = sphi 0, %s127
      %s130 = sphi 0, %s129
      %s144 = sphi 0, %s130
      %s148 = sphi 0, %s148
      %s150 = sphi 0, %s148
      %s151 = sphi 0, %s150
      %s165 = sphi 0, %s151
      %s169 = sphi 0, %s169
      %s171 = sphi 0, %s169
      %s172 = sphi 0, %s171
      %s186 = sphi 0, %s172
      %s190 = sphi 0, %s190
      %s192 = sphi 0, %s190
      %s193 = sphi 0, %s192
      %s207 = sphi 0, %s193
      %s211 = sphi 0, %s211
      %s213 = sphi 0, %s211
      %s214 = sphi 0, %s213
      %s228 = sphi 0, %s214
      %s232 = sphi 0, %s232
      %s234 = sphi 0, %s232
      %s235 = sphi 0, %s234
      %s249 = sphi 0, %s235
      %s253 = sphi 0, %s253
      %s255 = sphi 0, %s253
      %s256 = sphi 0, %s255
      %s270 = sphi 0, %s256
      %s274 = sphi 0, %s274
      %s276 = sphi 0, %s274
      %s277 = sphi 0, %s276
      %s291 = sphi 0, %s277
      %s295 = sphi 0, %s295
      %s297 = sphi 0, %s295
      %s298 = sphi 0, %s297
      %s312 = sphi 0, %s298
      %s316 = sphi 0, %s316
      %s318 = sphi 0, %s316
      %s319 = sphi 0, %s318
      %s333 = sphi 0, %s319
      %s337 = sphi 0, %s337
      %s339 = sphi 0, %s337
      %s340 = sphi 0, %s339
      %s354 = sphi 0, %s340
      %s358 = sphi 0, %s358
      %s360 = sphi 0, %s358
      %s361 = sphi 0, %s360
      %s375 = sphi 0, %s361
      %s379 = sphi 0, %s379
      %s381 = sphi 0, %s379
      %s382 = sphi 0, %s381
      %s396 = sphi 0, %s382
      %s400 = sphi 0, %s400
      %s402 = sphi 0, %s400
      %s403 = sphi 0, %s402
      %s417 = sphi 0, %s403
      %s421 = sphi 0, %s421
      %s423 = sphi 0, %s421
      %s424 = sphi 0, %s423
      %s438 = sphi 0, %s424
      %s442 = sphi 0, %s442
      %s444 = sphi 0, %s442
      %s445 = sphi 0, %s444
      %s459 = sphi 0, %s445
      %s465 = sphi 0, %s467
      %s468 = sphi 0, %s465
      %s469 = sphi 0, %s468
      %s485 = sphi 0, %s469
    $region4: #{efcm_forward.1} parent=1 // loop_header_branch
      %33 = sbr.rel (%p31) target = $region8
    $region5: #{efcm_forward.1} parent=1 // loop_body
      %s35 = ssub.s32 %s30, 1
      %s36 = ssub.s32 %s30, 2
      %s37 = sadd.s32 %s30, 1
      %s38 = ssub.s32 %s30, %s37
      %p39 = scmp.eq.s32.totalorder %s38, 0
      %s41 = sadd.s32 %s40, 1
      %s42 = scalar_select %p39, %s40, %s41
      %p45 = pneg %p39
      %p46 = scmp.eq.s32.totalorder %s30, 1
      %p47 = por %p45, %p46
      %p48 = scmp.ne.s32.totalorder %s40, %s43
      %p49 = scmp.eq.s32.totalorder %s30, 0
      %p50 = por %p48, %p49
      %p51 = scmp.ne.s32.totalorder %s40, %s43
      %p52 = scmp.eq.s32.totalorder %s35, 1
      %p53 = por %p51, %p52
      %p54 = scmp.ne.s32.totalorder %s43, %s44
      %p55 = scmp.eq.s32.totalorder %s35, 0
      %p56 = por %p54, %p55
      %p57 = scmp.ne.s32.totalorder %s43, %s44
      %p58 = scmp.eq.s32.totalorder %s36, 1
      %p59 = por %p57, %p58
      %p61 = scmp.ne.s32.totalorder %s44, %s60
      %p62 = scmp.eq.s32.totalorder %s36, 0
      %p63 = por %p61, %p62
      %s65 = sadd.s32 %s64, 1
      %p68 = scmp.eq.s32.totalorder %s30, 1
      %p69 = scmp.ne.s32.totalorder %s64, %s66
      %p70 = scmp.eq.s32.totalorder %s30, 0
      %p71 = por %p69, %p70
      %p72 = scmp.ne.s32.totalorder %s64, %s66
      %p73 = scmp.eq.s32.totalorder %s35, 1
      %p74 = por %p72, %p73
      %p75 = scmp.ne.s32.totalorder %s66, %s67
      %p76 = scmp.eq.s32.totalorder %s35, 0
      %p77 = por %p75, %p76
      %p78 = scmp.ne.s32.totalorder %s66, %s67
      %p79 = scmp.eq.s32.totalorder %s36, 1
      %p80 = por %p78, %p79
      %p82 = scmp.ne.s32.totalorder %s67, %s81
      %p83 = scmp.eq.s32.totalorder %s36, 0
      %p84 = por %p82, %p83
      %s86 = sadd.s32 %s85, 1
      %p89 = scmp.eq.s32.totalorder %s30, 1
      %p90 = scmp.ne.s32.totalorder %s85, %s87
      %p91 = scmp.eq.s32.totalorder %s30, 0
      %p92 = por %p90, %p91
      %p93 = scmp.ne.s32.totalorder %s85, %s87
      %p94 = scmp.eq.s32.totalorder %s35, 1
      %p95 = por %p93, %p94
      %p96 = scmp.ne.s32.totalorder %s87, %s88
      %p97 = scmp.eq.s32.totalorder %s35, 0
      %p98 = por %p96, %p97
      %p99 = scmp.ne.s32.totalorder %s87, %s88
      %p100 = scmp.eq.s32.totalorder %s36, 1
      %p101 = por %p99, %p100
      %p103 = scmp.ne.s32.totalorder %s88, %s102
      %p104 = scmp.eq.s32.totalorder %s36, 0
      %p105 = por %p103, %p104
      %s107 = sadd.s32 %s106, 1
      %p110 = scmp.eq.s32.totalorder %s30, 1
      %p111 = scmp.ne.s32.totalorder %s106, %s108
      %p112 = scmp.eq.s32.totalorder %s30, 0
      %p113 = por %p111, %p112
      %p114 = scmp.ne.s32.totalorder %s106, %s108
      %p115 = scmp.eq.s32.totalorder %s35, 1
      %p116 = por %p114, %p115
      %p117 = scmp.ne.s32.totalorder %s108, %s109
      %p118 = scmp.eq.s32.totalorder %s35, 0
      %p119 = por %p117, %p118
      %p120 = scmp.ne.s32.totalorder %s108, %s109
      %p121 = scmp.eq.s32.totalorder %s36, 1
      %p122 = por %p120, %p121
      %p124 = scmp.ne.s32.totalorder %s109, %s123
      %p125 = scmp.eq.s32.totalorder %s36, 0
      %p126 = por %p124, %p125
      %s128 = sadd.s32 %s127, 1
      %p131 = scmp.eq.s32.totalorder %s30, 1
      %p132 = scmp.ne.s32.totalorder %s127, %s129
      %p133 = scmp.eq.s32.totalorder %s30, 0
      %p134 = por %p132, %p133
      %p135 = scmp.ne.s32.totalorder %s127, %s129
      %p136 = scmp.eq.s32.totalorder %s35, 1
      %p137 = por %p135, %p136
      %p138 = scmp.ne.s32.totalorder %s129, %s130
      %p139 = scmp.eq.s32.totalorder %s35, 0
      %p140 = por %p138, %p139
      %p141 = scmp.ne.s32.totalorder %s129, %s130
      %p142 = scmp.eq.s32.totalorder %s36, 1
      %p143 = por %p141, %p142
      %p145 = scmp.ne.s32.totalorder %s130, %s144
      %p146 = scmp.eq.s32.totalorder %s36, 0
      %p147 = por %p145, %p146
      %s149 = sadd.s32 %s148, 1
      %p152 = scmp.eq.s32.totalorder %s30, 1
      %p153 = scmp.ne.s32.totalorder %s148, %s150
      %p154 = scmp.eq.s32.totalorder %s30, 0
      %p155 = por %p153, %p154
      %p156 = scmp.ne.s32.totalorder %s148, %s150
      %p157 = scmp.eq.s32.totalorder %s35, 1
      %p158 = por %p156, %p157
      %p159 = scmp.ne.s32.totalorder %s150, %s151
      %p160 = scmp.eq.s32.totalorder %s35, 0
      %p161 = por %p159, %p160
      %p162 = scmp.ne.s32.totalorder %s150, %s151
      %p163 = scmp.eq.s32.totalorder %s36, 1
      %p164 = por %p162, %p163
      %p166 = scmp.ne.s32.totalorder %s151, %s165
      %p167 = scmp.eq.s32.totalorder %s36, 0
      %p168 = por %p166, %p167
      %s170 = sadd.s32 %s169, 1
      %p173 = scmp.eq.s32.totalorder %s30, 1
      %p174 = scmp.ne.s32.totalorder %s169, %s171
      %p175 = scmp.eq.s32.totalorder %s30, 0
      %p176 = por %p174, %p175
      %p177 = scmp.ne.s32.totalorder %s169, %s171
      %p178 = scmp.eq.s32.totalorder %s35, 1
      %p179 = por %p177, %p178
      %p180 = scmp.ne.s32.totalorder %s171, %s172
      %p181 = scmp.eq.s32.totalorder %s35, 0
      %p182 = por %p180, %p181
      %p183 = scmp.ne.s32.totalorder %s171, %s172
      %p184 = scmp.eq.s32.totalorder %s36, 1
      %p185 = por %p183, %p184
      %p187 = scmp.ne.s32.totalorder %s172, %s186
      %p188 = scmp.eq.s32.totalorder %s36, 0
      %p189 = por %p187, %p188
      %s191 = sadd.s32 %s190, 1
      %p194 = scmp.eq.s32.totalorder %s30, 1
      %p195 = scmp.ne.s32.totalorder %s190, %s192
      %p196 = scmp.eq.s32.totalorder %s30, 0
      %p197 = por %p195, %p196
      %p198 = scmp.ne.s32.totalorder %s190, %s192
      %p199 = scmp.eq.s32.totalorder %s35, 1
      %p200 = por %p198, %p199
      %p201 = scmp.ne.s32.totalorder %s192, %s193
      %p202 = scmp.eq.s32.totalorder %s35, 0
      %p203 = por %p201, %p202
      %p204 = scmp.ne.s32.totalorder %s192, %s193
      %p205 = scmp.eq.s32.totalorder %s36, 1
      %p206 = por %p204, %p205
      %p208 = scmp.ne.s32.totalorder %s193, %s207
      %p209 = scmp.eq.s32.totalorder %s36, 0
      %p210 = por %p208, %p209
      %s212 = sadd.s32 %s211, 1
      %p215 = scmp.eq.s32.totalorder %s30, 1
      %p216 = scmp.ne.s32.totalorder %s211, %s213
      %p217 = scmp.eq.s32.totalorder %s30, 0
      %p218 = por %p216, %p217
      %p219 = scmp.ne.s32.totalorder %s211, %s213
      %p220 = scmp.eq.s32.totalorder %s35, 1
      %p221 = por %p219, %p220
      %p222 = scmp.ne.s32.totalorder %s213, %s214
      %p223 = scmp.eq.s32.totalorder %s35, 0
      %p224 = por %p222, %p223
      %p225 = scmp.ne.s32.totalorder %s213, %s214
      %p226 = scmp.eq.s32.totalorder %s36, 1
      %p227 = por %p225, %p226
      %p229 = scmp.ne.s32.totalorder %s214, %s228
      %p230 = scmp.eq.s32.totalorder %s36, 0
      %p231 = por %p229, %p230
      %s233 = sadd.s32 %s232, 1
      %p236 = scmp.eq.s32.totalorder %s30, 1
      %p237 = scmp.ne.s32.totalorder %s232, %s234
      %p238 = scmp.eq.s32.totalorder %s30, 0
      %p239 = por %p237, %p238
      %p240 = scmp.ne.s32.totalorder %s232, %s234
      %p241 = scmp.eq.s32.totalorder %s35, 1
      %p242 = por %p240, %p241
      %p243 = scmp.ne.s32.totalorder %s234, %s235
      %p244 = scmp.eq.s32.totalorder %s35, 0
      %p245 = por %p243, %p244
      %p246 = scmp.ne.s32.totalorder %s234, %s235
      %p247 = scmp.eq.s32.totalorder %s36, 1
      %p248 = por %p246, %p247
      %p250 = scmp.ne.s32.totalorder %s235, %s249
      %p251 = scmp.eq.s32.totalorder %s36, 0
      %p252 = por %p250, %p251
      %s254 = sadd.s32 %s253, 1
      %p257 = scmp.eq.s32.totalorder %s30, 1
      %p258 = scmp.ne.s32.totalorder %s253, %s255
      %p259 = scmp.eq.s32.totalorder %s30, 0
      %p260 = por %p258, %p259
      %p261 = scmp.ne.s32.totalorder %s253, %s255
      %p262 = scmp.eq.s32.totalorder %s35, 1
      %p263 = por %p261, %p262
      %p264 = scmp.ne.s32.totalorder %s255, %s256
      %p265 = scmp.eq.s32.totalorder %s35, 0
      %p266 = por %p264, %p265
      %p267 = scmp.ne.s32.totalorder %s255, %s256
      %p268 = scmp.eq.s32.totalorder %s36, 1
      %p269 = por %p267, %p268
      %p271 = scmp.ne.s32.totalorder %s256, %s270
      %p272 = scmp.eq.s32.totalorder %s36, 0
      %p273 = por %p271, %p272
      %s275 = sadd.s32 %s274, 1
      %p278 = scmp.eq.s32.totalorder %s30, 1
      %p279 = scmp.ne.s32.totalorder %s274, %s276
      %p280 = scmp.eq.s32.totalorder %s30, 0
      %p281 = por %p279, %p280
      %p282 = scmp.ne.s32.totalorder %s274, %s276
      %p283 = scmp.eq.s32.totalorder %s35, 1
      %p284 = por %p282, %p283
      %p285 = scmp.ne.s32.totalorder %s276, %s277
      %p286 = scmp.eq.s32.totalorder %s35, 0
      %p287 = por %p285, %p286
      %p288 = scmp.ne.s32.totalorder %s276, %s277
      %p289 = scmp.eq.s32.totalorder %s36, 1
      %p290 = por %p288, %p289
      %p292 = scmp.ne.s32.totalorder %s277, %s291
      %p293 = scmp.eq.s32.totalorder %s36, 0
      %p294 = por %p292, %p293
      %s296 = sadd.s32 %s295, 1
      %p299 = scmp.eq.s32.totalorder %s30, 1
      %p300 = scmp.ne.s32.totalorder %s295, %s297
      %p301 = scmp.eq.s32.totalorder %s30, 0
      %p302 = por %p300, %p301
      %p303 = scmp.ne.s32.totalorder %s295, %s297
      %p304 = scmp.eq.s32.totalorder %s35, 1
      %p305 = por %p303, %p304
      %p306 = scmp.ne.s32.totalorder %s297, %s298
      %p307 = scmp.eq.s32.totalorder %s35, 0
      %p308 = por %p306, %p307
      %p309 = scmp.ne.s32.totalorder %s297, %s298
      %p310 = scmp.eq.s32.totalorder %s36, 1
      %p311 = por %p309, %p310
      %p313 = scmp.ne.s32.totalorder %s298, %s312
      %p314 = scmp.eq.s32.totalorder %s36, 0
      %p315 = por %p313, %p314
      %s317 = sadd.s32 %s316, 1
      %p320 = scmp.eq.s32.totalorder %s30, 1
      %p321 = scmp.ne.s32.totalorder %s316, %s318
      %p322 = scmp.eq.s32.totalorder %s30, 0
      %p323 = por %p321, %p322
      %p324 = scmp.ne.s32.totalorder %s316, %s318
      %p325 = scmp.eq.s32.totalorder %s35, 1
      %p326 = por %p324, %p325
      %p327 = scmp.ne.s32.totalorder %s318, %s319
      %p328 = scmp.eq.s32.totalorder %s35, 0
      %p329 = por %p327, %p328
      %p330 = scmp.ne.s32.totalorder %s318, %s319
      %p331 = scmp.eq.s32.totalorder %s36, 1
      %p332 = por %p330, %p331
      %p334 = scmp.ne.s32.totalorder %s319, %s333
      %p335 = scmp.eq.s32.totalorder %s36, 0
      %p336 = por %p334, %p335
      %s338 = sadd.s32 %s337, 1
      %p341 = scmp.eq.s32.totalorder %s30, 1
      %p342 = scmp.ne.s32.totalorder %s337, %s339
      %p343 = scmp.eq.s32.totalorder %s30, 0
      %p344 = por %p342, %p343
      %p345 = scmp.ne.s32.totalorder %s337, %s339
      %p346 = scmp.eq.s32.totalorder %s35, 1
      %p347 = por %p345, %p346
      %p348 = scmp.ne.s32.totalorder %s339, %s340
      %p349 = scmp.eq.s32.totalorder %s35, 0
      %p350 = por %p348, %p349
      %p351 = scmp.ne.s32.totalorder %s339, %s340
      %p352 = scmp.eq.s32.totalorder %s36, 1
      %p353 = por %p351, %p352
      %p355 = scmp.ne.s32.totalorder %s340, %s354
      %p356 = scmp.eq.s32.totalorder %s36, 0
      %p357 = por %p355, %p356
      %s359 = sadd.s32 %s358, 1
      %p362 = scmp.eq.s32.totalorder %s30, 1
      %p363 = scmp.ne.s32.totalorder %s358, %s360
      %p364 = scmp.eq.s32.totalorder %s30, 0
      %p365 = por %p363, %p364
      %p366 = scmp.ne.s32.totalorder %s358, %s360
      %p367 = scmp.eq.s32.totalorder %s35, 1
      %p368 = por %p366, %p367
      %p369 = scmp.ne.s32.totalorder %s360, %s361
      %p370 = scmp.eq.s32.totalorder %s35, 0
      %p371 = por %p369, %p370
      %p372 = scmp.ne.s32.totalorder %s360, %s361
      %p373 = scmp.eq.s32.totalorder %s36, 1
      %p374 = por %p372, %p373
      %p376 = scmp.ne.s32.totalorder %s361, %s375
      %p377 = scmp.eq.s32.totalorder %s36, 0
      %p378 = por %p376, %p377
      %s380 = sadd.s32 %s379, 1
      %p383 = scmp.eq.s32.totalorder %s30, 1
      %p384 = scmp.ne.s32.totalorder %s379, %s381
      %p385 = scmp.eq.s32.totalorder %s30, 0
      %p386 = por %p384, %p385
      %p387 = scmp.ne.s32.totalorder %s379, %s381
      %p388 = scmp.eq.s32.totalorder %s35, 1
      %p389 = por %p387, %p388
      %p390 = scmp.ne.s32.totalorder %s381, %s382
      %p391 = scmp.eq.s32.totalorder %s35, 0
      %p392 = por %p390, %p391
      %p393 = scmp.ne.s32.totalorder %s381, %s382
      %p394 = scmp.eq.s32.totalorder %s36, 1
      %p395 = por %p393, %p394
      %p397 = scmp.ne.s32.totalorder %s382, %s396
      %p398 = scmp.eq.s32.totalorder %s36, 0
      %p399 = por %p397, %p398
      %s401 = sadd.s32 %s400, 1
      %p404 = scmp.eq.s32.totalorder %s30, 1
      %p405 = scmp.ne.s32.totalorder %s400, %s402
      %p406 = scmp.eq.s32.totalorder %s30, 0
      %p407 = por %p405, %p406
      %p408 = scmp.ne.s32.totalorder %s400, %s402
      %p409 = scmp.eq.s32.totalorder %s35, 1
      %p410 = por %p408, %p409
      %p411 = scmp.ne.s32.totalorder %s402, %s403
      %p412 = scmp.eq.s32.totalorder %s35, 0
      %p413 = por %p411, %p412
      %p414 = scmp.ne.s32.totalorder %s402, %s403
      %p415 = scmp.eq.s32.totalorder %s36, 1
      %p416 = por %p414, %p415
      %p418 = scmp.ne.s32.totalorder %s403, %s417
      %p419 = scmp.eq.s32.totalorder %s36, 0
      %p420 = por %p418, %p419
      %s422 = sadd.s32 %s421, 1
      %p425 = scmp.eq.s32.totalorder %s30, 1
      %p426 = scmp.ne.s32.totalorder %s421, %s423
      %p427 = scmp.eq.s32.totalorder %s30, 0
      %p428 = por %p426, %p427
      %p429 = scmp.ne.s32.totalorder %s421, %s423
      %p430 = scmp.eq.s32.totalorder %s35, 1
      %p431 = por %p429, %p430
      %p432 = scmp.ne.s32.totalorder %s423, %s424
      %p433 = scmp.eq.s32.totalorder %s35, 0
      %p434 = por %p432, %p433
      %p435 = scmp.ne.s32.totalorder %s423, %s424
      %p436 = scmp.eq.s32.totalorder %s36, 1
      %p437 = por %p435, %p436
      %p439 = scmp.ne.s32.totalorder %s424, %s438
      %p440 = scmp.eq.s32.totalorder %s36, 0
      %p441 = por %p439, %p440
      %s443 = sadd.s32 %s442, 1
      %p446 = scmp.eq.s32.totalorder %s30, 1
      %p447 = scmp.ne.s32.totalorder %s442, %s444
      %p448 = scmp.eq.s32.totalorder %s30, 0
      %p449 = por %p447, %p448
      %p450 = scmp.ne.s32.totalorder %s442, %s444
      %p451 = scmp.eq.s32.totalorder %s35, 1
      %p452 = por %p450, %p451
      %p453 = scmp.ne.s32.totalorder %s444, %s445
      %p454 = scmp.eq.s32.totalorder %s35, 0
      %p455 = por %p453, %p454
      %p456 = scmp.ne.s32.totalorder %s444, %s445
      %p457 = scmp.eq.s32.totalorder %s36, 1
      %p458 = por %p456, %p457
      %p460 = scmp.ne.s32.totalorder %s445, %s459
      %p461 = scmp.eq.s32.totalorder %s36, 0
      %p462 = por %p460, %p461
      %s463 = ssub.s32 %s30, %s37
      %p464 = scmp.eq.s32.totalorder %s463, 0
      %s466 = sadd.s32 %s465, 1
      %s467 = scalar_select %p464, %s465, %s466
      %p470 = pneg %p464
      %p471 = scmp.eq.s32.totalorder %s30, 1
      %p472 = por %p470, %p471
      %p473 = scmp.ne.s32.totalorder %s465, %s468
      %p474 = scmp.eq.s32.totalorder %s30, 0
      %p475 = por %p473, %p474
      %p476 = scmp.ne.s32.totalorder %s465, %s468
      %p477 = scmp.eq.s32.totalorder %s35, 1
      %p478 = por %p476, %p477
      %p479 = scmp.ne.s32.totalorder %s468, %s469
      %p480 = scmp.eq.s32.totalorder %s35, 0
      %p481 = por %p479, %p480
      %p482 = scmp.ne.s32.totalorder %s468, %s469
      %p483 = scmp.eq.s32.totalorder %s36, 1
      %p484 = por %p482, %p483
      %p486 = scmp.ne.s32.totalorder %s469, %s485
      %p487 = scmp.eq.s32.totalorder %s36, 0
      %p488 = por %p486, %p487
      %p489 = scmp.le.s32.totalorder 1, %s30
      %p490 = scmp.lt.s32.totalorder %s30, 3
      %p491 = pnand %p489, %p490
      %p492 = pneg %p491
      // Predicated region
      $region9: #{efcm_forward.1} parent=5 // pred_check
        _
      $region10: #{efcm_forward.1} parent=5 // pred_check_branch
        %494 = sbr.rel (%p491) target = $region12
      $region11: #{efcm_forward.1} parent=5 // pred_region
        %s495 = ssub.s32 %s30, 1
        // Predicated region
        $region13: #{efcm_forward.1} parent=11 // pred_check
          %p496 = pneg %p77
        $region14: #{efcm_forward.1} parent=11 // pred_check_branch
          %498 = sbr.rel (%p496) target = $region16
        $region15: #{efcm_forward.1} parent=11 // pred_region
          _
        $region16: #{efcm_forward.1} parent=11 // pred_fallthru
          _
        // Predicated region
        $region17: #{efcm_forward.1} parent=11 // pred_check
          %p499 = pneg %p98
        $region18: #{efcm_forward.1} parent=11 // pred_check_branch
          %501 = sbr.rel (%p499) target = $region20
        $region19: #{efcm_forward.1} parent=11 // pred_region
          _
        $region20: #{efcm_forward.1} parent=11 // pred_fallthru
          _
        // Predicated region
        $region21: #{efcm_forward.1} parent=11 // pred_check
          %p502 = pneg %p119
        $region22: #{efcm_forward.1} parent=11 // pred_check_branch
          %504 = sbr.rel (%p502) target = $region24
        $region23: #{efcm_forward.1} parent=11 // pred_region
          _
        $region24: #{efcm_forward.1} parent=11 // pred_fallthru
          _
        // Predicated region
        $region25: #{efcm_forward.1} parent=11 // pred_check
          %p505 = pneg %p140
        $region26: #{efcm_forward.1} parent=11 // pred_check_branch
          %507 = sbr.rel (%p505) target = $region28
        $region27: #{efcm_forward.1} parent=11 // pred_region
          _
        $region28: #{efcm_forward.1} parent=11 // pred_fallthru
          _
        // Predicated region
        $region29: #{efcm_forward.1} parent=11 // pred_check
          %p508 = pneg %p161
        $region30: #{efcm_forward.1} parent=11 // pred_check_branch
          %510 = sbr.rel (%p508) target = $region32
        $region31: #{efcm_forward.1} parent=11 // pred_region
          %s512 = ssub.s32 8192, 8192
          %513 = vsyncadd [#allocation4], %s512
          %s514 = sshll.u32 [#allocation3], 4
          %s515 = int_to_ptr.vmem [resolvable:$true] %s514
          %520 = dma.hbm_to_vmem [thread:$0]  %s5, 8192, %s515, [#allocation4], 256, 256, 16
        $region32: #{efcm_forward.1} parent=11 // pred_fallthru
          _
        // Predicated region
        $region33: #{efcm_forward.1} parent=11 // pred_check
          %p521 = pneg %p182
        $region34: #{efcm_forward.1} parent=11 // pred_check_branch
          %523 = sbr.rel (%p521) target = $region36
        $region35: #{efcm_forward.1} parent=11 // pred_region
          _
        $region36: #{efcm_forward.1} parent=11 // pred_fallthru
          _
        // Predicated region
        $region37: #{efcm_forward.1} parent=11 // pred_check
          %p524 = pneg %p203
        $region38: #{efcm_forward.1} parent=11 // pred_check_branch
          %526 = sbr.rel (%p524) target = $region40
        $region39: #{efcm_forward.1} parent=11 // pred_region
          _
        $region40: #{efcm_forward.1} parent=11 // pred_fallthru
          _
        // Predicated region
        $region41: #{efcm_forward.1} parent=11 // pred_check
          %p527 = pneg %p224
        $region42: #{efcm_forward.1} parent=11 // pred_check_branch
          %529 = sbr.rel (%p527) target = $region44
        $region43: #{efcm_forward.1} parent=11 // pred_region
          _
        $region44: #{efcm_forward.1} parent=11 // pred_fallthru
          _
        // Predicated region
        $region45: #{efcm_forward.1} parent=11 // pred_check
          %p530 = pneg %p245
        $region46: #{efcm_forward.1} parent=11 // pred_check_branch
          %532 = sbr.rel (%p530) target = $region48
        $region47: #{efcm_forward.1} parent=11 // pred_region
          _
        $region48: #{efcm_forward.1} parent=11 // pred_fallthru
          _
        // Predicated region
        $region49: #{efcm_forward.1} parent=11 // pred_check
          %p533 = pneg %p266
        $region50: #{efcm_forward.1} parent=11 // pred_check_branch
          %535 = sbr.rel (%p533) target = $region52
        $region51: #{efcm_forward.1} parent=11 // pred_region
          %s537 = ssub.s32 16384, 16384
          %538 = vsyncadd [#allocation6], %s537
          %s539 = sshll.u32 [#allocation5], 4
          %s540 = int_to_ptr.vmem [resolvable:$true] %s539
          %545 = dma.hbm_to_vmem [thread:$0]  %s10, 16384, %s540, [#allocation6], 128, 128, 8
        $region52: #{efcm_forward.1} parent=11 // pred_fallthru
          _
        // Predicated region
        $region53: #{efcm_forward.1} parent=11 // pred_check
          %p546 = pneg %p287
        $region54: #{efcm_forward.1} parent=11 // pred_check_branch
          %548 = sbr.rel (%p546) target = $region56
        $region55: #{efcm_forward.1} parent=11 // pred_region
          _
        $region56: #{efcm_forward.1} parent=11 // pred_fallthru
          _
        // Predicated region
        $region57: #{efcm_forward.1} parent=11 // pred_check
          %p549 = pneg %p308
        $region58: #{efcm_forward.1} parent=11 // pred_check_branch
          %551 = sbr.rel (%p549) target = $region60
        $region59: #{efcm_forward.1} parent=11 // pred_region
          _
        $region60: #{efcm_forward.1} parent=11 // pred_fallthru
          _
        // Predicated region
        $region61: #{efcm_forward.1} parent=11 // pred_check
          %p552 = pneg %p329
        $region62: #{efcm_forward.1} parent=11 // pred_check_branch
          %554 = sbr.rel (%p552) target = $region64
        $region63: #{efcm_forward.1} parent=11 // pred_region
          _
        $region64: #{efcm_forward.1} parent=11 // pred_fallthru
          _
        // Predicated region
        $region65: #{efcm_forward.1} parent=11 // pred_check
          %p555 = pneg %p350
        $region66: #{efcm_forward.1} parent=11 // pred_check_branch
          %557 = sbr.rel (%p555) target = $region68
        $region67: #{efcm_forward.1} parent=11 // pred_region
          _
        $region68: #{efcm_forward.1} parent=11 // pred_fallthru
          _
        // Predicated region
        $region69: #{efcm_forward.1} parent=11 // pred_check
          %p558 = pneg %p371
        $region70: #{efcm_forward.1} parent=11 // pred_check_branch
          %560 = sbr.rel (%p558) target = $region72
        $region71: #{efcm_forward.1} parent=11 // pred_region
          _
        $region72: #{efcm_forward.1} parent=11 // pred_fallthru
          _
        // Predicated region
        $region73: #{efcm_forward.1} parent=11 // pred_check
          %p561 = pneg %p392
        $region74: #{efcm_forward.1} parent=11 // pred_check_branch
          %563 = sbr.rel (%p561) target = $region76
        $region75: #{efcm_forward.1} parent=11 // pred_region
          _
        $region76: #{efcm_forward.1} parent=11 // pred_fallthru
          _
        // Predicated region
        $region77: #{efcm_forward.1} parent=11 // pred_check
          %p564 = pneg %p413
        $region78: #{efcm_forward.1} parent=11 // pred_check_branch
          %566 = sbr.rel (%p564) target = $region80
        $region79: #{efcm_forward.1} parent=11 // pred_region
          _
        $region80: #{efcm_forward.1} parent=11 // pred_fallthru
          _
        // Predicated region
        $region81: #{efcm_forward.1} parent=11 // pred_check
          %p567 = pneg %p434
        $region82: #{efcm_forward.1} parent=11 // pred_check_branch
          %569 = sbr.rel (%p567) target = $region84
        $region83: #{efcm_forward.1} parent=11 // pred_region
          _
        $region84: #{efcm_forward.1} parent=11 // pred_fallthru
          _
        // Predicated region
        $region85: #{efcm_forward.1} parent=11 // pred_check
          %p570 = pneg %p455
        $region86: #{efcm_forward.1} parent=11 // pred_check_branch
          %572 = sbr.rel (%p570) target = $region88
        $region87: #{efcm_forward.1} parent=11 // pred_region
          _
        $region88: #{efcm_forward.1} parent=11 // pred_fallthru
          _
      $region12: #{efcm_forward.1} parent=5 // pred_fallthru
        _
      %p573 = scmp.lt.s32.totalorder %s30, 2
      // Predicated region
      $region89: #{efcm_forward.1} parent=5 // pred_check
        %p574 = pneg %p573
      $region90: #{efcm_forward.1} parent=5 // pred_check_branch
        %576 = sbr.rel (%p574) target = $region92
      $region91: #{efcm_forward.1} parent=5 // pred_region
        // Predicated region
        $region93: #{efcm_forward.1} parent=91 // pred_check
          %p577 = pneg %p50
        $region94: #{efcm_forward.1} parent=91 // pred_check_branch
          %579 = sbr.rel (%p577) target = $region96
        $region95: #{efcm_forward.1} parent=91 // pred_region
          %p580 = scmp.lt.s32.totalorder %s30, 1
          %s581 = scalar_select %p580, %s30, 1
          %s582 = smul.addr %s581, 4
          %s583 = smul.addr %s582, 8
          %s584 = scalar_lea.vmem %s0, %s583
        $region96: #{efcm_forward.1} parent=91 // pred_fallthru
          _
      $region92: #{efcm_forward.1} parent=5 // pred_fallthru
        _
      %p585 = scmp.le.s32.totalorder 1, %s30
      %p586 = scmp.lt.s32.totalorder %s30, 3
      %p587 = pnand %p585, %p586
      %p588 = pneg %p587
      // Predicated region
      $region97: #{efcm_forward.1} parent=5 // pred_check
        _
      $region98: #{efcm_forward.1} parent=5 // pred_check_branch
        %590 = sbr.rel (%p587) target = $region100
      $region99: #{efcm_forward.1} parent=5 // pred_region
        %s591 = ssub.s32 %s30, 1
        // Predicated region
        $region101: #{efcm_forward.1} parent=99 // pred_check
          %p592 = pneg %p161
        $region102: #{efcm_forward.1} parent=99 // pred_check_branch
          %594 = sbr.rel (%p592) target = $region104
        $region103: #{efcm_forward.1} parent=99 // pred_region
          %595 = dma.done [#allocation4], 8192
        $region104: #{efcm_forward.1} parent=99 // pred_fallthru
          _
        // Predicated region
        $region105: #{efcm_forward.1} parent=99 // pred_check
          %p596 = pneg %p266
        $region106: #{efcm_forward.1} parent=99 // pred_check_branch
          %598 = sbr.rel (%p596) target = $region108
        $region107: #{efcm_forward.1} parent=99 // pred_region
          %599 = dma.done [#allocation6], 16384
        $region108: #{efcm_forward.1} parent=99 // pred_fallthru
          _
        %p600 = scmp.lt.s32.totalorder %s35, 1
        %s601 = scalar_select %p600, %s35, 1
        %s602 = smul.addr %s601, 4
        %s603 = smul.addr %s602, 8
        %s604 = scalar_lea.vmem %s0, %s603
        %p605 = pneg %p56
        %p606 = pneg %p53
        %p607 = pneg %p77
        %p608 = pneg %p74
        %p609 = pneg %p98
        %p610 = pneg %p95
        %p611 = pneg %p119
        %p612 = pneg %p116
        %p613 = pneg %p140
        %p614 = pneg %p137
        %p615 = pneg %p161
        %p616 = pneg %p158
        %p617 = pneg %p182
        %p618 = pneg %p179
        %p619 = pneg %p203
        %p620 = pneg %p200
        %p621 = pneg %p224
        %p622 = pneg %p221
        %p623 = pneg %p245
        %p624 = pneg %p242
        %p625 = pneg %p266
        %p626 = pneg %p263
        %p627 = pneg %p287
        %p628 = pneg %p284
        %p629 = pneg %p308
        %p630 = pneg %p305
        %p631 = pneg %p329
        %p632 = pneg %p326
        %p633 = pneg %p350
        %p634 = pneg %p347
        %p635 = pneg %p371
        %p636 = pneg %p368
        %p637 = pneg %p392
        %p638 = pneg %p389
        %p639 = pneg %p413
        %p640 = pneg %p410
        %p641 = pneg %p434
        %p642 = pneg %p431
        %p643 = pneg %p455
        %p644 = pneg %p452
        %p645 = pneg %p481
        %p646 = pneg %p478
        %p647 = scmp.lt.s32.totalorder %s35, 1
        %s648 = scalar_select %p647, %s35, 1
        %s649 = smul.addr %s648, 4
        %s650 = smul.addr %s649, 8
        %s651 = scalar_lea.vmem %s20, %s650
        %p652 = scmp.lt.s32.totalorder %s35, 1
        %s653 = scalar_select %p652, %s35, 1
        %s654 = smul.addr %s653, 4
        %s655 = smul.addr %s654, 8
        %s656 = scalar_lea.vmem %s0, %s655
        %p657 = scmp.lt.s32.totalorder %s35, 1
        %s658 = scalar_select %p657, %s35, 1
        %s659 = smul.addr %s658, 4
        %s660 = smul.addr %s659, 8
        %s661 = scalar_lea.vmem %s20, %s660
        %v662 = vld [vmem:[%s656] sm:$0xff]
        %v663 = vld [vmem:[%s656 + $0x8] sm:$0xff]
        %v664 = vld [vmem:[%s656 + $0x10] sm:$0xff]
        %v665 = vld [vmem:[%s656 + $0x18] sm:$0xff]
        %v666 = vld [vmem:[%s1] sm:$0xff]
        %vm667 = vcmask 130048
        %v669 = vsel %vm667, %v666, 0
        %671 = vmatprep.subr.mxu0 %v663
        %672 = vmatpush1.msra.mxu0 %v662
        %673 = vmatprep.subr.mxu0 %v665
        %674 = vmatpush1.msra.mxu0 %v664
        %675 = vmatprep.subr.mxu0 0.0
        %676 = vmatpush1.msra.mxu0 0.0
        %677 = vmatprep.subr.mxu0 0.0
        %678 = vmatpush1.msra.mxu0 0.0
        %679 = vmatprep.subr.mxu0 0.0
        %680 = vmatpush1.msra.mxu0 0.0
        %681 = vmatprep.subr.mxu0 0.0
        %682 = vmatpush1.msra.mxu0 0.0
        %683 = vmatprep.subr.mxu0 0.0
        %684 = vmatpush1.msra.mxu0 0.0
        %685 = vmatprep.subr.mxu0 0.0
        %686 = vmatpush1.msra.mxu0 0.0
        %687 = vmatprep.subr.mxu0 0.0
        %688 = vmatpush1.msra.mxu0 0.0
        %689 = vmatprep.subr.mxu0 0.0
        %690 = vmatpush1.msra.mxu0 0.0
        %691 = vmatprep.subr.mxu0 0.0
        %692 = vmatpush1.msra.mxu0 0.0
        %693 = vmatprep.subr.mxu0 0.0
        %694 = vmatpush1.msra.mxu0 0.0
        %695 = vmatprep.subr.mxu0 0.0
        %696 = vmatpush1.msra.mxu0 0.0
        %697 = vmatprep.subr.mxu0 0.0
        %698 = vmatpush1.msra.mxu0 0.0
        %699 = vmatprep.subr.mxu0 0.0
        %700 = vmatpush1.msra.mxu0 0.0
        %701 = vmatprep.subr.mxu0 0.0
        %702 = vmatpush1.msra.mxu0 0.0
        %703 = vmatprep.subr.mxu0 0.0
        %704 = vmatpush1.msra.mxu0 0.0
        %705 = vmatprep.subr.mxu0 0.0
        %706 = vmatpush1.msra.mxu0 0.0
        %707 = vmatprep.subr.mxu0 0.0
        %708 = vmatpush1.msra.mxu0 0.0
        %709 = vmatprep.subr.mxu0 0.0
        %710 = vmatpush1.msra.mxu0 0.0
        %711 = vmatprep.subr.mxu0 0.0
        %712 = vmatpush1.msra.mxu0 0.0
        %713 = vmatprep.subr.mxu0 0.0
        %714 = vmatpush1.msra.mxu0 0.0
        %715 = vmatprep.subr.mxu0 0.0
        %716 = vmatpush1.msra.mxu0 0.0
        %717 = vmatprep.subr.mxu0 0.0
        %718 = vmatpush1.msra.mxu0 0.0
        %719 = vmatprep.subr.mxu0 0.0
        %720 = vmatpush1.msra.mxu0 0.0
        %721 = vmatprep.subr.mxu0 0.0
        %722 = vmatpush1.msra.mxu0 0.0
        %723 = vmatprep.subr.mxu0 0.0
        %724 = vmatpush1.msra.mxu0 0.0
        %725 = vmatprep.subr.mxu0 0.0
        %726 = vmatpush1.msra.mxu0 0.0
        %727 = vmatprep.subr.mxu0 0.0
        %728 = vmatpush1.msra.mxu0 0.0
        %729 = vmatprep.subr.mxu0 0.0
        %730 = vmatpush1.msra.mxu0 0.0
        %731 = vmatprep.subr.mxu0 0.0
        %732 = vmatpush1.msra.mxu0 0.0
        %733 = vmatprep.subr.mxu0 0.0
        %734 = vmatpush1.msra.mxu0 0.0
        %735 = vmatprep.mubr.f32.mxu0 0.0
        %736 = vmatmul.mubr.f32.gmra.mrb[0].mxu0 %v669
        %v737 = vpop.f32.mrb[0].mxu0
        %v738 = vadd.f32 0.0, %v737
        %v739 = vpop.f32.mrb[0].mxu0
        %v740 = vadd.f32 0.0, %v739
        %741 = vdwg.mxu0
        %v742 = vmax.f32 %v738, 0.0
        %v743 = vmax.f32 %v740, 0.0
        %v744 = vld [vmem:[%s3] sm:$0xf]
        %v745 = vld [vmem:[%s4] sm:$0xf]
        %747 = vset.pattern.permute.xlu0 0
        %748 = vperm.xlu0 %747, %v745
        %v749 = vpop.permute.xlu0 %748
        %vm751 = vcmask 64512
        %v753 = vsel %vm751, %v744, 0
        %755 = vmatprep.subr.mxu0 %v665
        %756 = vmatpush1.msra.mxu0 %v664
        %757 = vmatprep.subr.mxu0 0.0
        %758 = vmatpush1.msra.mxu0 0.0
        %759 = vmatprep.subr.mxu0 0.0
        %760 = vmatpush1.msra.mxu0 0.0
        %761 = vmatprep.subr.mxu0 0.0
        %762 = vmatpush1.msra.mxu0 0.0
        %763 = vmatprep.subr.mxu0 0.0
        %764 = vmatpush1.msra.mxu0 0.0
        %765 = vmatprep.subr.mxu0 0.0
        %766 = vmatpush1.msra.mxu0 0.0
        %767 = vmatprep.subr.mxu0 0.0
        %768 = vmatpush1.msra.mxu0 0.0
        %769 = vmatprep.subr.mxu0 0.0
        %770 = vmatpush1.msra.mxu0 0.0
        %771 = vmatprep.subr.mxu0 0.0
        %772 = vmatpush1.msra.mxu0 0.0
        %773 = vmatprep.subr.mxu0 0.0
        %774 = vmatpush1.msra.mxu0 0.0
        %775 = vmatprep.subr.mxu0 0.0
        %776 = vmatpush1.msra.mxu0 0.0
        %777 = vmatprep.subr.mxu0 0.0
        %778 = vmatpush1.msra.mxu0 0.0
        %779 = vmatprep.subr.mxu0 0.0
        %780 = vmatpush1.msra.mxu0 0.0
        %781 = vmatprep.subr.mxu0 0.0
        %782 = vmatpush1.msra.mxu0 0.0
        %783 = vmatprep.subr.mxu0 0.0
        %784 = vmatpush1.msra.mxu0 0.0
        %785 = vmatprep.subr.mxu0 0.0
        %786 = vmatpush1.msra.mxu0 0.0
        %787 = vmatprep.subr.mxu0 0.0
        %788 = vmatpush1.msra.mxu0 0.0
        %789 = vmatprep.subr.mxu0 0.0
        %790 = vmatpush1.msra.mxu0 0.0
        %791 = vmatprep.subr.mxu0 0.0
        %792 = vmatpush1.msra.mxu0 0.0
        %793 = vmatprep.subr.mxu0 0.0
        %794 = vmatpush1.msra.mxu0 0.0
        %795 = vmatprep.subr.mxu0 0.0
        %796 = vmatpush1.msra.mxu0 0.0
        %797 = vmatprep.subr.mxu0 0.0
        %798 = vmatpush1.msra.mxu0 0.0
        %799 = vmatprep.subr.mxu0 0.0
        %800 = vmatpush1.msra.mxu0 0.0
        %801 = vmatprep.subr.mxu0 0.0
        %802 = vmatpush1.msra.mxu0 0.0
        %803 = vmatprep.subr.mxu0 0.0
        %804 = vmatpush1.msra.mxu0 0.0
        %805 = vmatprep.subr.mxu0 0.0
        %806 = vmatpush1.msra.mxu0 0.0
        %807 = vmatprep.subr.mxu0 0.0
        %808 = vmatpush1.msra.mxu0 0.0
        %809 = vmatprep.subr.mxu0 0.0
        %810 = vmatpush1.msra.mxu0 0.0
        %811 = vmatprep.subr.mxu0 0.0
        %812 = vmatpush1.msra.mxu0 0.0
        %813 = vmatprep.subr.mxu0 0.0
        %814 = vmatpush1.msra.mxu0 0.0
        %815 = vmatprep.subr.mxu0 0.0
        %816 = vmatpush1.msra.mxu0 0.0
        %817 = vmatprep.subr.mxu0 0.0
        %818 = vmatpush1.msra.mxu0 0.0
        %819 = vmatprep.mubr.f32.mxu0 0.0
        %820 = vmatmul.mubr.f32.gmra.mrb[0].mxu0 %v753
        %v821 = vpop.f32.mrb[0].mxu0
        %v822 = vadd.f32 %v749, %v821
        %v823 = vpop.f32.mrb[0].mxu0
        %v824 = vadd.f32 %v749, %v823
        %825 = vdwg.mxu0
        %v826 = vmax.f32 %v822, 0.0
        %v827 = vmax.f32 %v824, 0.0
        %v828 = vld [vmem:[#allocation3] sm:$0xff]
        %v829 = vld [vmem:[#allocation3 + $0x8] sm:$0xff]
        %v830 = vld [vmem:[#allocation3 + $0x10] sm:$0xff]
        %v831 = vld [vmem:[#allocation3 + $0x18] sm:$0xff]
        %v832 = vld [vmem:[#allocation3 + $0x20] sm:$0xff]
        %v833 = vld [vmem:[#allocation3 + $0x28] sm:$0xff]
        %v834 = vld [vmem:[#allocation3 + $0x30] sm:$0xff]
        %v835 = vld [vmem:[#allocation3 + $0x38] sm:$0xff]
        %v836 = vld [vmem:[#allocation3 + $0x40] sm:$0xff]
        %v837 = vld [vmem:[#allocation3 + $0x48] sm:$0xff]
        %v838 = vld [vmem:[#allocation3 + $0x50] sm:$0xff]
        %v839 = vld [vmem:[#allocation3 + $0x58] sm:$0xff]
        %v840 = vld [vmem:[#allocation3 + $0x60] sm:$0xff]
        %v841 = vld [vmem:[#allocation3 + $0x68] sm:$0xff]
        %v842 = vld [vmem:[#allocation3 + $0x70] sm:$0xff]
        %v843 = vld [vmem:[#allocation3 + $0x78] sm:$0xff]
        %v844 = vld [vmem:[#allocation3 + $0x80] sm:$0xff]
        %v845 = vld [vmem:[#allocation3 + $0x88] sm:$0xff]
        %v846 = vld [vmem:[#allocation3 + $0x90] sm:$0xff]
        %v847 = vld [vmem:[#allocation3 + $0x98] sm:$0xff]
        %v848 = vld [vmem:[#allocation3 + $0xa0] sm:$0xff]
        %v849 = vld [vmem:[#allocation3 + $0xa8] sm:$0xff]
        %v850 = vld [vmem:[#allocation3 + $0xb0] sm:$0xff]
        %v851 = vld [vmem:[#allocation3 + $0xb8] sm:$0xff]
        %v852 = vld [vmem:[#allocation3 + $0xc0] sm:$0xff]
        %v853 = vld [vmem:[#allocation3 + $0xc8] sm:$0xff]
        %v854 = vld [vmem:[#allocation3 + $0xd0] sm:$0xff]
        %v855 = vld [vmem:[#allocation3 + $0xd8] sm:$0xff]
        %v856 = vld [vmem:[#allocation3 + $0xe0] sm:$0xff]
        %v857 = vld [vmem:[#allocation3 + $0xe8] sm:$0xff]
        %v858 = vld [vmem:[#allocation3 + $0xf0] sm:$0xff]
        %v859 = vld [vmem:[#allocation3 + $0xf8] sm:$0xff]
        %v860 = vld [vmem:[#allocation3 + $0x100] sm:$0xff]
        %v861 = vld [vmem:[#allocation3 + $0x108] sm:$0xff]
        %v862 = vld [vmem:[#allocation3 + $0x110] sm:$0xff]
        %v863 = vld [vmem:[#allocation3 + $0x118] sm:$0xff]
        %v864 = vld [vmem:[#allocation3 + $0x120] sm:$0xff]
        %v865 = vld [vmem:[#allocation3 + $0x128] sm:$0xff]
        %v866 = vld [vmem:[#allocation3 + $0x130] sm:$0xff]
        %v867 = vld [vmem:[#allocation3 + $0x138] sm:$0xff]
        %v868 = vld [vmem:[#allocation3 + $0x140] sm:$0xff]
        %v869 = vld [vmem:[#allocation3 + $0x148] sm:$0xff]
        %v870 = vld [vmem:[#allocation3 + $0x150] sm:$0xff]
        %v871 = vld [vmem:[#allocation3 + $0x158] sm:$0xff]
        %v872 = vld [vmem:[#allocation3 + $0x160] sm:$0xff]
        %v873 = vld [vmem:[#allocation3 + $0x168] sm:$0xff]
        %v874 = vld [vmem:[#allocation3 + $0x170] sm:$0xff]
        %v875 = vld [vmem:[#allocation3 + $0x178] sm:$0xff]
        %v876 = vld [vmem:[#allocation3 + $0x180] sm:$0xff]
        %v877 = vld [vmem:[#allocation3 + $0x188] sm:$0xff]
        %v878 = vld [vmem:[#allocation3 + $0x190] sm:$0xff]
        %v879 = vld [vmem:[#allocation3 + $0x198] sm:$0xff]
        %v880 = vld [vmem:[#allocation3 + $0x1a0] sm:$0xff]
        %v881 = vld [vmem:[#allocation3 + $0x1a8] sm:$0xff]
        %v882 = vld [vmem:[#allocation3 + $0x1b0] sm:$0xff]
        %v883 = vld [vmem:[#allocation3 + $0x1b8] sm:$0xff]
        %v884 = vld [vmem:[#allocation3 + $0x1c0] sm:$0xff]
        %v885 = vld [vmem:[#allocation3 + $0x1c8] sm:$0xff]
        %v886 = vld [vmem:[#allocation3 + $0x1d0] sm:$0xff]
        %v887 = vld [vmem:[#allocation3 + $0x1d8] sm:$0xff]
        %v888 = vld [vmem:[#allocation3 + $0x1e0] sm:$0xff]
        %v889 = vld [vmem:[#allocation3 + $0x1e8] sm:$0xff]
        %v890 = vld [vmem:[#allocation3 + $0x1f0] sm:$0xff]
        %v891 = vld [vmem:[#allocation3 + $0x1f8] sm:$0xff]
        %v892 = vld [vmem:[%s6] sm:$0xff]
        %v893 = vld [vmem:[%s6 + $0x8] sm:$0xff]
        %v894 = vld [vmem:[%s6 + $0x10] sm:$0xff]
        %v895 = vld [vmem:[%s6 + $0x18] sm:$0xff]
        %v896 = vld [vmem:[%s6 + $0x20] sm:$0xff]
        %v897 = vld [vmem:[%s6 + $0x28] sm:$0xff]
        %v898 = vld [vmem:[%s6 + $0x30] sm:$0xff]
        %v899 = vld [vmem:[%s6 + $0x38] sm:$0xff]
        %v900 = vld [vmem:[%s6 + $0x40] sm:$0xff]
        %v901 = vld [vmem:[%s6 + $0x48] sm:$0xff]
        %v902 = vld [vmem:[%s6 + $0x50] sm:$0xff]
        %v903 = vld [vmem:[%s6 + $0x58] sm:$0xff]
        %v904 = vld [vmem:[%s6 + $0x60] sm:$0xff]
        %v905 = vld [vmem:[%s6 + $0x68] sm:$0xff]
        %v906 = vld [vmem:[%s6 + $0x70] sm:$0xff]
        %v907 = vld [vmem:[%s6 + $0x78] sm:$0xff]
        %v908 = vld [vmem:[%s6 + $0x80] sm:$0xff]
        %v909 = vld [vmem:[%s6 + $0x88] sm:$0xff]
        %v910 = vld [vmem:[%s6 + $0x90] sm:$0xff]
        %v911 = vld [vmem:[%s6 + $0x98] sm:$0xff]
        %v912 = vld [vmem:[%s6 + $0xa0] sm:$0xff]
        %v913 = vld [vmem:[%s6 + $0xa8] sm:$0xff]
        %v914 = vld [vmem:[%s6 + $0xb0] sm:$0xff]
        %v915 = vld [vmem:[%s6 + $0xb8] sm:$0xff]
        %v916 = vld [vmem:[%s6 + $0xc0] sm:$0xff]
        %v917 = vld [vmem:[%s6 + $0xc8] sm:$0xff]
        %v918 = vld [vmem:[%s6 + $0xd0] sm:$0xff]
        %v919 = vld [vmem:[%s6 + $0xd8] sm:$0xff]
        %v920 = vld [vmem:[%s6 + $0xe0] sm:$0xff]
        %v921 = vld [vmem:[%s6 + $0xe8] sm:$0xff]
        %v922 = vld [vmem:[%s6 + $0xf0] sm:$0xff]
        %v923 = vld [vmem:[%s6 + $0xf8] sm:$0xff]
        %v924 = vld [vmem:[%s6 + $0x100] sm:$0xff]
        %v925 = vld [vmem:[%s6 + $0x108] sm:$0xff]
        %v926 = vld [vmem:[%s6 + $0x110] sm:$0xff]
        %v927 = vld [vmem:[%s6 + $0x118] sm:$0xff]
        %v928 = vld [vmem:[%s6 + $0x120] sm:$0xff]
        %v929 = vld [vmem:[%s6 + $0x128] sm:$0xff]
        %v930 = vld [vmem:[%s6 + $0x130] sm:$0xff]
        %v931 = vld [vmem:[%s6 + $0x138] sm:$0xff]
        %v932 = vld [vmem:[%s6 + $0x140] sm:$0xff]
        %v933 = vld [vmem:[%s6 + $0x148] sm:$0xff]
        %v934 = vld [vmem:[%s6 + $0x150] sm:$0xff]
        %v935 = vld [vmem:[%s6 + $0x158] sm:$0xff]
        %v936 = vld [vmem:[%s6 + $0x160] sm:$0xff]
        %v937 = vld [vmem:[%s6 + $0x168] sm:$0xff]
        %v938 = vld [vmem:[%s6 + $0x170] sm:$0xff]
        %v939 = vld [vmem:[%s6 + $0x178] sm:$0xff]
        %v940 = vld [vmem:[%s6 + $0x180] sm:$0xff]
        %v941 = vld [vmem:[%s6 + $0x188] sm:$0xff]
        %v942 = vld [vmem:[%s6 + $0x190] sm:$0xff]
        %v943 = vld [vmem:[%s6 + $0x198] sm:$0xff]
        %v944 = vld [vmem:[%s6 + $0x1a0] sm:$0xff]
        %v945 = vld [vmem:[%s6 + $0x1a8] sm:$0xff]
        %v946 = vld [vmem:[%s6 + $0x1b0] sm:$0xff]
        %v947 = vld [vmem:[%s6 + $0x1b8] sm:$0xff]
        %v948 = vld [vmem:[%s6 + $0x1c0] sm:$0xff]
        %v949 = vld [vmem:[%s6 + $0x1c8] sm:$0xff]
        %v950 = vld [vmem:[%s6 + $0x1d0] sm:$0xff]
        %v951 = vld [vmem:[%s6 + $0x1d8] sm:$0xff]
        %v952 = vld [vmem:[%s6 + $0x1e0] sm:$0xff]
        %v953 = vld [vmem:[%s6 + $0x1e8] sm:$0xff]
        %v954 = vld [vmem:[%s6 + $0x1f0] sm:$0xff]
        %v955 = vld [vmem:[%s6 + $0x1f8] sm:$0xff]
        %956 = vmatprep.subr.mxu0 %v829
        %957 = vmatpush1.msra.mxu0 %v828
        %958 = vmatprep.subr.mxu0 %v831
        %959 = vmatpush1.msra.mxu0 %v830
        %960 = vmatprep.subr.mxu0 %v833
        %961 = vmatpush1.msra.mxu0 %v832
        %962 = vmatprep.subr.mxu0 %v835
        %963 = vmatpush1.msra.mxu0 %v834
        %964 = vmatprep.subr.mxu0 %v837
        %965 = vmatpush1.msra.mxu0 %v836
        %966 = vmatprep.subr.mxu0 %v839
        %967 = vmatpush1.msra.mxu0 %v838
        %968 = vmatprep.subr.mxu0 %v841
        %969 = vmatpush1.msra.mxu0 %v840
        %970 = vmatprep.subr.mxu0 %v843
        %971 = vmatpush1.msra.mxu0 %v842
        %972 = vmatprep.subr.mxu0 %v845
        %973 = vmatpush1.msra.mxu0 %v844
        %974 = vmatprep.subr.mxu0 %v847
        %975 = vmatpush1.msra.mxu0 %v846
        %976 = vmatprep.subr.mxu0 %v849
        %977 = vmatpush1.msra.mxu0 %v848
        %978 = vmatprep.subr.mxu0 %v851
        %979 = vmatpush1.msra.mxu0 %v850
        %980 = vmatprep.subr.mxu0 %v853
        %981 = vmatpush1.msra.mxu0 %v852
        %982 = vmatprep.subr.mxu0 %v855
        %983 = vmatpush1.msra.mxu0 %v854
        %984 = vmatprep.subr.mxu0 %v857
        %985 = vmatpush1.msra.mxu0 %v856
        %986 = vmatprep.subr.mxu0 %v859
        %987 = vmatpush1.msra.mxu0 %v858
        %988 = vmatprep.subr.mxu0 %v861
        %989 = vmatpush1.msra.mxu0 %v860
        %990 = vmatprep.subr.mxu0 %v863
        %991 = vmatpush1.msra.mxu0 %v862
        %992 = vmatprep.subr.mxu0 %v865
        %993 = vmatpush1.msra.mxu0 %v864
        %994 = vmatprep.subr.mxu0 %v867
        %995 = vmatpush1.msra.mxu0 %v866
        %996 = vmatprep.subr.mxu0 %v869
        %997 = vmatpush1.msra.mxu0 %v868
        %998 = vmatprep.subr.mxu0 %v871
        %999 = vmatpush1.msra.mxu0 %v870
        %1000 = vmatprep.subr.mxu0 %v873
        %1001 = vmatpush1.msra.mxu0 %v872
        %1002 = vmatprep.subr.mxu0 %v875
        %1003 = vmatpush1.msra.mxu0 %v874
        %1004 = vmatprep.subr.mxu0 %v877
        %1005 = vmatpush1.msra.mxu0 %v876
        %1006 = vmatprep.subr.mxu0 %v879
        %1007 = vmatpush1.msra.mxu0 %v878
        %1008 = vmatprep.subr.mxu0 %v881
        %1009 = vmatpush1.msra.mxu0 %v880
        %1010 = vmatprep.subr.mxu0 %v883
        %1011 = vmatpush1.msra.mxu0 %v882
        %1012 = vmatprep.subr.mxu0 %v885
        %1013 = vmatpush1.msra.mxu0 %v884
        %1014 = vmatprep.subr.mxu0 %v887
        %1015 = vmatpush1.msra.mxu0 %v886
        %1016 = vmatprep.subr.mxu0 %v889
        %1017 = vmatpush1.msra.mxu0 %v888
        %1018 = vmatprep.subr.mxu0 %v891
        %1019 = vmatpush1.msra.mxu0 %v890
        %1020 = vmatprep.mubr.f32.mxu0 %v827
        %1021 = vmatmul.mubr.f32.gmra.mrb[0].mxu0 %v826
        %v1022 = vpop.f32.mrb[0].mxu0
        %v1023 = vadd.f32 0.0, %v1022
        %v1024 = vpop.f32.mrb[0].mxu0
        %v1025 = vadd.f32 0.0, %v1024
        %1026 = vdwg.mxu0
        %1027 = vmatprep.subr.mxu0 %v893
        %1028 = vmatpush1.msra.mxu0 %v892
        %1029 = vmatprep.subr.mxu0 %v895
        %1030 = vmatpush1.msra.mxu0 %v894
        %1031 = vmatprep.subr.mxu0 %v897
        %1032 = vmatpush1.msra.mxu0 %v896
        %1033 = vmatprep.subr.mxu0 %v899
        %1034 = vmatpush1.msra.mxu0 %v898
        %1035 = vmatprep.subr.mxu0 %v901
        %1036 = vmatpush1.msra.mxu0 %v900
        %1037 = vmatprep.subr.mxu0 %v903
        %1038 = vmatpush1.msra.mxu0 %v902
        %1039 = vmatprep.subr.mxu0 %v905
        %1040 = vmatpush1.msra.mxu0 %v904
        %1041 = vmatprep.subr.mxu0 %v907
        %1042 = vmatpush1.msra.mxu0 %v906
        %1043 = vmatprep.subr.mxu0 %v909
        %1044 = vmatpush1.msra.mxu0 %v908
        %1045 = vmatprep.subr.mxu0 %v911
        %1046 = vmatpush1.msra.mxu0 %v910
        %1047 = vmatprep.subr.mxu0 %v913
        %1048 = vmatpush1.msra.mxu0 %v912
        %1049 = vmatprep.subr.mxu0 %v915
        %1050 = vmatpush1.msra.mxu0 %v914
        %1051 = vmatprep.subr.mxu0 %v917
        %1052 = vmatpush1.msra.mxu0 %v916
        %1053 = vmatprep.subr.mxu0 %v919
        %1054 = vmatpush1.msra.mxu0 %v918
        %1055 = vmatprep.subr.mxu0 %v921
        %1056 = vmatpush1.msra.mxu0 %v920
        %1057 = vmatprep.subr.mxu0 %v923
        %1058 = vmatpush1.msra.mxu0 %v922
        %1059 = vmatprep.subr.mxu0 %v925
        %1060 = vmatpush1.msra.mxu0 %v924
        %1061 = vmatprep.subr.mxu0 %v927
        %1062 = vmatpush1.msra.mxu0 %v926
        %1063 = vmatprep.subr.mxu0 %v929
        %1064 = vmatpush1.msra.mxu0 %v928
        %1065 = vmatprep.subr.mxu0 %v931
        %1066 = vmatpush1.msra.mxu0 %v930
        %1067 = vmatprep.subr.mxu0 %v933
        %1068 = vmatpush1.msra.mxu0 %v932
        %1069 = vmatprep.subr.mxu0 %v935
        %1070 = vmatpush1.msra.mxu0 %v934
        %1071 = vmatprep.subr.mxu0 %v937
        %1072 = vmatpush1.msra.mxu0 %v936
        %1073 = vmatprep.subr.mxu0 %v939
        %1074 = vmatpush1.msra.mxu0 %v938
        %1075 = vmatprep.subr.mxu0 %v941
        %1076 = vmatpush1.msra.mxu0 %v940
        %1077 = vmatprep.subr.mxu0 %v943
        %1078 = vmatpush1.msra.mxu0 %v942
        %1079 = vmatprep.subr.mxu0 %v945
        %1080 = vmatpush1.msra.mxu0 %v944
        %1081 = vmatprep.subr.mxu0 %v947
        %1082 = vmatpush1.msra.mxu0 %v946
        %1083 = vmatprep.subr.mxu0 %v949
        %1084 = vmatpush1.msra.mxu0 %v948
        %1085 = vmatprep.subr.mxu0 %v951
        %1086 = vmatpush1.msra.mxu0 %v950
        %1087 = vmatprep.subr.mxu0 %v953
        %1088 = vmatpush1.msra.mxu0 %v952
        %1089 = vmatprep.subr.mxu0 %v955
        %1090 = vmatpush1.msra.mxu0 %v954
        %1091 = vmatprep.mubr.f32.mxu0 %v827
        %1092 = vmatmul.mubr.f32.gmra.mrb[0].mxu0 %v826
        %v1093 = vpop.f32.mrb[0].mxu0
        %v1094 = vadd.f32 0.0, %v1093
        %v1095 = vpop.f32.mrb[0].mxu0
        %v1096 = vadd.f32 0.0, %v1095
        %1097 = vdwg.mxu0
        %v1098 = vld [vmem:[%s7] sm:$0xff]
        %v1099 = vld [vmem:[%s8] sm:$0xff]
        %vm1100 = vcmask 31744
        %v1102 = vsel %vm1100, %v1099, 0
        %vm1104 = vcmask 1043456
        %v1106 = vsel %vm1104, %v1094, 0
        %v1109 = vsel %vm1104, %v1096, 0
        %1111 = vmatprep.subr.mxu0 %v1109
        %1112 = vmatpush1.msra.mxu0 %v1106
        %1113 = vmatprep.subr.mxu0 0.0
        %1114 = vmatpush1.msra.mxu0 0.0
        %1115 = vmatprep.subr.mxu0 0.0
        %1116 = vmatpush1.msra.mxu0 0.0
        %1117 = vmatprep.subr.mxu0 0.0
        %1118 = vmatpush1.msra.mxu0 0.0
        %1119 = vmatprep.subr.mxu0 0.0
        %1120 = vmatpush1.msra.mxu0 0.0
        %1121 = vmatprep.subr.mxu0 0.0
        %1122 = vmatpush1.msra.mxu0 0.0
        %1123 = vmatprep.subr.mxu0 0.0
        %1124 = vmatpush1.msra.mxu0 0.0
        %1125 = vmatprep.subr.mxu0 0.0
        %1126 = vmatpush1.msra.mxu0 0.0
        %1127 = vmatprep.subr.mxu0 0.0
        %1128 = vmatpush1.msra.mxu0 0.0
        %1129 = vmatprep.subr.mxu0 0.0
        %1130 = vmatpush1.msra.mxu0 0.0
        %1131 = vmatprep.subr.mxu0 0.0
        %1132 = vmatpush1.msra.mxu0 0.0
        %1133 = vmatprep.subr.mxu0 0.0
        %1134 = vmatpush1.msra.mxu0 0.0
        %1135 = vmatprep.subr.mxu0 0.0
        %1136 = vmatpush1.msra.mxu0 0.0
        %1137 = vmatprep.subr.mxu0 0.0
        %1138 = vmatpush1.msra.mxu0 0.0
        %1139 = vmatprep.subr.mxu0 0.0
        %1140 = vmatpush1.msra.mxu0 0.0
        %1141 = vmatprep.subr.mxu0 0.0
        %1142 = vmatpush1.msra.mxu0 0.0
        %1143 = vmatprep.subr.mxu0 0.0
        %1144 = vmatpush1.msra.mxu0 0.0
        %1145 = vmatprep.subr.mxu0 0.0
        %1146 = vmatpush1.msra.mxu0 0.0
        %1147 = vmatprep.subr.mxu0 0.0
        %1148 = vmatpush1.msra.mxu0 0.0
        %1149 = vmatprep.subr.mxu0 0.0
        %1150 = vmatpush1.msra.mxu0 0.0
        %1151 = vmatprep.subr.mxu0 0.0
        %1152 = vmatpush1.msra.mxu0 0.0
        %1153 = vmatprep.subr.mxu0 0.0
        %1154 = vmatpush1.msra.mxu0 0.0
        %1155 = vmatprep.subr.mxu0 0.0
        %1156 = vmatpush1.msra.mxu0 0.0
        %1157 = vmatprep.subr.mxu0 0.0
        %1158 = vmatpush1.msra.mxu0 0.0
        %1159 = vmatprep.subr.mxu0 0.0
        %1160 = vmatpush1.msra.mxu0 0.0
        %1161 = vmatprep.subr.mxu0 0.0
        %1162 = vmatpush1.msra.mxu0 0.0
        %1163 = vmatprep.subr.mxu0 0.0
        %1164 = vmatpush1.msra.mxu0 0.0
        %1165 = vmatprep.subr.mxu0 0.0
        %1166 = vmatpush1.msra.mxu0 0.0
        %1167 = vmatprep.subr.mxu0 0.0
        %1168 = vmatpush1.msra.mxu0 0.0
        %1169 = vmatprep.subr.mxu0 0.0
        %1170 = vmatpush1.msra.mxu0 0.0
        %1171 = vmatprep.subr.mxu0 0.0
        %1172 = vmatpush1.msra.mxu0 0.0
        %1173 = vmatprep.subr.mxu0 0.0
        %1174 = vmatpush1.msra.mxu0 0.0
        %1175 = vmatprep.mubr.f32.mxu0 0.0
        %1176 = vmatmul.mubr.f32.gmra.mrb[0].mxu0 %v1102
        %v1177 = vpop.f32.mrb[0].mxu0
        %v1178 = vadd.f32 0.0, %v1177
        %v1179 = vpop.f32.mrb[0].mxu0
        %v1180 = vadd.f32 0.0, %v1179
        %1181 = vdwg.mxu0
        %v1183 = vsel %vm1100, %v1098, 0
        %v1186 = vsel %vm1104, %v1023, 0
        %v1189 = vsel %vm1104, %v1025, 0
        %1191 = vmatprep.subr.mxu0 %v1189
        %1192 = vmatpush1.msra.mxu0 %v1186
        %1193 = vmatprep.subr.mxu0 0.0
        %1194 = vmatpush1.msra.mxu0 0.0
        %1195 = vmatprep.subr.mxu0 0.0
        %1196 = vmatpush1.msra.mxu0 0.0
        %1197 = vmatprep.subr.mxu0 0.0
        %1198 = vmatpush1.msra.mxu0 0.0
        %1199 = vmatprep.subr.mxu0 0.0
        %1200 = vmatpush1.msra.mxu0 0.0
        %1201 = vmatprep.subr.mxu0 0.0
        %1202 = vmatpush1.msra.mxu0 0.0
        %1203 = vmatprep.subr.mxu0 0.0
        %1204 = vmatpush1.msra.mxu0 0.0
        %1205 = vmatprep.subr.mxu0 0.0
        %1206 = vmatpush1.msra.mxu0 0.0
        %1207 = vmatprep.subr.mxu0 0.0
        %1208 = vmatpush1.msra.mxu0 0.0
        %1209 = vmatprep.subr.mxu0 0.0
        %1210 = vmatpush1.msra.mxu0 0.0
        %1211 = vmatprep.subr.mxu0 0.0
        %1212 = vmatpush1.msra.mxu0 0.0
        %1213 = vmatprep.subr.mxu0 0.0
        %1214 = vmatpush1.msra.mxu0 0.0
        %1215 = vmatprep.subr.mxu0 0.0
        %1216 = vmatpush1.msra.mxu0 0.0
        %1217 = vmatprep.subr.mxu0 0.0
        %1218 = vmatpush1.msra.mxu0 0.0
        %1219 = vmatprep.subr.mxu0 0.0
        %1220 = vmatpush1.msra.mxu0 0.0
        %1221 = vmatprep.subr.mxu0 0.0
        %1222 = vmatpush1.msra.mxu0 0.0
        %1223 = vmatprep.subr.mxu0 0.0
        %1224 = vmatpush1.msra.mxu0 0.0
        %1225 = vmatprep.subr.mxu0 0.0
        %1226 = vmatpush1.msra.mxu0 0.0
        %1227 = vmatprep.subr.mxu0 0.0
        %1228 = vmatpush1.msra.mxu0 0.0
        %1229 = vmatprep.subr.mxu0 0.0
        %1230 = vmatpush1.msra.mxu0 0.0
        %1231 = vmatprep.subr.mxu0 0.0
        %1232 = vmatpush1.msra.mxu0 0.0
        %1233 = vmatprep.subr.mxu0 0.0
        %1234 = vmatpush1.msra.mxu0 0.0
        %1235 = vmatprep.subr.mxu0 0.0
        %1236 = vmatpush1.msra.mxu0 0.0
        %1237 = vmatprep.subr.mxu0 0.0
        %1238 = vmatpush1.msra.mxu0 0.0
        %1239 = vmatprep.subr.mxu0 0.0
        %1240 = vmatpush1.msra.mxu0 0.0
        %1241 = vmatprep.subr.mxu0 0.0
        %1242 = vmatpush1.msra.mxu0 0.0
        %1243 = vmatprep.subr.mxu0 0.0
        %1244 = vmatpush1.msra.mxu0 0.0
        %1245 = vmatprep.subr.mxu0 0.0
        %1246 = vmatpush1.msra.mxu0 0.0
        %1247 = vmatprep.subr.mxu0 0.0
        %1248 = vmatpush1.msra.mxu0 0.0
        %1249 = vmatprep.subr.mxu0 0.0
        %1250 = vmatpush1.msra.mxu0 0.0
        %1251 = vmatprep.subr.mxu0 0.0
        %1252 = vmatpush1.msra.mxu0 0.0
        %1253 = vmatprep.subr.mxu0 0.0
        %1254 = vmatpush1.msra.mxu0 0.0
        %1255 = vmatprep.mubr.f32.mxu0 0.0
        %1256 = vmatmul.mubr.f32.gmra.mrb[0].mxu0 %v1183
        %v1257 = vpop.f32.mrb[0].mxu0
        %v1258 = vadd.f32 %v1178, %v1257
        %v1259 = vpop.f32.mrb[0].mxu0
        %v1260 = vadd.f32 %v1180, %v1259
        %1261 = vdwg.mxu0
        %v1262 = vld [vmem:[%s9] sm:$0xff]
        %1264 = vset.pattern.permute.xlu0 0
        %1265 = vperm.xlu0 %1264, %v1262
        %v1266 = vpop.permute.xlu0 %1265
        %v1268 = vadd.f32 %v1258, %v1266
        %v1269 = vadd.f32 %v1260, %v1266
        %v1270 = vmax.f32 %v1268, 0.0
        %v1271 = vmax.f32 %v1269, 0.0
        %v1274 = vrot.slane %v1270, 4
        %v1275 = vrot.slane %v1271, 4
        %1278 = vmatprep.subr.mxu0 %v893
        %1279 = vmatpush1.msra.mxu0 %v892
        %1280 = vmatprep.subr.mxu0 %v895
        %1281 = vmatpush1.msra.mxu0 %v894
        %1282 = vmatprep.subr.mxu0 %v897
        %1283 = vmatpush1.msra.mxu0 %v896
        %1284 = vmatprep.subr.mxu0 %v899
        %1285 = vmatpush1.msra.mxu0 %v898
        %1286 = vmatprep.subr.mxu0 %v901
        %1287 = vmatpush1.msra.mxu0 %v900
        %1288 = vmatprep.subr.mxu0 %v903
        %1289 = vmatpush1.msra.mxu0 %v902
        %1290 = vmatprep.subr.mxu0 %v905
        %1291 = vmatpush1.msra.mxu0 %v904
        %1292 = vmatprep.subr.mxu0 %v907
        %1293 = vmatpush1.msra.mxu0 %v906
        %1294 = vmatprep.subr.mxu0 %v909
        %1295 = vmatpush1.msra.mxu0 %v908
        %1296 = vmatprep.subr.mxu0 %v911
        %1297 = vmatpush1.msra.mxu0 %v910
        %1298 = vmatprep.subr.mxu0 %v913
        %1299 = vmatpush1.msra.mxu0 %v912
        %1300 = vmatprep.subr.mxu0 %v915
        %1301 = vmatpush1.msra.mxu0 %v914
        %1302 = vmatprep.subr.mxu0 %v917
        %1303 = vmatpush1.msra.mxu0 %v916
        %1304 = vmatprep.subr.mxu0 %v919
        %1305 = vmatpush1.msra.mxu0 %v918
        %1306 = vmatprep.subr.mxu0 %v921
        %1307 = vmatpush1.msra.mxu0 %v920
        %1308 = vmatprep.subr.mxu0 %v923
        %1309 = vmatpush1.msra.mxu0 %v922
        %1310 = vmatprep.subr.mxu0 %v925
        %1311 = vmatpush1.msra.mxu0 %v924
        %1312 = vmatprep.subr.mxu0 %v927
        %1313 = vmatpush1.msra.mxu0 %v926
        %1314 = vmatprep.subr.mxu0 %v929
        %1315 = vmatpush1.msra.mxu0 %v928
        %1316 = vmatprep.subr.mxu0 %v931
        %1317 = vmatpush1.msra.mxu0 %v930
        %1318 = vmatprep.subr.mxu0 %v933
        %1319 = vmatpush1.msra.mxu0 %v932
        %1320 = vmatprep.subr.mxu0 %v935
        %1321 = vmatpush1.msra.mxu0 %v934
        %1322 = vmatprep.subr.mxu0 %v937
        %1323 = vmatpush1.msra.mxu0 %v936
        %1324 = vmatprep.subr.mxu0 %v939
        %1325 = vmatpush1.msra.mxu0 %v938
        %1326 = vmatprep.subr.mxu0 %v941
        %1327 = vmatpush1.msra.mxu0 %v940
        %1328 = vmatprep.subr.mxu0 %v943
        %1329 = vmatpush1.msra.mxu0 %v942
        %1330 = vmatprep.subr.mxu0 %v945
        %1331 = vmatpush1.msra.mxu0 %v944
        %1332 = vmatprep.subr.mxu0 %v947
        %1333 = vmatpush1.msra.mxu0 %v946
        %1334 = vmatprep.subr.mxu0 %v949
        %1335 = vmatpush1.msra.mxu0 %v948
        %1336 = vmatprep.subr.mxu0 %v951
        %1337 = vmatpush1.msra.mxu0 %v950
        %1338 = vmatprep.subr.mxu0 %v953
        %1339 = vmatpush1.msra.mxu0 %v952
        %1340 = vmatprep.subr.mxu0 %v955
        %1341 = vmatpush1.msra.mxu0 %v954
        %1342 = vmatprep.mubr.f32.mxu0 %v1275
        %1343 = vmatmul.mubr.f32.gmra.mrb[0].mxu0 %v1274
        %v1344 = vpop.f32.mrb[0].mxu0
        %v1345 = vadd.f32 0.0, %v1344
        %v1346 = vpop.f32.mrb[0].mxu0
        %v1347 = vadd.f32 0.0, %v1346
        %1348 = vdwg.mxu0
        %1349 = vmatprep.subr.mxu0 %v829
        %1350 = vmatpush1.msra.mxu0 %v828
        %1351 = vmatprep.subr.mxu0 %v831
        %1352 = vmatpush1.msra.mxu0 %v830
        %1353 = vmatprep.subr.mxu0 %v833
        %1354 = vmatpush1.msra.mxu0 %v832
        %1355 = vmatprep.subr.mxu0 %v835
        %1356 = vmatpush1.msra.mxu0 %v834
        %1357 = vmatprep.subr.mxu0 %v837
        %1358 = vmatpush1.msra.mxu0 %v836
        %1359 = vmatprep.subr.mxu0 %v839
        %1360 = vmatpush1.msra.mxu0 %v838
        %1361 = vmatprep.subr.mxu0 %v841
        %1362 = vmatpush1.msra.mxu0 %v840
        %1363 = vmatprep.subr.mxu0 %v843
        %1364 = vmatpush1.msra.mxu0 %v842
        %1365 = vmatprep.subr.mxu0 %v845
        %1366 = vmatpush1.msra.mxu0 %v844
        %1367 = vmatprep.subr.mxu0 %v847
        %1368 = vmatpush1.msra.mxu0 %v846
        %1369 = vmatprep.subr.mxu0 %v849
        %1370 = vmatpush1.msra.mxu0 %v848
        %1371 = vmatprep.subr.mxu0 %v851
        %1372 = vmatpush1.msra.mxu0 %v850
        %1373 = vmatprep.subr.mxu0 %v853
        %1374 = vmatpush1.msra.mxu0 %v852
        %1375 = vmatprep.subr.mxu0 %v855
        %1376 = vmatpush1.msra.mxu0 %v854
        %1377 = vmatprep.subr.mxu0 %v857
        %1378 = vmatpush1.msra.mxu0 %v856
        %1379 = vmatprep.subr.mxu0 %v859
        %1380 = vmatpush1.msra.mxu0 %v858
        %1381 = vmatprep.subr.mxu0 %v861
        %1382 = vmatpush1.msra.mxu0 %v860
        %1383 = vmatprep.subr.mxu0 %v863
        %1384 = vmatpush1.msra.mxu0 %v862
        %1385 = vmatprep.subr.mxu0 %v865
        %1386 = vmatpush1.msra.mxu0 %v864
        %1387 = vmatprep.subr.mxu0 %v867
        %1388 = vmatpush1.msra.mxu0 %v866
        %1389 = vmatprep.subr.mxu0 %v869
        %1390 = vmatpush1.msra.mxu0 %v868
        %1391 = vmatprep.subr.mxu0 %v871
        %1392 = vmatpush1.msra.mxu0 %v870
        %1393 = vmatprep.subr.mxu0 %v873
        %1394 = vmatpush1.msra.mxu0 %v872
        %1395 = vmatprep.subr.mxu0 %v875
        %1396 = vmatpush1.msra.mxu0 %v874
        %1397 = vmatprep.subr.mxu0 %v877
        %1398 = vmatpush1.msra.mxu0 %v876
        %1399 = vmatprep.subr.mxu0 %v879
        %1400 = vmatpush1.msra.mxu0 %v878
        %1401 = vmatprep.subr.mxu0 %v881
        %1402 = vmatpush1.msra.mxu0 %v880
        %1403 = vmatprep.subr.mxu0 %v883
        %1404 = vmatpush1.msra.mxu0 %v882
        %1405 = vmatprep.subr.mxu0 %v885
        %1406 = vmatpush1.msra.mxu0 %v884
        %1407 = vmatprep.subr.mxu0 %v887
        %1408 = vmatpush1.msra.mxu0 %v886
        %1409 = vmatprep.subr.mxu0 %v889
        %1410 = vmatpush1.msra.mxu0 %v888
        %1411 = vmatprep.subr.mxu0 %v891
        %1412 = vmatpush1.msra.mxu0 %v890
        %1413 = vmatprep.mubr.f32.mxu0 %v1271
        %1414 = vmatmul.mubr.f32.gmra.mrb[0].mxu0 %v1270
        %v1415 = vpop.f32.mrb[0].mxu0
        %v1416 = vadd.f32 %v1345, %v1415
        %v1417 = vpop.f32.mrb[0].mxu0
        %v1418 = vadd.f32 %v1347, %v1417
        %1419 = vdwg.mxu0
        %v1420 = vld [vmem:[#allocation5] sm:$0xff]
        %v1421 = vld [vmem:[#allocation5 + $0x8] sm:$0xff]
        %v1422 = vld [vmem:[#allocation5 + $0x10] sm:$0xff]
        %v1423 = vld [vmem:[#allocation5 + $0x18] sm:$0xff]
        %v1424 = vld [vmem:[#allocation5 + $0x20] sm:$0xff]
        %v1425 = vld [vmem:[#allocation5 + $0x28] sm:$0xff]
        %v1426 = vld [vmem:[#allocation5 + $0x30] sm:$0xff]
        %v1427 = vld [vmem:[#allocation5 + $0x38] sm:$0xff]
        %v1428 = vld [vmem:[#allocation5 + $0x40] sm:$0xff]
        %v1429 = vld [vmem:[#allocation5 + $0x48] sm:$0xff]
        %v1430 = vld [vmem:[#allocation5 + $0x50] sm:$0xff]
        %v1431 = vld [vmem:[#allocation5 + $0x58] sm:$0xff]
        %v1432 = vld [vmem:[#allocation5 + $0x60] sm:$0xff]
        %v1433 = vld [vmem:[#allocation5 + $0x68] sm:$0xff]
        %v1434 = vld [vmem:[#allocation5 + $0x70] sm:$0xff]
        %v1435 = vld [vmem:[#allocation5 + $0x78] sm:$0xff]
        %v1436 = vld [vmem:[#allocation5 + $0x80] sm:$0xff]
        %v1437 = vld [vmem:[#allocation5 + $0x88] sm:$0xff]
        %v1438 = vld [vmem:[#allocation5 + $0x90] sm:$0xff]
        %v1439 = vld [vmem:[#allocation5 + $0x98] sm:$0xff]
        %v1440 = vld [vmem:[#allocation5 + $0xa0] sm:$0xff]
        %v1441 = vld [vmem:[#allocation5 + $0xa8] sm:$0xff]
        %v1442 = vld [vmem:[#allocation5 + $0xb0] sm:$0xff]
        %v1443 = vld [vmem:[#allocation5 + $0xb8] sm:$0xff]
        %v1444 = vld [vmem:[#allocation5 + $0xc0] sm:$0xff]
        %v1445 = vld [vmem:[#allocation5 + $0xc8] sm:$0xff]
        %v1446 = vld [vmem:[#allocation5 + $0xd0] sm:$0xff]
        %v1447 = vld [vmem:[#allocation5 + $0xd8] sm:$0xff]
        %v1448 = vld [vmem:[#allocation5 + $0xe0] sm:$0xff]
        %v1449 = vld [vmem:[#allocation5 + $0xe8] sm:$0xff]
        %v1450 = vld [vmem:[#allocation5 + $0xf0] sm:$0xff]
        %v1451 = vld [vmem:[#allocation5 + $0xf8] sm:$0xff]
        %1452 = vmatprep.subr.mxu0 0.0
        %1453 = vmatpush1.msra.mxu0 %v1420
        %1454 = vmatprep.subr.mxu0 0.0
        %1455 = vmatpush1.msra.mxu0 %v1421
        %1456 = vmatprep.subr.mxu0 0.0
        %1457 = vmatpush1.msra.mxu0 %v1422
        %1458 = vmatprep.subr.mxu0 0.0
        %1459 = vmatpush1.msra.mxu0 %v1423
        %1460 = vmatprep.subr.mxu0 0.0
        %1461 = vmatpush1.msra.mxu0 %v1424
        %1462 = vmatprep.subr.mxu0 0.0
        %1463 = vmatpush1.msra.mxu0 %v1425
        %1464 = vmatprep.subr.mxu0 0.0
        %1465 = vmatpush1.msra.mxu0 %v1426
        %1466 = vmatprep.subr.mxu0 0.0
        %1467 = vmatpush1.msra.mxu0 %v1427
        %1468 = vmatprep.subr.mxu0 0.0
        %1469 = vmatpush1.msra.mxu0 %v1428
        %1470 = vmatprep.subr.mxu0 0.0
        %1471 = vmatpush1.msra.mxu0 %v1429
        %1472 = vmatprep.subr.mxu0 0.0
        %1473 = vmatpush1.msra.mxu0 %v1430
        %1474 = vmatprep.subr.mxu0 0.0
        %1475 = vmatpush1.msra.mxu0 %v1431
        %1476 = vmatprep.subr.mxu0 0.0
        %1477 = vmatpush1.msra.mxu0 %v1432
        %1478 = vmatprep.subr.mxu0 0.0
        %1479 = vmatpush1.msra.mxu0 %v1433
        %1480 = vmatprep.subr.mxu0 0.0
        %1481 = vmatpush1.msra.mxu0 %v1434
        %1482 = vmatprep.subr.mxu0 0.0
        %1483 = vmatpush1.msra.mxu0 %v1435
        %1484 = vmatprep.subr.mxu0 0.0
        %1485 = vmatpush1.msra.mxu0 %v1436
        %1486 = vmatprep.subr.mxu0 0.0
        %1487 = vmatpush1.msra.mxu0 %v1437
        %1488 = vmatprep.subr.mxu0 0.0
        %1489 = vmatpush1.msra.mxu0 %v1438
        %1490 = vmatprep.subr.mxu0 0.0
        %1491 = vmatpush1.msra.mxu0 %v1439
        %1492 = vmatprep.subr.mxu0 0.0
        %1493 = vmatpush1.msra.mxu0 %v1440
        %1494 = vmatprep.subr.mxu0 0.0
        %1495 = vmatpush1.msra.mxu0 %v1441
        %1496 = vmatprep.subr.mxu0 0.0
        %1497 = vmatpush1.msra.mxu0 %v1442
        %1498 = vmatprep.subr.mxu0 0.0
        %1499 = vmatpush1.msra.mxu0 %v1443
        %1500 = vmatprep.subr.mxu0 0.0
        %1501 = vmatpush1.msra.mxu0 %v1444
        %1502 = vmatprep.subr.mxu0 0.0
        %1503 = vmatpush1.msra.mxu0 %v1445
        %1504 = vmatprep.subr.mxu0 0.0
        %1505 = vmatpush1.msra.mxu0 %v1446
        %1506 = vmatprep.subr.mxu0 0.0
        %1507 = vmatpush1.msra.mxu0 %v1447
        %1508 = vmatprep.subr.mxu0 0.0
        %1509 = vmatpush1.msra.mxu0 %v1448
        %1510 = vmatprep.subr.mxu0 0.0
        %1511 = vmatpush1.msra.mxu0 %v1449
        %1512 = vmatprep.subr.mxu0 0.0
        %1513 = vmatpush1.msra.mxu0 %v1450
        %1514 = vmatprep.subr.mxu0 0.0
        %1515 = vmatpush1.msra.mxu0 %v1451
        %1516 = vmatprep.mubr.f32.mxu0 %v827
        %1517 = vmatmul.mubr.f32.gmra.mrb[0].mxu0 %v826
        %v1518 = vpop.f32.mrb[0].mxu0
        %v1519 = vadd.f32 0.0, %v1518
        %v1520 = vpop.f32.mrb[0].mxu0
        %1521 = vdwg.mxu0
        %s1522 = scalar_lea.vmem [#allocation5], 256
        %v1523 = vld [vmem:[%s1522] sm:$0xff]
        %v1524 = vld [vmem:[%s1522 + $0x8] sm:$0xff]
        %v1525 = vld [vmem:[%s1522 + $0x10] sm:$0xff]
        %v1526 = vld [vmem:[%s1522 + $0x18] sm:$0xff]
        %v1527 = vld [vmem:[%s1522 + $0x20] sm:$0xff]
        %v1528 = vld [vmem:[%s1522 + $0x28] sm:$0xff]
        %v1529 = vld [vmem:[%s1522 + $0x30] sm:$0xff]
        %v1530 = vld [vmem:[%s1522 + $0x38] sm:$0xff]
        %v1531 = vld [vmem:[%s1522 + $0x40] sm:$0xff]
        %v1532 = vld [vmem:[%s1522 + $0x48] sm:$0xff]
        %v1533 = vld [vmem:[%s1522 + $0x50] sm:$0xff]
        %v1534 = vld [vmem:[%s1522 + $0x58] sm:$0xff]
        %v1535 = vld [vmem:[%s1522 + $0x60] sm:$0xff]
        %v1536 = vld [vmem:[%s1522 + $0x68] sm:$0xff]
        %v1537 = vld [vmem:[%s1522 + $0x70] sm:$0xff]
        %v1538 = vld [vmem:[%s1522 + $0x78] sm:$0xff]
        %v1539 = vld [vmem:[%s1522 + $0x80] sm:$0xff]
        %v1540 = vld [vmem:[%s1522 + $0x88] sm:$0xff]
        %v1541 = vld [vmem:[%s1522 + $0x90] sm:$0xff]
        %v1542 = vld [vmem:[%s1522 + $0x98] sm:$0xff]
        %v1543 = vld [vmem:[%s1522 + $0xa0] sm:$0xff]
        %v1544 = vld [vmem:[%s1522 + $0xa8] sm:$0xff]
        %v1545 = vld [vmem:[%s1522 + $0xb0] sm:$0xff]
        %v1546 = vld [vmem:[%s1522 + $0xb8] sm:$0xff]
        %v1547 = vld [vmem:[%s1522 + $0xc0] sm:$0xff]
        %v1548 = vld [vmem:[%s1522 + $0xc8] sm:$0xff]
        %v1549 = vld [vmem:[%s1522 + $0xd0] sm:$0xff]
        %v1550 = vld [vmem:[%s1522 + $0xd8] sm:$0xff]
        %v1551 = vld [vmem:[%s1522 + $0xe0] sm:$0xff]
        %v1552 = vld [vmem:[%s1522 + $0xe8] sm:$0xff]
        %v1553 = vld [vmem:[%s1522 + $0xf0] sm:$0xff]
        %v1554 = vld [vmem:[%s1522 + $0xf8] sm:$0xff]
        %1555 = vmatprep.subr.mxu0 0.0
        %1556 = vmatpush1.msra.mxu0 %v1523
        %1557 = vmatprep.subr.mxu0 0.0
        %1558 = vmatpush1.msra.mxu0 %v1524
        %1559 = vmatprep.subr.mxu0 0.0
        %1560 = vmatpush1.msra.mxu0 %v1525
        %1561 = vmatprep.subr.mxu0 0.0
        %1562 = vmatpush1.msra.mxu0 %v1526
        %1563 = vmatprep.subr.mxu0 0.0
        %1564 = vmatpush1.msra.mxu0 %v1527
        %1565 = vmatprep.subr.mxu0 0.0
        %1566 = vmatpush1.msra.mxu0 %v1528
        %1567 = vmatprep.subr.mxu0 0.0
        %1568 = vmatpush1.msra.mxu0 %v1529
        %1569 = vmatprep.subr.mxu0 0.0
        %1570 = vmatpush1.msra.mxu0 %v1530
        %1571 = vmatprep.subr.mxu0 0.0
        %1572 = vmatpush1.msra.mxu0 %v1531
        %1573 = vmatprep.subr.mxu0 0.0
        %1574 = vmatpush1.msra.mxu0 %v1532
        %1575 = vmatprep.subr.mxu0 0.0
        %1576 = vmatpush1.msra.mxu0 %v1533
        %1577 = vmatprep.subr.mxu0 0.0
        %1578 = vmatpush1.msra.mxu0 %v1534
        %1579 = vmatprep.subr.mxu0 0.0
        %1580 = vmatpush1.msra.mxu0 %v1535
        %1581 = vmatprep.subr.mxu0 0.0
        %1582 = vmatpush1.msra.mxu0 %v1536
        %1583 = vmatprep.subr.mxu0 0.0
        %1584 = vmatpush1.msra.mxu0 %v1537
        %1585 = vmatprep.subr.mxu0 0.0
        %1586 = vmatpush1.msra.mxu0 %v1538
        %1587 = vmatprep.subr.mxu0 0.0
        %1588 = vmatpush1.msra.mxu0 %v1539
        %1589 = vmatprep.subr.mxu0 0.0
        %1590 = vmatpush1.msra.mxu0 %v1540
        %1591 = vmatprep.subr.mxu0 0.0
        %1592 = vmatpush1.msra.mxu0 %v1541
        %1593 = vmatprep.subr.mxu0 0.0
        %1594 = vmatpush1.msra.mxu0 %v1542
        %1595 = vmatprep.subr.mxu0 0.0
        %1596 = vmatpush1.msra.mxu0 %v1543
        %1597 = vmatprep.subr.mxu0 0.0
        %1598 = vmatpush1.msra.mxu0 %v1544
        %1599 = vmatprep.subr.mxu0 0.0
        %1600 = vmatpush1.msra.mxu0 %v1545
        %1601 = vmatprep.subr.mxu0 0.0
        %1602 = vmatpush1.msra.mxu0 %v1546
        %1603 = vmatprep.subr.mxu0 0.0
        %1604 = vmatpush1.msra.mxu0 %v1547
        %1605 = vmatprep.subr.mxu0 0.0
        %1606 = vmatpush1.msra.mxu0 %v1548
        %1607 = vmatprep.subr.mxu0 0.0
        %1608 = vmatpush1.msra.mxu0 %v1549
        %1609 = vmatprep.subr.mxu0 0.0
        %1610 = vmatpush1.msra.mxu0 %v1550
        %1611 = vmatprep.subr.mxu0 0.0
        %1612 = vmatpush1.msra.mxu0 %v1551
        %1613 = vmatprep.subr.mxu0 0.0
        %1614 = vmatpush1.msra.mxu0 %v1552
        %1615 = vmatprep.subr.mxu0 0.0
        %1616 = vmatpush1.msra.mxu0 %v1553
        %1617 = vmatprep.subr.mxu0 0.0
        %1618 = vmatpush1.msra.mxu0 %v1554
        %1619 = vmatprep.mubr.f32.mxu0 %v827
        %1620 = vmatmul.mubr.f32.gmra.mrb[0].mxu0 %v826
        %v1621 = vpop.f32.mrb[0].mxu0
        %v1622 = vadd.f32 0.0, %v1621
        %v1623 = vpop.f32.mrb[0].mxu0
        %1624 = vdwg.mxu0
        %s1625 = scalar_lea.vmem [#allocation5], 512
        %v1626 = vld [vmem:[%s1625] sm:$0xff]
        %v1627 = vld [vmem:[%s1625 + $0x8] sm:$0xff]
        %v1628 = vld [vmem:[%s1625 + $0x10] sm:$0xff]
        %v1629 = vld [vmem:[%s1625 + $0x18] sm:$0xff]
        %v1630 = vld [vmem:[%s1625 + $0x20] sm:$0xff]
        %v1631 = vld [vmem:[%s1625 + $0x28] sm:$0xff]
        %v1632 = vld [vmem:[%s1625 + $0x30] sm:$0xff]
        %v1633 = vld [vmem:[%s1625 + $0x38] sm:$0xff]
        %v1634 = vld [vmem:[%s1625 + $0x40] sm:$0xff]
        %v1635 = vld [vmem:[%s1625 + $0x48] sm:$0xff]
        %v1636 = vld [vmem:[%s1625 + $0x50] sm:$0xff]
        %v1637 = vld [vmem:[%s1625 + $0x58] sm:$0xff]
        %v1638 = vld [vmem:[%s1625 + $0x60] sm:$0xff]
        %v1639 = vld [vmem:[%s1625 + $0x68] sm:$0xff]
        %v1640 = vld [vmem:[%s1625 + $0x70] sm:$0xff]
        %v1641 = vld [vmem:[%s1625 + $0x78] sm:$0xff]
        %v1642 = vld [vmem:[%s1625 + $0x80] sm:$0xff]
        %v1643 = vld [vmem:[%s1625 + $0x88] sm:$0xff]
        %v1644 = vld [vmem:[%s1625 + $0x90] sm:$0xff]
        %v1645 = vld [vmem:[%s1625 + $0x98] sm:$0xff]
        %v1646 = vld [vmem:[%s1625 + $0xa0] sm:$0xff]
        %v1647 = vld [vmem:[%s1625 + $0xa8] sm:$0xff]
        %v1648 = vld [vmem:[%s1625 + $0xb0] sm:$0xff]
        %v1649 = vld [vmem:[%s1625 + $0xb8] sm:$0xff]
        %v1650 = vld [vmem:[%s1625 + $0xc0] sm:$0xff]
        %v1651 = vld [vmem:[%s1625 + $0xc8] sm:$0xff]
        %v1652 = vld [vmem:[%s1625 + $0xd0] sm:$0xff]
        %v1653 = vld [vmem:[%s1625 + $0xd8] sm:$0xff]
        %v1654 = vld [vmem:[%s1625 + $0xe0] sm:$0xff]
        %v1655 = vld [vmem:[%s1625 + $0xe8] sm:$0xff]
        %v1656 = vld [vmem:[%s1625 + $0xf0] sm:$0xff]
        %v1657 = vld [vmem:[%s1625 + $0xf8] sm:$0xff]
        %1658 = vmatprep.subr.mxu0 0.0
        %1659 = vmatpush1.msra.mxu0 %v1626
        %1660 = vmatprep.subr.mxu0 0.0
        %1661 = vmatpush1.msra.mxu0 %v1627
        %1662 = vmatprep.subr.mxu0 0.0
        %1663 = vmatpush1.msra.mxu0 %v1628
        %1664 = vmatprep.subr.mxu0 0.0
        %1665 = vmatpush1.msra.mxu0 %v1629
        %1666 = vmatprep.subr.mxu0 0.0
        %1667 = vmatpush1.msra.mxu0 %v1630
        %1668 = vmatprep.subr.mxu0 0.0
        %1669 = vmatpush1.msra.mxu0 %v1631
        %1670 = vmatprep.subr.mxu0 0.0
        %1671 = vmatpush1.msra.mxu0 %v1632
        %1672 = vmatprep.subr.mxu0 0.0
        %1673 = vmatpush1.msra.mxu0 %v1633
        %1674 = vmatprep.subr.mxu0 0.0
        %1675 = vmatpush1.msra.mxu0 %v1634
        %1676 = vmatprep.subr.mxu0 0.0
        %1677 = vmatpush1.msra.mxu0 %v1635
        %1678 = vmatprep.subr.mxu0 0.0
        %1679 = vmatpush1.msra.mxu0 %v1636
        %1680 = vmatprep.subr.mxu0 0.0
        %1681 = vmatpush1.msra.mxu0 %v1637
        %1682 = vmatprep.subr.mxu0 0.0
        %1683 = vmatpush1.msra.mxu0 %v1638
        %1684 = vmatprep.subr.mxu0 0.0
        %1685 = vmatpush1.msra.mxu0 %v1639
        %1686 = vmatprep.subr.mxu0 0.0
        %1687 = vmatpush1.msra.mxu0 %v1640
        %1688 = vmatprep.subr.mxu0 0.0
        %1689 = vmatpush1.msra.mxu0 %v1641
        %1690 = vmatprep.subr.mxu0 0.0
        %1691 = vmatpush1.msra.mxu0 %v1642
        %1692 = vmatprep.subr.mxu0 0.0
        %1693 = vmatpush1.msra.mxu0 %v1643
        %1694 = vmatprep.subr.mxu0 0.0
        %1695 = vmatpush1.msra.mxu0 %v1644
        %1696 = vmatprep.subr.mxu0 0.0
        %1697 = vmatpush1.msra.mxu0 %v1645
        %1698 = vmatprep.subr.mxu0 0.0
        %1699 = vmatpush1.msra.mxu0 %v1646
        %1700 = vmatprep.subr.mxu0 0.0
        %1701 = vmatpush1.msra.mxu0 %v1647
        %1702 = vmatprep.subr.mxu0 0.0
        %1703 = vmatpush1.msra.mxu0 %v1648
        %1704 = vmatprep.subr.mxu0 0.0
        %1705 = vmatpush1.msra.mxu0 %v1649
        %1706 = vmatprep.subr.mxu0 0.0
        %1707 = vmatpush1.msra.mxu0 %v1650
        %1708 = vmatprep.subr.mxu0 0.0
        %1709 = vmatpush1.msra.mxu0 %v1651
        %1710 = vmatprep.subr.mxu0 0.0
        %1711 = vmatpush1.msra.mxu0 %v1652
        %1712 = vmatprep.subr.mxu0 0.0
        %1713 = vmatpush1.msra.mxu0 %v1653
        %1714 = vmatprep.subr.mxu0 0.0
        %1715 = vmatpush1.msra.mxu0 %v1654
        %1716 = vmatprep.subr.mxu0 0.0
        %1717 = vmatpush1.msra.mxu0 %v1655
        %1718 = vmatprep.subr.mxu0 0.0
        %1719 = vmatpush1.msra.mxu0 %v1656
        %1720 = vmatprep.subr.mxu0 0.0
        %1721 = vmatpush1.msra.mxu0 %v1657
        %1722 = vmatprep.mubr.f32.mxu0 %v827
        %1723 = vmatmul.mubr.f32.gmra.mrb[0].mxu0 %v826
        %v1724 = vpop.f32.mrb[0].mxu0
        %v1725 = vadd.f32 0.0, %v1724
        %v1726 = vpop.f32.mrb[0].mxu0
        %1727 = vdwg.mxu0
        %s1728 = scalar_lea.vmem [#allocation5], 768
        %v1729 = vld [vmem:[%s1728] sm:$0xff]
        %v1730 = vld [vmem:[%s1728 + $0x8] sm:$0xff]
        %v1731 = vld [vmem:[%s1728 + $0x10] sm:$0xff]
        %v1732 = vld [vmem:[%s1728 + $0x18] sm:$0xff]
        %v1733 = vld [vmem:[%s1728 + $0x20] sm:$0xff]
        %v1734 = vld [vmem:[%s1728 + $0x28] sm:$0xff]
        %v1735 = vld [vmem:[%s1728 + $0x30] sm:$0xff]
        %v1736 = vld [vmem:[%s1728 + $0x38] sm:$0xff]
        %v1737 = vld [vmem:[%s1728 + $0x40] sm:$0xff]
        %v1738 = vld [vmem:[%s1728 + $0x48] sm:$0xff]
        %v1739 = vld [vmem:[%s1728 + $0x50] sm:$0xff]
        %v1740 = vld [vmem:[%s1728 + $0x58] sm:$0xff]
        %v1741 = vld [vmem:[%s1728 + $0x60] sm:$0xff]
        %v1742 = vld [vmem:[%s1728 + $0x68] sm:$0xff]
        %v1743 = vld [vmem:[%s1728 + $0x70] sm:$0xff]
        %v1744 = vld [vmem:[%s1728 + $0x78] sm:$0xff]
        %v1745 = vld [vmem:[%s1728 + $0x80] sm:$0xff]
        %v1746 = vld [vmem:[%s1728 + $0x88] sm:$0xff]
        %v1747 = vld [vmem:[%s1728 + $0x90] sm:$0xff]
        %v1748 = vld [vmem:[%s1728 + $0x98] sm:$0xff]
        %v1749 = vld [vmem:[%s1728 + $0xa0] sm:$0xff]
        %v1750 = vld [vmem:[%s1728 + $0xa8] sm:$0xff]
        %v1751 = vld [vmem:[%s1728 + $0xb0] sm:$0xff]
        %v1752 = vld [vmem:[%s1728 + $0xb8] sm:$0xff]
        %v1753 = vld [vmem:[%s1728 + $0xc0] sm:$0xff]
        %v1754 = vld [vmem:[%s1728 + $0xc8] sm:$0xff]
        %v1755 = vld [vmem:[%s1728 + $0xd0] sm:$0xff]
        %v1756 = vld [vmem:[%s1728 + $0xd8] sm:$0xff]
        %v1757 = vld [vmem:[%s1728 + $0xe0] sm:$0xff]
        %v1758 = vld [vmem:[%s1728 + $0xe8] sm:$0xff]
        %v1759 = vld [vmem:[%s1728 + $0xf0] sm:$0xff]
        %v1760 = vld [vmem:[%s1728 + $0xf8] sm:$0xff]
        %1761 = vmatprep.subr.mxu0 0.0
        %1762 = vmatpush1.msra.mxu0 %v1729
        %1763 = vmatprep.subr.mxu0 0.0
        %1764 = vmatpush1.msra.mxu0 %v1730
        %1765 = vmatprep.subr.mxu0 0.0
        %1766 = vmatpush1.msra.mxu0 %v1731
        %1767 = vmatprep.subr.mxu0 0.0
        %1768 = vmatpush1.msra.mxu0 %v1732
        %1769 = vmatprep.subr.mxu0 0.0
        %1770 = vmatpush1.msra.mxu0 %v1733
        %1771 = vmatprep.subr.mxu0 0.0
        %1772 = vmatpush1.msra.mxu0 %v1734
        %1773 = vmatprep.subr.mxu0 0.0
        %1774 = vmatpush1.msra.mxu0 %v1735
        %1775 = vmatprep.subr.mxu0 0.0
        %1776 = vmatpush1.msra.mxu0 %v1736
        %1777 = vmatprep.subr.mxu0 0.0
        %1778 = vmatpush1.msra.mxu0 %v1737
        %1779 = vmatprep.subr.mxu0 0.0
        %1780 = vmatpush1.msra.mxu0 %v1738
        %1781 = vmatprep.subr.mxu0 0.0
        %1782 = vmatpush1.msra.mxu0 %v1739
        %1783 = vmatprep.subr.mxu0 0.0
        %1784 = vmatpush1.msra.mxu0 %v1740
        %1785 = vmatprep.subr.mxu0 0.0
        %1786 = vmatpush1.msra.mxu0 %v1741
        %1787 = vmatprep.subr.mxu0 0.0
        %1788 = vmatpush1.msra.mxu0 %v1742
        %1789 = vmatprep.subr.mxu0 0.0
        %1790 = vmatpush1.msra.mxu0 %v1743
        %1791 = vmatprep.subr.mxu0 0.0
        %1792 = vmatpush1.msra.mxu0 %v1744
        %1793 = vmatprep.subr.mxu0 0.0
        %1794 = vmatpush1.msra.mxu0 %v1745
        %1795 = vmatprep.subr.mxu0 0.0
        %1796 = vmatpush1.msra.mxu0 %v1746
        %1797 = vmatprep.subr.mxu0 0.0
        %1798 = vmatpush1.msra.mxu0 %v1747
        %1799 = vmatprep.subr.mxu0 0.0
        %1800 = vmatpush1.msra.mxu0 %v1748
        %1801 = vmatprep.subr.mxu0 0.0
        %1802 = vmatpush1.msra.mxu0 %v1749
        %1803 = vmatprep.subr.mxu0 0.0
        %1804 = vmatpush1.msra.mxu0 %v1750
        %1805 = vmatprep.subr.mxu0 0.0
        %1806 = vmatpush1.msra.mxu0 %v1751
        %1807 = vmatprep.subr.mxu0 0.0
        %1808 = vmatpush1.msra.mxu0 %v1752
        %1809 = vmatprep.subr.mxu0 0.0
        %1810 = vmatpush1.msra.mxu0 %v1753
        %1811 = vmatprep.subr.mxu0 0.0
        %1812 = vmatpush1.msra.mxu0 %v1754
        %1813 = vmatprep.subr.mxu0 0.0
        %1814 = vmatpush1.msra.mxu0 %v1755
        %1815 = vmatprep.subr.mxu0 0.0
        %1816 = vmatpush1.msra.mxu0 %v1756
        %1817 = vmatprep.subr.mxu0 0.0
        %1818 = vmatpush1.msra.mxu0 %v1757
        %1819 = vmatprep.subr.mxu0 0.0
        %1820 = vmatpush1.msra.mxu0 %v1758
        %1821 = vmatprep.subr.mxu0 0.0
        %1822 = vmatpush1.msra.mxu0 %v1759
        %1823 = vmatprep.subr.mxu0 0.0
        %1824 = vmatpush1.msra.mxu0 %v1760
        %1825 = vmatprep.mubr.f32.mxu0 %v827
        %1826 = vmatmul.mubr.f32.gmra.mrb[0].mxu0 %v826
        %v1827 = vpop.f32.mrb[0].mxu0
        %v1828 = vadd.f32 0.0, %v1827
        %v1829 = vpop.f32.mrb[0].mxu0
        %1830 = vdwg.mxu0
        %v1832 = vrot.slane %v1622, 7
        %v1835 = vrot.slane %v1725, 6
        %v1838 = vrot.slane %v1828, 5
        %vm1840 = vcmask 1040384
        %v1841 = vsel %vm1840, %v1519, %v1832
        %vm1842 = vcmask 1041408
        %v1843 = vsel %vm1842, %v1841, %v1835
        %vm1844 = vcmask 1042432
        %v1845 = vsel %vm1844, %v1843, %v1838
        %v1846 = vld [vmem:[%s11] sm:$0xff]
        %v1847 = vld [vmem:[%s11 + $0x8] sm:$0xff]
        %v1848 = vld [vmem:[%s11 + $0x10] sm:$0xff]
        %v1849 = vld [vmem:[%s11 + $0x18] sm:$0xff]
        %v1850 = vld [vmem:[%s11 + $0x20] sm:$0xff]
        %v1851 = vld [vmem:[%s11 + $0x28] sm:$0xff]
        %v1852 = vld [vmem:[%s11 + $0x30] sm:$0xff]
        %v1853 = vld [vmem:[%s11 + $0x38] sm:$0xff]
        %v1854 = vld [vmem:[%s12] sm:$0xff]
        %v1855 = vld [vmem:[%s12 + $0x8] sm:$0xff]
        %v1856 = vld [vmem:[%s12 + $0x10] sm:$0xff]
        %v1857 = vld [vmem:[%s12 + $0x18] sm:$0xff]
        %v1858 = vld [vmem:[%s12 + $0x20] sm:$0xff]
        %v1859 = vld [vmem:[%s12 + $0x28] sm:$0xff]
        %v1860 = vld [vmem:[%s12 + $0x30] sm:$0xff]
        %v1861 = vld [vmem:[%s12 + $0x38] sm:$0xff]
        %vm1862 = vcmask 523264
        %v1864 = vsel %vm1862, %v1845, 0
        %1866 = vmatprep.subr.mxu0 0.0
        %1867 = vmatpush1.msra.mxu0 %v1846
        %1868 = vmatprep.subr.mxu0 0.0
        %1869 = vmatpush1.msra.mxu0 %v1847
        %1870 = vmatprep.subr.mxu0 0.0
        %1871 = vmatpush1.msra.mxu0 %v1848
        %1872 = vmatprep.subr.mxu0 0.0
        %1873 = vmatpush1.msra.mxu0 %v1849
        %1874 = vmatprep.subr.mxu0 0.0
        %1875 = vmatpush1.msra.mxu0 %v1850
        %1876 = vmatprep.subr.mxu0 0.0
        %1877 = vmatpush1.msra.mxu0 %v1851
        %1878 = vmatprep.subr.mxu0 0.0
        %1879 = vmatpush1.msra.mxu0 %v1852
        %1880 = vmatprep.subr.mxu0 0.0
        %1881 = vmatpush1.msra.mxu0 %v1853
        %1882 = vmatprep.subr.mxu0 0.0
        %1883 = vmatpush1.msra.mxu0 0.0
        %1884 = vmatprep.subr.mxu0 0.0
        %1885 = vmatpush1.msra.mxu0 0.0
        %1886 = vmatprep.subr.mxu0 0.0
        %1887 = vmatpush1.msra.mxu0 0.0
        %1888 = vmatprep.subr.mxu0 0.0
        %1889 = vmatpush1.msra.mxu0 0.0
        %1890 = vmatprep.subr.mxu0 0.0
        %1891 = vmatpush1.msra.mxu0 0.0
        %1892 = vmatprep.subr.mxu0 0.0
        %1893 = vmatpush1.msra.mxu0 0.0
        %1894 = vmatprep.subr.mxu0 0.0
        %1895 = vmatpush1.msra.mxu0 0.0
        %1896 = vmatprep.subr.mxu0 0.0
        %1897 = vmatpush1.msra.mxu0 0.0
        %1898 = vmatprep.subr.mxu0 0.0
        %1899 = vmatpush1.msra.mxu0 0.0
        %1900 = vmatprep.subr.mxu0 0.0
        %1901 = vmatpush1.msra.mxu0 0.0
        %1902 = vmatprep.subr.mxu0 0.0
        %1903 = vmatpush1.msra.mxu0 0.0
        %1904 = vmatprep.subr.mxu0 0.0
        %1905 = vmatpush1.msra.mxu0 0.0
        %1906 = vmatprep.subr.mxu0 0.0
        %1907 = vmatpush1.msra.mxu0 0.0
        %1908 = vmatprep.subr.mxu0 0.0
        %1909 = vmatpush1.msra.mxu0 0.0
        %1910 = vmatprep.subr.mxu0 0.0
        %1911 = vmatpush1.msra.mxu0 0.0
        %1912 = vmatprep.subr.mxu0 0.0
        %1913 = vmatpush1.msra.mxu0 0.0
        %1914 = vmatprep.subr.mxu0 0.0
        %1915 = vmatpush1.msra.mxu0 0.0
        %1916 = vmatprep.subr.mxu0 0.0
        %1917 = vmatpush1.msra.mxu0 0.0
        %1918 = vmatprep.subr.mxu0 0.0
        %1919 = vmatpush1.msra.mxu0 0.0
        %1920 = vmatprep.subr.mxu0 0.0
        %1921 = vmatpush1.msra.mxu0 0.0
        %1922 = vmatprep.subr.mxu0 0.0
        %1923 = vmatpush1.msra.mxu0 0.0
        %1924 = vmatprep.subr.mxu0 0.0
        %1925 = vmatpush1.msra.mxu0 0.0
        %1926 = vmatprep.subr.mxu0 0.0
        %1927 = vmatpush1.msra.mxu0 0.0
        %1928 = vmatprep.subr.mxu0 0.0
        %1929 = vmatpush1.msra.mxu0 0.0
        %1930 = vmatprep.mubr.f32.mxu0 0.0
        %1931 = vmatmul.mubr.f32.gmra.mrb[0].mxu0 %v1864
        %v1932 = vpop.f32.mrb[0].mxu0
        %v1933 = vadd.f32 0.0, %v1932
        %v1934 = vpop.f32.mrb[0].mxu0
        %1935 = vdwg.mxu0
        %1936 = vmatprep.subr.mxu0 0.0
        %1937 = vmatpush1.msra.mxu0 %v1854
        %1938 = vmatprep.subr.mxu0 0.0
        %1939 = vmatpush1.msra.mxu0 %v1855
        %1940 = vmatprep.subr.mxu0 0.0
        %1941 = vmatpush1.msra.mxu0 %v1856
        %1942 = vmatprep.subr.mxu0 0.0
        %1943 = vmatpush1.msra.mxu0 %v1857
        %1944 = vmatprep.subr.mxu0 0.0
        %1945 = vmatpush1.msra.mxu0 %v1858
        %1946 = vmatprep.subr.mxu0 0.0
        %1947 = vmatpush1.msra.mxu0 %v1859
        %1948 = vmatprep.subr.mxu0 0.0
        %1949 = vmatpush1.msra.mxu0 %v1860
        %1950 = vmatprep.subr.mxu0 0.0
        %1951 = vmatpush1.msra.mxu0 %v1861
        %1952 = vmatprep.subr.mxu0 0.0
        %1953 = vmatpush1.msra.mxu0 0.0
        %1954 = vmatprep.subr.mxu0 0.0
        %1955 = vmatpush1.msra.mxu0 0.0
        %1956 = vmatprep.subr.mxu0 0.0
        %1957 = vmatpush1.msra.mxu0 0.0
        %1958 = vmatprep.subr.mxu0 0.0
        %1959 = vmatpush1.msra.mxu0 0.0
        %1960 = vmatprep.subr.mxu0 0.0
        %1961 = vmatpush1.msra.mxu0 0.0
        %1962 = vmatprep.subr.mxu0 0.0
        %1963 = vmatpush1.msra.mxu0 0.0
        %1964 = vmatprep.subr.mxu0 0.0
        %1965 = vmatpush1.msra.mxu0 0.0
        %1966 = vmatprep.subr.mxu0 0.0
        %1967 = vmatpush1.msra.mxu0 0.0
        %1968 = vmatprep.subr.mxu0 0.0
        %1969 = vmatpush1.msra.mxu0 0.0
        %1970 = vmatprep.subr.mxu0 0.0
        %1971 = vmatpush1.msra.mxu0 0.0
        %1972 = vmatprep.subr.mxu0 0.0
        %1973 = vmatpush1.msra.mxu0 0.0
        %1974 = vmatprep.subr.mxu0 0.0
        %1975 = vmatpush1.msra.mxu0 0.0
        %1976 = vmatprep.subr.mxu0 0.0
        %1977 = vmatpush1.msra.mxu0 0.0
        %1978 = vmatprep.subr.mxu0 0.0
        %1979 = vmatpush1.msra.mxu0 0.0
        %1980 = vmatprep.subr.mxu0 0.0
        %1981 = vmatpush1.msra.mxu0 0.0
        %1982 = vmatprep.subr.mxu0 0.0
        %1983 = vmatpush1.msra.mxu0 0.0
        %1984 = vmatprep.subr.mxu0 0.0
        %1985 = vmatpush1.msra.mxu0 0.0
        %1986 = vmatprep.subr.mxu0 0.0
        %1987 = vmatpush1.msra.mxu0 0.0
        %1988 = vmatprep.subr.mxu0 0.0
        %1989 = vmatpush1.msra.mxu0 0.0
        %1990 = vmatprep.subr.mxu0 0.0
        %1991 = vmatpush1.msra.mxu0 0.0
        %1992 = vmatprep.subr.mxu0 0.0
        %1993 = vmatpush1.msra.mxu0 0.0
        %1994 = vmatprep.subr.mxu0 0.0
        %1995 = vmatpush1.msra.mxu0 0.0
        %1996 = vmatprep.subr.mxu0 0.0
        %1997 = vmatpush1.msra.mxu0 0.0
        %1998 = vmatprep.subr.mxu0 0.0
        %1999 = vmatpush1.msra.mxu0 0.0
        %2000 = vmatprep.mubr.f32.mxu0 0.0
        %2001 = vmatmul.mubr.f32.gmra.mrb[0].mxu0 %v1864
        %v2002 = vpop.f32.mrb[0].mxu0
        %v2003 = vadd.f32 0.0, %v2002
        %v2004 = vpop.f32.mrb[0].mxu0
        %2005 = vdwg.mxu0
        %v2006 = vld [vmem:[%s13] sm:$0xff]
        %v2007 = vld [vmem:[%s14] sm:$0xff]
        %v2009 = vsel %vm1100, %v2007, 0
        %v2012 = vsel %vm1104, %v2003, 0
        %2014 = vmatprep.subr.mxu0 0.0
        %2015 = vmatpush1.msra.mxu0 %v2012
        %2016 = vmatprep.subr.mxu0 0.0
        %2017 = vmatpush1.msra.mxu0 0.0
        %2018 = vmatprep.subr.mxu0 0.0
        %2019 = vmatpush1.msra.mxu0 0.0
        %2020 = vmatprep.subr.mxu0 0.0
        %2021 = vmatpush1.msra.mxu0 0.0
        %2022 = vmatprep.subr.mxu0 0.0
        %2023 = vmatpush1.msra.mxu0 0.0
        %2024 = vmatprep.subr.mxu0 0.0
        %2025 = vmatpush1.msra.mxu0 0.0
        %2026 = vmatprep.subr.mxu0 0.0
        %2027 = vmatpush1.msra.mxu0 0.0
        %2028 = vmatprep.subr.mxu0 0.0
        %2029 = vmatpush1.msra.mxu0 0.0
        %2030 = vmatprep.subr.mxu0 0.0
        %2031 = vmatpush1.msra.mxu0 0.0
        %2032 = vmatprep.subr.mxu0 0.0
        %2033 = vmatpush1.msra.mxu0 0.0
        %2034 = vmatprep.subr.mxu0 0.0
        %2035 = vmatpush1.msra.mxu0 0.0
        %2036 = vmatprep.subr.mxu0 0.0
        %2037 = vmatpush1.msra.mxu0 0.0
        %2038 = vmatprep.subr.mxu0 0.0
        %2039 = vmatpush1.msra.mxu0 0.0
        %2040 = vmatprep.subr.mxu0 0.0
        %2041 = vmatpush1.msra.mxu0 0.0
        %2042 = vmatprep.subr.mxu0 0.0
        %2043 = vmatpush1.msra.mxu0 0.0
        %2044 = vmatprep.subr.mxu0 0.0
        %2045 = vmatpush1.msra.mxu0 0.0
        %2046 = vmatprep.subr.mxu0 0.0
        %2047 = vmatpush1.msra.mxu0 0.0
        %2048 = vmatprep.subr.mxu0 0.0
        %2049 = vmatpush1.msra.mxu0 0.0
        %2050 = vmatprep.subr.mxu0 0.0
        %2051 = vmatpush1.msra.mxu0 0.0
        %2052 = vmatprep.subr.mxu0 0.0
        %2053 = vmatpush1.msra.mxu0 0.0
        %2054 = vmatprep.subr.mxu0 0.0
        %2055 = vmatpush1.msra.mxu0 0.0
        %2056 = vmatprep.subr.mxu0 0.0
        %2057 = vmatpush1.msra.mxu0 0.0
        %2058 = vmatprep.subr.mxu0 0.0
        %2059 = vmatpush1.msra.mxu0 0.0
        %2060 = vmatprep.subr.mxu0 0.0
        %2061 = vmatpush1.msra.mxu0 0.0
        %2062 = vmatprep.subr.mxu0 0.0
        %2063 = vmatpush1.msra.mxu0 0.0
        %2064 = vmatprep.subr.mxu0 0.0
        %2065 = vmatpush1.msra.mxu0 0.0
        %2066 = vmatprep.subr.mxu0 0.0
        %2067 = vmatpush1.msra.mxu0 0.0
        %2068 = vmatprep.subr.mxu0 0.0
        %2069 = vmatpush1.msra.mxu0 0.0
        %2070 = vmatprep.subr.mxu0 0.0
        %2071 = vmatpush1.msra.mxu0 0.0
        %2072 = vmatprep.subr.mxu0 0.0
        %2073 = vmatpush1.msra.mxu0 0.0
        %2074 = vmatprep.subr.mxu0 0.0
        %2075 = vmatpush1.msra.mxu0 0.0
        %2076 = vmatprep.subr.mxu0 0.0
        %2077 = vmatpush1.msra.mxu0 0.0
        %2078 = vmatprep.mubr.f32.mxu0 0.0
        %2079 = vmatmul.mubr.f32.gmra.mrb[0].mxu0 %v2009
        %v2080 = vpop.f32.mrb[0].mxu0
        %v2081 = vadd.f32 0.0, %v2080
        %v2082 = vpop.f32.mrb[0].mxu0
        %2083 = vdwg.mxu0
        %v2085 = vsel %vm1100, %v2006, 0
        %v2088 = vsel %vm1104, %v1933, 0
        %2090 = vmatprep.subr.mxu0 0.0
        %2091 = vmatpush1.msra.mxu0 %v2088
        %2092 = vmatprep.subr.mxu0 0.0
        %2093 = vmatpush1.msra.mxu0 0.0
        %2094 = vmatprep.subr.mxu0 0.0
        %2095 = vmatpush1.msra.mxu0 0.0
        %2096 = vmatprep.subr.mxu0 0.0
        %2097 = vmatpush1.msra.mxu0 0.0
        %2098 = vmatprep.subr.mxu0 0.0
        %2099 = vmatpush1.msra.mxu0 0.0
        %2100 = vmatprep.subr.mxu0 0.0
        %2101 = vmatpush1.msra.mxu0 0.0
        %2102 = vmatprep.subr.mxu0 0.0
        %2103 = vmatpush1.msra.mxu0 0.0
        %2104 = vmatprep.subr.mxu0 0.0
        %2105 = vmatpush1.msra.mxu0 0.0
        %2106 = vmatprep.subr.mxu0 0.0
        %2107 = vmatpush1.msra.mxu0 0.0
        %2108 = vmatprep.subr.mxu0 0.0
        %2109 = vmatpush1.msra.mxu0 0.0
        %2110 = vmatprep.subr.mxu0 0.0
        %2111 = vmatpush1.msra.mxu0 0.0
        %2112 = vmatprep.subr.mxu0 0.0
        %2113 = vmatpush1.msra.mxu0 0.0
        %2114 = vmatprep.subr.mxu0 0.0
        %2115 = vmatpush1.msra.mxu0 0.0
        %2116 = vmatprep.subr.mxu0 0.0
        %2117 = vmatpush1.msra.mxu0 0.0
        %2118 = vmatprep.subr.mxu0 0.0
        %2119 = vmatpush1.msra.mxu0 0.0
        %2120 = vmatprep.subr.mxu0 0.0
        %2121 = vmatpush1.msra.mxu0 0.0
        %2122 = vmatprep.subr.mxu0 0.0
        %2123 = vmatpush1.msra.mxu0 0.0
        %2124 = vmatprep.subr.mxu0 0.0
        %2125 = vmatpush1.msra.mxu0 0.0
        %2126 = vmatprep.subr.mxu0 0.0
        %2127 = vmatpush1.msra.mxu0 0.0
        %2128 = vmatprep.subr.mxu0 0.0
        %2129 = vmatpush1.msra.mxu0 0.0
        %2130 = vmatprep.subr.mxu0 0.0
        %2131 = vmatpush1.msra.mxu0 0.0
        %2132 = vmatprep.subr.mxu0 0.0
        %2133 = vmatpush1.msra.mxu0 0.0
        %2134 = vmatprep.subr.mxu0 0.0
        %2135 = vmatpush1.msra.mxu0 0.0
        %2136 = vmatprep.subr.mxu0 0.0
        %2137 = vmatpush1.msra.mxu0 0.0
        %2138 = vmatprep.subr.mxu0 0.0
        %2139 = vmatpush1.msra.mxu0 0.0
        %2140 = vmatprep.subr.mxu0 0.0
        %2141 = vmatpush1.msra.mxu0 0.0
        %2142 = vmatprep.subr.mxu0 0.0
        %2143 = vmatpush1.msra.mxu0 0.0
        %2144 = vmatprep.subr.mxu0 0.0
        %2145 = vmatpush1.msra.mxu0 0.0
        %2146 = vmatprep.subr.mxu0 0.0
        %2147 = vmatpush1.msra.mxu0 0.0
        %2148 = vmatprep.subr.mxu0 0.0
        %2149 = vmatpush1.msra.mxu0 0.0
        %2150 = vmatprep.subr.mxu0 0.0
        %2151 = vmatpush1.msra.mxu0 0.0
        %2152 = vmatprep.subr.mxu0 0.0
        %2153 = vmatpush1.msra.mxu0 0.0
        %2154 = vmatprep.mubr.f32.mxu0 0.0
        %2155 = vmatmul.mubr.f32.gmra.mrb[0].mxu0 %v2085
        %v2156 = vpop.f32.mrb[0].mxu0
        %v2157 = vadd.f32 %v2081, %v2156
        %v2158 = vpop.f32.mrb[0].mxu0
        %2159 = vdwg.mxu0
        %v2160 = vld [vmem:[%s15] sm:$0xff]
        %2162 = vset.pattern.permute.xlu0 0
        %2163 = vperm.xlu0 %2162, %v2160
        %v2164 = vpop.permute.xlu0 %2163
        %v2166 = vadd.f32 %v2157, %v2164
        %v2167 = vmax.f32 %v2166, 0.0
        %v2169 = vrot.slane %v2167, 4
        %v2170 = vsel %vm1862, %v2169, 0
        %2172 = vmatprep.subr.mxu0 0.0
        %2173 = vmatpush1.msra.mxu0 %v1854
        %2174 = vmatprep.subr.mxu0 0.0
        %2175 = vmatpush1.msra.mxu0 %v1855
        %2176 = vmatprep.subr.mxu0 0.0
        %2177 = vmatpush1.msra.mxu0 %v1856
        %2178 = vmatprep.subr.mxu0 0.0
        %2179 = vmatpush1.msra.mxu0 %v1857
        %2180 = vmatprep.subr.mxu0 0.0
        %2181 = vmatpush1.msra.mxu0 %v1858
        %2182 = vmatprep.subr.mxu0 0.0
        %2183 = vmatpush1.msra.mxu0 %v1859
        %2184 = vmatprep.subr.mxu0 0.0
        %2185 = vmatpush1.msra.mxu0 %v1860
        %2186 = vmatprep.subr.mxu0 0.0
        %2187 = vmatpush1.msra.mxu0 %v1861
        %2188 = vmatprep.subr.mxu0 0.0
        %2189 = vmatpush1.msra.mxu0 0.0
        %2190 = vmatprep.subr.mxu0 0.0
        %2191 = vmatpush1.msra.mxu0 0.0
        %2192 = vmatprep.subr.mxu0 0.0
        %2193 = vmatpush1.msra.mxu0 0.0
        %2194 = vmatprep.subr.mxu0 0.0
        %2195 = vmatpush1.msra.mxu0 0.0
        %2196 = vmatprep.subr.mxu0 0.0
        %2197 = vmatpush1.msra.mxu0 0.0
        %2198 = vmatprep.subr.mxu0 0.0
        %2199 = vmatpush1.msra.mxu0 0.0
        %2200 = vmatprep.subr.mxu0 0.0
        %2201 = vmatpush1.msra.mxu0 0.0
        %2202 = vmatprep.subr.mxu0 0.0
        %2203 = vmatpush1.msra.mxu0 0.0
        %2204 = vmatprep.subr.mxu0 0.0
        %2205 = vmatpush1.msra.mxu0 0.0
        %2206 = vmatprep.subr.mxu0 0.0
        %2207 = vmatpush1.msra.mxu0 0.0
        %2208 = vmatprep.subr.mxu0 0.0
        %2209 = vmatpush1.msra.mxu0 0.0
        %2210 = vmatprep.subr.mxu0 0.0
        %2211 = vmatpush1.msra.mxu0 0.0
        %2212 = vmatprep.subr.mxu0 0.0
        %2213 = vmatpush1.msra.mxu0 0.0
        %2214 = vmatprep.subr.mxu0 0.0
        %2215 = vmatpush1.msra.mxu0 0.0
        %2216 = vmatprep.subr.mxu0 0.0
        %2217 = vmatpush1.msra.mxu0 0.0
        %2218 = vmatprep.subr.mxu0 0.0
        %2219 = vmatpush1.msra.mxu0 0.0
        %2220 = vmatprep.subr.mxu0 0.0
        %2221 = vmatpush1.msra.mxu0 0.0
        %2222 = vmatprep.subr.mxu0 0.0
        %2223 = vmatpush1.msra.mxu0 0.0
        %2224 = vmatprep.subr.mxu0 0.0
        %2225 = vmatpush1.msra.mxu0 0.0
        %2226 = vmatprep.subr.mxu0 0.0
        %2227 = vmatpush1.msra.mxu0 0.0
        %2228 = vmatprep.subr.mxu0 0.0
        %2229 = vmatpush1.msra.mxu0 0.0
        %2230 = vmatprep.subr.mxu0 0.0
        %2231 = vmatpush1.msra.mxu0 0.0
        %2232 = vmatprep.subr.mxu0 0.0
        %2233 = vmatpush1.msra.mxu0 0.0
        %2234 = vmatprep.subr.mxu0 0.0
        %2235 = vmatpush1.msra.mxu0 0.0
        %2236 = vmatprep.mubr.f32.mxu0 0.0
        %2237 = vmatmul.mubr.f32.gmra.mrb[0].mxu0 %v2170
        %v2238 = vpop.f32.mrb[0].mxu0
        %v2239 = vadd.f32 0.0, %v2238
        %v2240 = vpop.f32.mrb[0].mxu0
        %2241 = vdwg.mxu0
        %v2242 = vsel %vm1862, %v2167, 0
        %2244 = vmatprep.subr.mxu0 0.0
        %2245 = vmatpush1.msra.mxu0 %v1846
        %2246 = vmatprep.subr.mxu0 0.0
        %2247 = vmatpush1.msra.mxu0 %v1847
        %2248 = vmatprep.subr.mxu0 0.0
        %2249 = vmatpush1.msra.mxu0 %v1848
        %2250 = vmatprep.subr.mxu0 0.0
        %2251 = vmatpush1.msra.mxu0 %v1849
        %2252 = vmatprep.subr.mxu0 0.0
        %2253 = vmatpush1.msra.mxu0 %v1850
        %2254 = vmatprep.subr.mxu0 0.0
        %2255 = vmatpush1.msra.mxu0 %v1851
        %2256 = vmatprep.subr.mxu0 0.0
        %2257 = vmatpush1.msra.mxu0 %v1852
        %2258 = vmatprep.subr.mxu0 0.0
        %2259 = vmatpush1.msra.mxu0 %v1853
        %2260 = vmatprep.subr.mxu0 0.0
        %2261 = vmatpush1.msra.mxu0 0.0
        %2262 = vmatprep.subr.mxu0 0.0
        %2263 = vmatpush1.msra.mxu0 0.0
        %2264 = vmatprep.subr.mxu0 0.0
        %2265 = vmatpush1.msra.mxu0 0.0
        %2266 = vmatprep.subr.mxu0 0.0
        %2267 = vmatpush1.msra.mxu0 0.0
        %2268 = vmatprep.subr.mxu0 0.0
        %2269 = vmatpush1.msra.mxu0 0.0
        %2270 = vmatprep.subr.mxu0 0.0
        %2271 = vmatpush1.msra.mxu0 0.0
        %2272 = vmatprep.subr.mxu0 0.0
        %2273 = vmatpush1.msra.mxu0 0.0
        %2274 = vmatprep.subr.mxu0 0.0
        %2275 = vmatpush1.msra.mxu0 0.0
        %2276 = vmatprep.subr.mxu0 0.0
        %2277 = vmatpush1.msra.mxu0 0.0
        %2278 = vmatprep.subr.mxu0 0.0
        %2279 = vmatpush1.msra.mxu0 0.0
        %2280 = vmatprep.subr.mxu0 0.0
        %2281 = vmatpush1.msra.mxu0 0.0
        %2282 = vmatprep.subr.mxu0 0.0
        %2283 = vmatpush1.msra.mxu0 0.0
        %2284 = vmatprep.subr.mxu0 0.0
        %2285 = vmatpush1.msra.mxu0 0.0
        %2286 = vmatprep.subr.mxu0 0.0
        %2287 = vmatpush1.msra.mxu0 0.0
        %2288 = vmatprep.subr.mxu0 0.0
        %2289 = vmatpush1.msra.mxu0 0.0
        %2290 = vmatprep.subr.mxu0 0.0
        %2291 = vmatpush1.msra.mxu0 0.0
        %2292 = vmatprep.subr.mxu0 0.0
        %2293 = vmatpush1.msra.mxu0 0.0
        %2294 = vmatprep.subr.mxu0 0.0
        %2295 = vmatpush1.msra.mxu0 0.0
        %2296 = vmatprep.subr.mxu0 0.0
        %2297 = vmatpush1.msra.mxu0 0.0
        %2298 = vmatprep.subr.mxu0 0.0
        %2299 = vmatpush1.msra.mxu0 0.0
        %2300 = vmatprep.subr.mxu0 0.0
        %2301 = vmatpush1.msra.mxu0 0.0
        %2302 = vmatprep.subr.mxu0 0.0
        %2303 = vmatpush1.msra.mxu0 0.0
        %2304 = vmatprep.subr.mxu0 0.0
        %2305 = vmatpush1.msra.mxu0 0.0
        %2306 = vmatprep.subr.mxu0 0.0
        %2307 = vmatpush1.msra.mxu0 0.0
        %2308 = vmatprep.mubr.f32.mxu0 0.0
        %2309 = vmatmul.mubr.f32.gmra.mrb[0].mxu0 %v2242
        %v2310 = vpop.f32.mrb[0].mxu0
        %v2311 = vadd.f32 %v2239, %v2310
        %v2312 = vpop.f32.mrb[0].mxu0
        %2313 = vdwg.mxu0
        %v2314 = vld [vmem:[%s16] sm:$0xff]
        %v2315 = vld [vmem:[%s16 + $0x8] sm:$0xff]
        %v2316 = vld [vmem:[%s16 + $0x10] sm:$0xff]
        %v2317 = vld [vmem:[%s16 + $0x18] sm:$0xff]
        %v2318 = vld [vmem:[%s16 + $0x20] sm:$0xff]
        %v2319 = vld [vmem:[%s16 + $0x28] sm:$0xff]
        %v2320 = vld [vmem:[%s16 + $0x30] sm:$0xff]
        %v2321 = vld [vmem:[%s16 + $0x38] sm:$0xff]
        %v2322 = vld [vmem:[%s16 + $0x40] sm:$0xff]
        %v2323 = vld [vmem:[%s16 + $0x48] sm:$0xff]
        %v2324 = vld [vmem:[%s16 + $0x50] sm:$0xff]
        %v2325 = vld [vmem:[%s16 + $0x58] sm:$0xff]
        %v2326 = vld [vmem:[%s16 + $0x60] sm:$0xff]
        %v2327 = vld [vmem:[%s16 + $0x68] sm:$0xff]
        %v2328 = vld [vmem:[%s16 + $0x70] sm:$0xff]
        %v2329 = vld [vmem:[%s16 + $0x78] sm:$0xff]
        %v2331 = vsel %vm1862, %v2311, 0
        %2333 = vmatprep.subr.mxu0 %v2315
        %2334 = vmatpush1.msra.mxu0 %v2314
        %2335 = vmatprep.subr.mxu0 %v2317
        %2336 = vmatpush1.msra.mxu0 %v2316
        %2337 = vmatprep.subr.mxu0 %v2319
        %2338 = vmatpush1.msra.mxu0 %v2318
        %2339 = vmatprep.subr.mxu0 %v2321
        %2340 = vmatpush1.msra.mxu0 %v2320
        %2341 = vmatprep.subr.mxu0 %v2323
        %2342 = vmatpush1.msra.mxu0 %v2322
        %2343 = vmatprep.subr.mxu0 %v2325
        %2344 = vmatpush1.msra.mxu0 %v2324
        %2345 = vmatprep.subr.mxu0 %v2327
        %2346 = vmatpush1.msra.mxu0 %v2326
        %2347 = vmatprep.subr.mxu0 %v2329
        %2348 = vmatpush1.msra.mxu0 %v2328
        %2349 = vmatprep.subr.mxu0 0.0
        %2350 = vmatpush1.msra.mxu0 0.0
        %2351 = vmatprep.subr.mxu0 0.0
        %2352 = vmatpush1.msra.mxu0 0.0
        %2353 = vmatprep.subr.mxu0 0.0
        %2354 = vmatpush1.msra.mxu0 0.0
        %2355 = vmatprep.subr.mxu0 0.0
        %2356 = vmatpush1.msra.mxu0 0.0
        %2357 = vmatprep.subr.mxu0 0.0
        %2358 = vmatpush1.msra.mxu0 0.0
        %2359 = vmatprep.subr.mxu0 0.0
        %2360 = vmatpush1.msra.mxu0 0.0
        %2361 = vmatprep.subr.mxu0 0.0
        %2362 = vmatpush1.msra.mxu0 0.0
        %2363 = vmatprep.subr.mxu0 0.0
        %2364 = vmatpush1.msra.mxu0 0.0
        %2365 = vmatprep.subr.mxu0 0.0
        %2366 = vmatpush1.msra.mxu0 0.0
        %2367 = vmatprep.subr.mxu0 0.0
        %2368 = vmatpush1.msra.mxu0 0.0
        %2369 = vmatprep.subr.mxu0 0.0
        %2370 = vmatpush1.msra.mxu0 0.0
        %2371 = vmatprep.subr.mxu0 0.0
        %2372 = vmatpush1.msra.mxu0 0.0
        %2373 = vmatprep.subr.mxu0 0.0
        %2374 = vmatpush1.msra.mxu0 0.0
        %2375 = vmatprep.subr.mxu0 0.0
        %2376 = vmatpush1.msra.mxu0 0.0
        %2377 = vmatprep.subr.mxu0 0.0
        %2378 = vmatpush1.msra.mxu0 0.0
        %2379 = vmatprep.subr.mxu0 0.0
        %2380 = vmatpush1.msra.mxu0 0.0
        %2381 = vmatprep.subr.mxu0 0.0
        %2382 = vmatpush1.msra.mxu0 0.0
        %2383 = vmatprep.subr.mxu0 0.0
        %2384 = vmatpush1.msra.mxu0 0.0
        %2385 = vmatprep.subr.mxu0 0.0
        %2386 = vmatpush1.msra.mxu0 0.0
        %2387 = vmatprep.subr.mxu0 0.0
        %2388 = vmatpush1.msra.mxu0 0.0
        %2389 = vmatprep.subr.mxu0 0.0
        %2390 = vmatpush1.msra.mxu0 0.0
        %2391 = vmatprep.subr.mxu0 0.0
        %2392 = vmatpush1.msra.mxu0 0.0
        %2393 = vmatprep.subr.mxu0 0.0
        %2394 = vmatpush1.msra.mxu0 0.0
        %2395 = vmatprep.subr.mxu0 0.0
        %2396 = vmatpush1.msra.mxu0 0.0
        %2397 = vmatprep.mubr.f32.mxu0 0.0
        %2398 = vmatmul.mubr.f32.gmra.mrb[0].mxu0 %v2331
        %v2399 = vpop.f32.mrb[0].mxu0
        %v2400 = vadd.f32 0.0, %v2399
        %v2401 = vpop.f32.mrb[0].mxu0
        %v2402 = vadd.f32 0.0, %v2401
        %2403 = vdwg.mxu0
        %v2404 = vadd.f32 %v826, %v1416
        %v2405 = vadd.f32 %v827, %v1418
        %v2406 = vadd.f32 %v2404, %v2400
        %v2407 = vadd.f32 %v2405, %v2402
        %v2408 = vld [vmem:[%s17] sm:$0xff]
        %v2409 = vld [vmem:[%s2] sm:$0xff]
        %v2411 = vsel %vm751, %v2409, 0
        %2413 = vmatprep.subr.mxu0 %v663
        %2414 = vmatpush1.msra.mxu0 %v662
        %2415 = vmatprep.subr.mxu0 0.0
        %2416 = vmatpush1.msra.mxu0 0.0
        %2417 = vmatprep.subr.mxu0 0.0
        %2418 = vmatpush1.msra.mxu0 0.0
        %2419 = vmatprep.subr.mxu0 0.0
        %2420 = vmatpush1.msra.mxu0 0.0
        %2421 = vmatprep.subr.mxu0 0.0
        %2422 = vmatpush1.msra.mxu0 0.0
        %2423 = vmatprep.subr.mxu0 0.0
        %2424 = vmatpush1.msra.mxu0 0.0
        %2425 = vmatprep.subr.mxu0 0.0
        %2426 = vmatpush1.msra.mxu0 0.0
        %2427 = vmatprep.subr.mxu0 0.0
        %2428 = vmatpush1.msra.mxu0 0.0
        %2429 = vmatprep.subr.mxu0 0.0
        %2430 = vmatpush1.msra.mxu0 0.0
        %2431 = vmatprep.subr.mxu0 0.0
        %2432 = vmatpush1.msra.mxu0 0.0
        %2433 = vmatprep.subr.mxu0 0.0
        %2434 = vmatpush1.msra.mxu0 0.0
        %2435 = vmatprep.subr.mxu0 0.0
        %2436 = vmatpush1.msra.mxu0 0.0
        %2437 = vmatprep.subr.mxu0 0.0
        %2438 = vmatpush1.msra.mxu0 0.0
        %2439 = vmatprep.subr.mxu0 0.0
        %2440 = vmatpush1.msra.mxu0 0.0
        %2441 = vmatprep.subr.mxu0 0.0
        %2442 = vmatpush1.msra.mxu0 0.0
        %2443 = vmatprep.subr.mxu0 0.0
        %2444 = vmatpush1.msra.mxu0 0.0
        %2445 = vmatprep.subr.mxu0 0.0
        %2446 = vmatpush1.msra.mxu0 0.0
        %2447 = vmatprep.subr.mxu0 0.0
        %2448 = vmatpush1.msra.mxu0 0.0
        %2449 = vmatprep.subr.mxu0 0.0
        %2450 = vmatpush1.msra.mxu0 0.0
        %2451 = vmatprep.subr.mxu0 0.0
        %2452 = vmatpush1.msra.mxu0 0.0
        %2453 = vmatprep.subr.mxu0 0.0
        %2454 = vmatpush1.msra.mxu0 0.0
        %2455 = vmatprep.subr.mxu0 0.0
        %2456 = vmatpush1.msra.mxu0 0.0
        %2457 = vmatprep.subr.mxu0 0.0
        %2458 = vmatpush1.msra.mxu0 0.0
        %2459 = vmatprep.subr.mxu0 0.0
        %2460 = vmatpush1.msra.mxu0 0.0
        %2461 = vmatprep.subr.mxu0 0.0
        %2462 = vmatpush1.msra.mxu0 0.0
        %2463 = vmatprep.subr.mxu0 0.0
        %2464 = vmatpush1.msra.mxu0 0.0
        %2465 = vmatprep.subr.mxu0 0.0
        %2466 = vmatpush1.msra.mxu0 0.0
        %2467 = vmatprep.subr.mxu0 0.0
        %2468 = vmatpush1.msra.mxu0 0.0
        %2469 = vmatprep.subr.mxu0 0.0
        %2470 = vmatpush1.msra.mxu0 0.0
        %2471 = vmatprep.subr.mxu0 0.0
        %2472 = vmatpush1.msra.mxu0 0.0
        %2473 = vmatprep.subr.mxu0 0.0
        %2474 = vmatpush1.msra.mxu0 0.0
        %2475 = vmatprep.subr.mxu0 0.0
        %2476 = vmatpush1.msra.mxu0 0.0
        %2477 = vmatprep.mubr.f32.mxu0 0.0
        %2478 = vmatmul.mubr.f32.gmra.mrb[0].mxu0 %v2411
        %v2479 = vpop.f32.mrb[0].mxu0
        %v2480 = vadd.f32 0.0, %v2479
        %v2481 = vpop.f32.mrb[0].mxu0
        %v2482 = vadd.f32 0.0, %v2481
        %2483 = vdwg.mxu0
        %v2485 = vsel %vm1100, %v2408, 0
        %v2488 = vsel %vm1104, %v2406, 0
        %v2491 = vsel %vm1104, %v2407, 0
        %2493 = vmatprep.subr.mxu0 %v2491
        %2494 = vmatpush1.msra.mxu0 %v2488
        %2495 = vmatprep.subr.mxu0 0.0
        %2496 = vmatpush1.msra.mxu0 0.0
        %2497 = vmatprep.subr.mxu0 0.0
        %2498 = vmatpush1.msra.mxu0 0.0
        %2499 = vmatprep.subr.mxu0 0.0
        %2500 = vmatpush1.msra.mxu0 0.0
        %2501 = vmatprep.subr.mxu0 0.0
        %2502 = vmatpush1.msra.mxu0 0.0
        %2503 = vmatprep.subr.mxu0 0.0
        %2504 = vmatpush1.msra.mxu0 0.0
        %2505 = vmatprep.subr.mxu0 0.0
        %2506 = vmatpush1.msra.mxu0 0.0
        %2507 = vmatprep.subr.mxu0 0.0
        %2508 = vmatpush1.msra.mxu0 0.0
        %2509 = vmatprep.subr.mxu0 0.0
        %2510 = vmatpush1.msra.mxu0 0.0
        %2511 = vmatprep.subr.mxu0 0.0
        %2512 = vmatpush1.msra.mxu0 0.0
        %2513 = vmatprep.subr.mxu0 0.0
        %2514 = vmatpush1.msra.mxu0 0.0
        %2515 = vmatprep.subr.mxu0 0.0
        %2516 = vmatpush1.msra.mxu0 0.0
        %2517 = vmatprep.subr.mxu0 0.0
        %2518 = vmatpush1.msra.mxu0 0.0
        %2519 = vmatprep.subr.mxu0 0.0
        %2520 = vmatpush1.msra.mxu0 0.0
        %2521 = vmatprep.subr.mxu0 0.0
        %2522 = vmatpush1.msra.mxu0 0.0
        %2523 = vmatprep.subr.mxu0 0.0
        %2524 = vmatpush1.msra.mxu0 0.0
        %2525 = vmatprep.subr.mxu0 0.0
        %2526 = vmatpush1.msra.mxu0 0.0
        %2527 = vmatprep.subr.mxu0 0.0
        %2528 = vmatpush1.msra.mxu0 0.0
        %2529 = vmatprep.subr.mxu0 0.0
        %2530 = vmatpush1.msra.mxu0 0.0
        %2531 = vmatprep.subr.mxu0 0.0
        %2532 = vmatpush1.msra.mxu0 0.0
        %2533 = vmatprep.subr.mxu0 0.0
        %2534 = vmatpush1.msra.mxu0 0.0
        %2535 = vmatprep.subr.mxu0 0.0
        %2536 = vmatpush1.msra.mxu0 0.0
        %2537 = vmatprep.subr.mxu0 0.0
        %2538 = vmatpush1.msra.mxu0 0.0
        %2539 = vmatprep.subr.mxu0 0.0
        %2540 = vmatpush1.msra.mxu0 0.0
        %2541 = vmatprep.subr.mxu0 0.0
        %2542 = vmatpush1.msra.mxu0 0.0
        %2543 = vmatprep.subr.mxu0 0.0
        %2544 = vmatpush1.msra.mxu0 0.0
        %2545 = vmatprep.subr.mxu0 0.0
        %2546 = vmatpush1.msra.mxu0 0.0
        %2547 = vmatprep.subr.mxu0 0.0
        %2548 = vmatpush1.msra.mxu0 0.0
        %2549 = vmatprep.subr.mxu0 0.0
        %2550 = vmatpush1.msra.mxu0 0.0
        %2551 = vmatprep.subr.mxu0 0.0
        %2552 = vmatpush1.msra.mxu0 0.0
        %2553 = vmatprep.subr.mxu0 0.0
        %2554 = vmatpush1.msra.mxu0 0.0
        %2555 = vmatprep.subr.mxu0 0.0
        %2556 = vmatpush1.msra.mxu0 0.0
        %2557 = vmatprep.mubr.f32.mxu0 0.0
        %2558 = vmatmul.mubr.f32.gmra.mrb[0].mxu0 %v2485
        %v2559 = vpop.f32.mrb[0].mxu0
        %v2560 = vadd.f32 %v2480, %v2559
        %v2561 = vpop.f32.mrb[0].mxu0
        %v2562 = vadd.f32 %v2482, %v2561
        %2563 = vdwg.mxu0
        %v2564 = vmax.f32 %v2560, 0.0
        %v2565 = vmax.f32 %v2562, 0.0
        %v2566 = vld [vmem:[%s18] sm:$0xff]
        %v2567 = vld [vmem:[%s18 + $0x8] sm:$0xff]
        %v2569 = vsel %vm667, %v2566, 0
        %v2572 = vsel %vm667, %v2567, 0
        %2574 = vmatprep.subr.mxu0 %v743
        %2575 = vmatpush1.msra.mxu0 %v742
        %2576 = vmatprep.subr.mxu0 %v2565
        %2577 = vmatpush1.msra.mxu0 %v2564
        %2578 = vmatprep.subr.mxu0 0.0
        %2579 = vmatpush1.msra.mxu0 0.0
        %2580 = vmatprep.subr.mxu0 0.0
        %2581 = vmatpush1.msra.mxu0 0.0
        %2582 = vmatprep.subr.mxu0 0.0
        %2583 = vmatpush1.msra.mxu0 0.0
        %2584 = vmatprep.subr.mxu0 0.0
        %2585 = vmatpush1.msra.mxu0 0.0
        %2586 = vmatprep.subr.mxu0 0.0
        %2587 = vmatpush1.msra.mxu0 0.0
        %2588 = vmatprep.subr.mxu0 0.0
        %2589 = vmatpush1.msra.mxu0 0.0
        %2590 = vmatprep.subr.mxu0 0.0
        %2591 = vmatpush1.msra.mxu0 0.0
        %2592 = vmatprep.subr.mxu0 0.0
        %2593 = vmatpush1.msra.mxu0 0.0
        %2594 = vmatprep.subr.mxu0 0.0
        %2595 = vmatpush1.msra.mxu0 0.0
        %2596 = vmatprep.subr.mxu0 0.0
        %2597 = vmatpush1.msra.mxu0 0.0
        %2598 = vmatprep.subr.mxu0 0.0
        %2599 = vmatpush1.msra.mxu0 0.0
        %2600 = vmatprep.subr.mxu0 0.0
        %2601 = vmatpush1.msra.mxu0 0.0
        %2602 = vmatprep.subr.mxu0 0.0
        %2603 = vmatpush1.msra.mxu0 0.0
        %2604 = vmatprep.subr.mxu0 0.0
        %2605 = vmatpush1.msra.mxu0 0.0
        %2606 = vmatprep.subr.mxu0 0.0
        %2607 = vmatpush1.msra.mxu0 0.0
        %2608 = vmatprep.subr.mxu0 0.0
        %2609 = vmatpush1.msra.mxu0 0.0
        %2610 = vmatprep.subr.mxu0 0.0
        %2611 = vmatpush1.msra.mxu0 0.0
        %2612 = vmatprep.subr.mxu0 0.0
        %2613 = vmatpush1.msra.mxu0 0.0
        %2614 = vmatprep.subr.mxu0 0.0
        %2615 = vmatpush1.msra.mxu0 0.0
        %2616 = vmatprep.subr.mxu0 0.0
        %2617 = vmatpush1.msra.mxu0 0.0
        %2618 = vmatprep.subr.mxu0 0.0
        %2619 = vmatpush1.msra.mxu0 0.0
        %2620 = vmatprep.subr.mxu0 0.0
        %2621 = vmatpush1.msra.mxu0 0.0
        %2622 = vmatprep.subr.mxu0 0.0
        %2623 = vmatpush1.msra.mxu0 0.0
        %2624 = vmatprep.subr.mxu0 0.0
        %2625 = vmatpush1.msra.mxu0 0.0
        %2626 = vmatprep.subr.mxu0 0.0
        %2627 = vmatpush1.msra.mxu0 0.0
        %2628 = vmatprep.subr.mxu0 0.0
        %2629 = vmatpush1.msra.mxu0 0.0
        %2630 = vmatprep.subr.mxu0 0.0
        %2631 = vmatpush1.msra.mxu0 0.0
        %2632 = vmatprep.subr.mxu0 0.0
        %2633 = vmatpush1.msra.mxu0 0.0
        %2634 = vmatprep.subr.mxu0 0.0
        %2635 = vmatpush1.msra.mxu0 0.0
        %2636 = vmatprep.subr.mxu0 0.0
        %2637 = vmatpush1.msra.mxu0 0.0
        %2638 = vmatprep.mubr.f32.mxu0 0.0
        %2639 = vmatmul.mubr.f32.gmra.mrb[0].mxu0 %v2569
        %v2640 = vpop.f32.mrb[0].mxu0
        %v2641 = vadd.f32 0.0, %v2640
        %v2642 = vpop.f32.mrb[0].mxu0
        %v2643 = vadd.f32 0.0, %v2642
        %2644 = vmatprep.mubr.f32.mxu0 0.0
        %2645 = vmatmul.mubr.f32.gmra.mrb[0].mxu0 %v2572
        %v2646 = vpop.f32.mrb[0].mxu0
        %v2647 = vadd.f32 0.0, %v2646
        %v2648 = vpop.f32.mrb[0].mxu0
        %v2649 = vadd.f32 0.0, %v2648
        %2650 = vdwg.mxu0
        %v2651 = vadd.f32 %v2641, %v2643
        %2652 = vadd.xlane.f32.xlu0 %v2651
        %v2653 = vpop.xlane.xlu0 %2652
        %v2654 = vadd.f32 %v2647, %v2649
        %2655 = vadd.xlane.f32.xlu0 %v2654
        %v2656 = vpop.xlane.xlu0 %2655
        %v2657 = vrcp.pop 256.0
        %v2658 = vmul.f32 %v2653, %v2657
        %v2659 = vmul.f32 %v2656, %v2657
        %v2660 = vld [vmem:[#allocation2] sm:$0x1]
        %v2662 = vlaneseq
        %v2663 = vshrl.u32 %v2662, 7
        %v2664 = vsub.s32 0, %v2663
        %v2665 = vrot.slane %v2660, %v2664
        %v2667 = vadd.f32 %v2658, %v2665
        %v2668 = vadd.f32 %v2659, %v2665
        %v2669 = vxor.u32 %v2667, 2147483648
        %v2670 = vxor.u32 %v2668, 2147483648
        %v2671 = vmul.f32 %v2669, 1.442695
        %v2672 = vpow.pop %v2671
        %v2673 = vmul.f32 %v2670, 1.442695
        %v2674 = vpow.pop %v2673
        %v2675 = vadd.f32 %v2672, 1.0
        %v2676 = vadd.f32 %v2674, 1.0
        %v2677 = vrcp.pop %v2675
        %v2678 = vmul.f32 1.0, %v2677
        %v2679 = vrcp.pop %v2676
        %v2680 = vmul.f32 1.0, %v2679
        %2682 = vset.pattern.permute.xlu0 0
        %2683 = vperm.xlu0 %2682, %v2678
        %v2684 = vpop.permute.xlu0 %2683
        %2687 = vset.pattern.permute.xlu0 0
        %2688 = vperm.xlu0 %2687, %v2680
        %v2689 = vpop.permute.xlu0 %2688
        %v2691 = vmul.f32 %v742, %v2684
        %v2692 = vmul.f32 %v743, %v2684
        %v2693 = vmul.f32 %v2564, %v2689
        %v2694 = vmul.f32 %v2565, %v2689
        %2695 = vst [vmem:[%s661] sm:$0xff] %v2691
        %2696 = vst [vmem:[%s661 + $0x8] sm:$0xff] %v2692
        %2697 = vst [vmem:[%s661 + $0x10] sm:$0xff] %v2693
        %2698 = vst [vmem:[%s661 + $0x18] sm:$0xff] %v2694
        %p2699 = scmp.lt.s32.totalorder %s35, 1
        %s2700 = scalar_select %p2699, %s35, 1
        %s2701 = smul.addr %s2700, 4
        %s2702 = smul.addr %s2701, 8
        %s2703 = scalar_lea.vmem %s20, %s2702
        // Predicated region
        $region109: #{efcm_forward.1} parent=99 // pred_check
          %p2704 = pneg %p478
        $region110: #{efcm_forward.1} parent=99 // pred_check_branch
          %2706 = sbr.rel (%p2704) target = $region112
        $region111: #{efcm_forward.1} parent=99 // pred_region
          _
        $region112: #{efcm_forward.1} parent=99 // pred_fallthru
          _
      $region100: #{efcm_forward.1} parent=5 // pred_fallthru
        _
      %p2707 = scmp.le.s32.totalorder 2, %s30
      // Predicated region
      $region113: #{efcm_forward.1} parent=5 // pred_check
        %p2708 = pneg %p2707
      $region114: #{efcm_forward.1} parent=5 // pred_check_branch
        %2710 = sbr.rel (%p2708) target = $region116
      $region115: #{efcm_forward.1} parent=5 // pred_region
        %s2711 = ssub.s32 %s30, 2
        // Predicated region
        $region117: #{efcm_forward.1} parent=115 // pred_check
          %p2712 = pneg %p484
        $region118: #{efcm_forward.1} parent=115 // pred_check_branch
          %2714 = sbr.rel (%p2712) target = $region120
        $region119: #{efcm_forward.1} parent=115 // pred_region
          %p2715 = scmp.lt.s32.totalorder %s36, 1
          %s2716 = scalar_select %p2715, %s36, 1
          %s2717 = smul.addr %s2716, 4
          %s2718 = smul.addr %s2717, 8
          %s2719 = scalar_lea.vmem %s20, %s2718
        $region120: #{efcm_forward.1} parent=115 // pred_fallthru
          _
      $region116: #{efcm_forward.1} parent=5 // pred_fallthru
        _
    $region6: #{efcm_forward.1} parent=1 // loop_footer
      %s34 = sadd.s32 1, %s30
    $region7: #{efcm_forward.1} parent=1 // loop_footer_branch
      %29 = sbr.rel target = $region3
    $region8: #{efcm_forward.1} parent=1 // loop_exit
      _
    %2720 = vsyncpa [#allocation4], 1
    %s2721 = scalar_lea.sflag [#allocation4], 1
    %2722 = vsyncpa %s2721, 1
    %2723 = vsyncpa [#allocation6], 1

</llo_original>
